<compile_context>
chip_gen: v7x
topology: tpu7x:2x2x1
jax: 0.10.0
libtpu: 0.0.40
codegen_flags: <defaults>
</compile_context>

<pallas_src>
import jax
import jax.numpy as jnp
from jax.experimental import pallas as pl
from jax.experimental.pallas import tpu as pltpu


def _add_kernel(a_ref, b_ref, o_ref):
    # Single full-array block: one VPU elementwise add.
    o_ref[...] = a_ref[...] + b_ref[...]


def pallas_add(x1036, x1021):
    assert x1036.shape == x1021.shape
    assert x1036.dtype == x1021.dtype
    return pl.pallas_call(
        _add_kernel,
        out_shape=jax.ShapeDtypeStruct(x1036.shape, x1036.dtype),
        in_specs=[
            pl.BlockSpec(memory_space=pltpu.MemorySpace.VMEM),
            pl.BlockSpec(memory_space=pltpu.MemorySpace.VMEM),
        ],
        out_specs=pl.BlockSpec(memory_space=pltpu.MemorySpace.VMEM),
        # Output reuses x1036's HBM buffer when the caller donates it.
        input_output_aliases={0: 0},
    )(x1036, x1021)


if __name__ == "__main__":
    key = jax.random.PRNGKey(0)
    k1, k2 = jax.random.split(key)
    # Shapes implied by the module: [1, 640, 7, 7]  (already small: ~125 KB)
    shape = (1, 640, 7, 7)
    x1036 = jax.random.normal(k1, shape, dtype=jnp.float32)
    x1021 = jax.random.normal(k2, shape, dtype=jnp.float32)

    # Compute the reference BEFORE the kernel call: x1036 is donated below.
    ref = jax.block_until_ready(x1036 + x1021)

    add_fn = jax.jit(pallas_add, donate_argnums=(0,))
    out = jax.block_until_ready(add_fn(x1036, x1021))

    assert out.shape == shape
    assert out.dtype == jnp.float32
    assert jnp.allclose(out, ref, atol=1e-6, rtol=1e-6)
    print("KERNEL_OK")
</pallas_src>

<mosaic_0001>
module attributes {stable_mosaic.version = 11 : i64} {
  func.func @_add_kernel(%arg0: memref<1x640x7x7xf32, #tpu.memory_space<vmem>>, %arg1: memref<1x640x7x7xf32, #tpu.memory_space<vmem>>, %arg2: memref<1x640x7x7xf32, #tpu.memory_space<vmem>>) attributes {dimension_semantics = [], scalar_prefetch = 0 : i64, scratch_operands = 0 : i64, tpu.core_type = #tpu.core_type<tc>} {
    %c0 = arith.constant 0 : index
    %c0_0 = arith.constant 0 : index
    %c0_1 = arith.constant 0 : index
    %c0_2 = arith.constant 0 : index
    %0 = vector.load %arg0[%c0, %c0_0, %c0_1, %c0_2] : memref<1x640x7x7xf32, #tpu.memory_space<vmem>>, vector<1x640x7x7xf32>
    %c0_3 = arith.constant 0 : index
    %c0_4 = arith.constant 0 : index
    %c0_5 = arith.constant 0 : index
    %c0_6 = arith.constant 0 : index
    %1 = vector.load %arg1[%c0_3, %c0_4, %c0_5, %c0_6] : memref<1x640x7x7xf32, #tpu.memory_space<vmem>>, vector<1x640x7x7xf32>
    %2 = arith.addf %0, %1 : vector<1x640x7x7xf32>
    %c0_7 = arith.constant 0 : index
    %c0_8 = arith.constant 0 : index
    %c0_9 = arith.constant 0 : index
    %c0_10 = arith.constant 0 : index
    %3 = vector.load %arg2[%c0_7, %c0_8, %c0_9, %c0_10] : memref<1x640x7x7xf32, #tpu.memory_space<vmem>>, vector<1x640x7x7xf32>
    tpu.vector_store %arg2[%c0_7, %c0_8, %c0_9, %c0_10], %2 {strides = array<i32>} : memref<1x640x7x7xf32, #tpu.memory_space<vmem>>, vector<1x640x7x7xf32>,
    return
  }
}

</mosaic_0001>

<llo_original>
// kernel: pallas_add.1
$region0: #{pallas_add.1}
  #allocation0 [shape = 'u32[]', space=smem, size = 0x4, offset = 0x4, fixed_abs, tag = 'smem constant byte address 0x4 - core index']
  #allocation1 [shape = 'u32[144,128]{1,0:T(1,128)}', space=vmem, size = 0x12000, scoped, tag = 'internal scratch']
  %s0 = inlined_call_operand.vmem [shape: f32[1,640,7,7], index: 0, kind: input, shape index: {}, may-alias: {0,2}]
  %s1 = inlined_call_operand.vmem [shape: f32[1,640,7,7], index: 1, kind: input, shape index: {}]
  %s2 = inlined_call_operand.vmem [shape: f32[1,640,7,7], index: 2, kind: output, shape index: {}, may-alias: {0,2}]
  %s3 = sld [smem:[#allocation0]]
  $region18: #{pallas_add.1} parent=0
    _
  %s5 = ssub.s32 1, %s3
  %s6 = scalar_select 0, %s5, %s3
  // Predicated region
  $region2: #{pallas_add.1} parent=0 // pred_check
    _
  $region3: #{pallas_add.1} parent=0 // pred_check_branch
    %8 = sbr.rel (0) target = $region5
  $region4: #{pallas_add.1} parent=0 // pred_region
    _
  $region5: #{pallas_add.1} parent=0 // pred_fallthru
    _
  // Predicated region
  $region6: #{pallas_add.1} parent=0 // pred_check
    _
  $region7: #{pallas_add.1} parent=0 // pred_check_branch
    %10 = sbr.rel (0) target = $region9
  $region8: #{pallas_add.1} parent=0 // pred_region
    _
  $region9: #{pallas_add.1} parent=0 // pred_fallthru
    _
  %v11 = vld [vmem:[%s0] sm:$0x7f]
  %v12 = vld [vmem:[%s0 + $0x8] sm:$0x7f]
  %v13 = vld [vmem:[%s0 + $0x10] sm:$0x7f]
  %v14 = vld [vmem:[%s0 + $0x18] sm:$0x7f]
  %v15 = vld [vmem:[%s0 + $0x20] sm:$0x7f]
  %v16 = vld [vmem:[%s0 + $0x28] sm:$0x7f]
  %v17 = vld [vmem:[%s0 + $0x30] sm:$0x7f]
  %v18 = vld [vmem:[%s0 + $0x38] sm:$0x7f]
  %v19 = vld [vmem:[%s0 + $0x40] sm:$0x7f]
  %v20 = vld [vmem:[%s0 + $0x48] sm:$0x7f]
  %v21 = vld [vmem:[%s0 + $0x50] sm:$0x7f]
  %v22 = vld [vmem:[%s0 + $0x58] sm:$0x7f]
  %v23 = vld [vmem:[%s0 + $0x60] sm:$0x7f]
  %v24 = vld [vmem:[%s0 + $0x68] sm:$0x7f]
  %v25 = vld [vmem:[%s0 + $0x70] sm:$0x7f]
  %v26 = vld [vmem:[%s0 + $0x78] sm:$0x7f]
  %v27 = vld [vmem:[%s0 + $0x80] sm:$0x7f]
  %v28 = vld [vmem:[%s0 + $0x88] sm:$0x7f]
  %v29 = vld [vmem:[%s0 + $0x90] sm:$0x7f]
  %v30 = vld [vmem:[%s0 + $0x98] sm:$0x7f]
  %v31 = vld [vmem:[%s0 + $0xa0] sm:$0x7f]
  %v32 = vld [vmem:[%s0 + $0xa8] sm:$0x7f]
  %v33 = vld [vmem:[%s0 + $0xb0] sm:$0x7f]
  %v34 = vld [vmem:[%s0 + $0xb8] sm:$0x7f]
  %v35 = vld [vmem:[%s0 + $0xc0] sm:$0x7f]
  %v36 = vld [vmem:[%s0 + $0xc8] sm:$0x7f]
  %v37 = vld [vmem:[%s0 + $0xd0] sm:$0x7f]
  %v38 = vld [vmem:[%s0 + $0xd8] sm:$0x7f]
  %v39 = vld [vmem:[%s0 + $0xe0] sm:$0x7f]
  %v40 = vld [vmem:[%s0 + $0xe8] sm:$0x7f]
  %v41 = vld [vmem:[%s0 + $0xf0] sm:$0x7f]
  %v42 = vld [vmem:[%s0 + $0xf8] sm:$0x7f]
  %v43 = vld [vmem:[%s0 + $0x100] sm:$0x7f]
  %v44 = vld [vmem:[%s0 + $0x108] sm:$0x7f]
  %v45 = vld [vmem:[%s0 + $0x110] sm:$0x7f]
  %v46 = vld [vmem:[%s0 + $0x118] sm:$0x7f]
  %v47 = vld [vmem:[%s0 + $0x120] sm:$0x7f]
  %v48 = vld [vmem:[%s0 + $0x128] sm:$0x7f]
  %v49 = vld [vmem:[%s0 + $0x130] sm:$0x7f]
  %v50 = vld [vmem:[%s0 + $0x138] sm:$0x7f]
  %v51 = vld [vmem:[%s0 + $0x140] sm:$0x7f]
  %v52 = vld [vmem:[%s0 + $0x148] sm:$0x7f]
  %v53 = vld [vmem:[%s0 + $0x150] sm:$0x7f]
  %v54 = vld [vmem:[%s0 + $0x158] sm:$0x7f]
  %v55 = vld [vmem:[%s0 + $0x160] sm:$0x7f]
  %v56 = vld [vmem:[%s0 + $0x168] sm:$0x7f]
  %v57 = vld [vmem:[%s0 + $0x170] sm:$0x7f]
  %v58 = vld [vmem:[%s0 + $0x178] sm:$0x7f]
  %v59 = vld [vmem:[%s0 + $0x180] sm:$0x7f]
  %v60 = vld [vmem:[%s0 + $0x188] sm:$0x7f]
  %v61 = vld [vmem:[%s0 + $0x190] sm:$0x7f]
  %v62 = vld [vmem:[%s0 + $0x198] sm:$0x7f]
  %v63 = vld [vmem:[%s0 + $0x1a0] sm:$0x7f]
  %v64 = vld [vmem:[%s0 + $0x1a8] sm:$0x7f]
  %v65 = vld [vmem:[%s0 + $0x1b0] sm:$0x7f]
  %v66 = vld [vmem:[%s0 + $0x1b8] sm:$0x7f]
  %v67 = vld [vmem:[%s0 + $0x1c0] sm:$0x7f]
  %v68 = vld [vmem:[%s0 + $0x1c8] sm:$0x7f]
  %v69 = vld [vmem:[%s0 + $0x1d0] sm:$0x7f]
  %v70 = vld [vmem:[%s0 + $0x1d8] sm:$0x7f]
  %v71 = vld [vmem:[%s0 + $0x1e0] sm:$0x7f]
  %v72 = vld [vmem:[%s0 + $0x1e8] sm:$0x7f]
  %v73 = vld [vmem:[%s0 + $0x1f0] sm:$0x7f]
  %v74 = vld [vmem:[%s0 + $0x1f8] sm:$0x7f]
  %v75 = vld [vmem:[%s0 + $0x200] sm:$0x7f]
  %v76 = vld [vmem:[%s0 + $0x208] sm:$0x7f]
  %v77 = vld [vmem:[%s0 + $0x210] sm:$0x7f]
  %v78 = vld [vmem:[%s0 + $0x218] sm:$0x7f]
  %v79 = vld [vmem:[%s0 + $0x220] sm:$0x7f]
  %v80 = vld [vmem:[%s0 + $0x228] sm:$0x7f]
  %v81 = vld [vmem:[%s0 + $0x230] sm:$0x7f]
  %v82 = vld [vmem:[%s0 + $0x238] sm:$0x7f]
  %v83 = vld [vmem:[%s0 + $0x240] sm:$0x7f]
  %v84 = vld [vmem:[%s0 + $0x248] sm:$0x7f]
  %v85 = vld [vmem:[%s0 + $0x250] sm:$0x7f]
  %v86 = vld [vmem:[%s0 + $0x258] sm:$0x7f]
  %v87 = vld [vmem:[%s0 + $0x260] sm:$0x7f]
  %v88 = vld [vmem:[%s0 + $0x268] sm:$0x7f]
  %v89 = vld [vmem:[%s0 + $0x270] sm:$0x7f]
  %v90 = vld [vmem:[%s0 + $0x278] sm:$0x7f]
  %v91 = vld [vmem:[%s0 + $0x280] sm:$0x7f]
  %v92 = vld [vmem:[%s0 + $0x288] sm:$0x7f]
  %v93 = vld [vmem:[%s0 + $0x290] sm:$0x7f]
  %v94 = vld [vmem:[%s0 + $0x298] sm:$0x7f]
  %v95 = vld [vmem:[%s0 + $0x2a0] sm:$0x7f]
  %v96 = vld [vmem:[%s0 + $0x2a8] sm:$0x7f]
  %v97 = vld [vmem:[%s0 + $0x2b0] sm:$0x7f]
  %v98 = vld [vmem:[%s0 + $0x2b8] sm:$0x7f]
  %v99 = vld [vmem:[%s0 + $0x2c0] sm:$0x7f]
  %v100 = vld [vmem:[%s0 + $0x2c8] sm:$0x7f]
  %v101 = vld [vmem:[%s0 + $0x2d0] sm:$0x7f]
  %v102 = vld [vmem:[%s0 + $0x2d8] sm:$0x7f]
  %v103 = vld [vmem:[%s0 + $0x2e0] sm:$0x7f]
  %v104 = vld [vmem:[%s0 + $0x2e8] sm:$0x7f]
  %v105 = vld [vmem:[%s0 + $0x2f0] sm:$0x7f]
  %v106 = vld [vmem:[%s0 + $0x2f8] sm:$0x7f]
  %v107 = vld [vmem:[%s0 + $0x300] sm:$0x7f]
  %v108 = vld [vmem:[%s0 + $0x308] sm:$0x7f]
  %v109 = vld [vmem:[%s0 + $0x310] sm:$0x7f]
  %v110 = vld [vmem:[%s0 + $0x318] sm:$0x7f]
  %v111 = vld [vmem:[%s0 + $0x320] sm:$0x7f]
  %v112 = vld [vmem:[%s0 + $0x328] sm:$0x7f]
  %v113 = vld [vmem:[%s0 + $0x330] sm:$0x7f]
  %v114 = vld [vmem:[%s0 + $0x338] sm:$0x7f]
  %v115 = vld [vmem:[%s0 + $0x340] sm:$0x7f]
  %v116 = vld [vmem:[%s0 + $0x348] sm:$0x7f]
  %v117 = vld [vmem:[%s0 + $0x350] sm:$0x7f]
  %v118 = vld [vmem:[%s0 + $0x358] sm:$0x7f]
  %v119 = vld [vmem:[%s0 + $0x360] sm:$0x7f]
  %v120 = vld [vmem:[%s0 + $0x368] sm:$0x7f]
  %v121 = vld [vmem:[%s0 + $0x370] sm:$0x7f]
  %v122 = vld [vmem:[%s0 + $0x378] sm:$0x7f]
  %v123 = vld [vmem:[%s0 + $0x380] sm:$0x7f]
  %v124 = vld [vmem:[%s0 + $0x388] sm:$0x7f]
  %v125 = vld [vmem:[%s0 + $0x390] sm:$0x7f]
  %v126 = vld [vmem:[%s0 + $0x398] sm:$0x7f]
  %v127 = vld [vmem:[%s0 + $0x3a0] sm:$0x7f]
  %v128 = vld [vmem:[%s0 + $0x3a8] sm:$0x7f]
  %v129 = vld [vmem:[%s0 + $0x3b0] sm:$0x7f]
  %v130 = vld [vmem:[%s0 + $0x3b8] sm:$0x7f]
  %v131 = vld [vmem:[%s0 + $0x3c0] sm:$0x7f]
  %v132 = vld [vmem:[%s0 + $0x3c8] sm:$0x7f]
  %v133 = vld [vmem:[%s0 + $0x3d0] sm:$0x7f]
  %v134 = vld [vmem:[%s0 + $0x3d8] sm:$0x7f]
  %v135 = vld [vmem:[%s0 + $0x3e0] sm:$0x7f]
  %v136 = vld [vmem:[%s0 + $0x3e8] sm:$0x7f]
  %v137 = vld [vmem:[%s0 + $0x3f0] sm:$0x7f]
  %v138 = vld [vmem:[%s0 + $0x3f8] sm:$0x7f]
  %v139 = vld [vmem:[%s0 + $0x400] sm:$0x7f]
  %v140 = vld [vmem:[%s0 + $0x408] sm:$0x7f]
  %v141 = vld [vmem:[%s0 + $0x410] sm:$0x7f]
  %v142 = vld [vmem:[%s0 + $0x418] sm:$0x7f]
  %v143 = vld [vmem:[%s0 + $0x420] sm:$0x7f]
  %v144 = vld [vmem:[%s0 + $0x428] sm:$0x7f]
  %v145 = vld [vmem:[%s0 + $0x430] sm:$0x7f]
  %v146 = vld [vmem:[%s0 + $0x438] sm:$0x7f]
  %v147 = vld [vmem:[%s0 + $0x440] sm:$0x7f]
  %v148 = vld [vmem:[%s0 + $0x448] sm:$0x7f]
  %v149 = vld [vmem:[%s0 + $0x450] sm:$0x7f]
  %v150 = vld [vmem:[%s0 + $0x458] sm:$0x7f]
  %v151 = vld [vmem:[%s0 + $0x460] sm:$0x7f]
  %v152 = vld [vmem:[%s0 + $0x468] sm:$0x7f]
  %v153 = vld [vmem:[%s0 + $0x470] sm:$0x7f]
  %v154 = vld [vmem:[%s0 + $0x478] sm:$0x7f]
  %v155 = vld [vmem:[%s0 + $0x480] sm:$0x7f]
  %v156 = vld [vmem:[%s0 + $0x488] sm:$0x7f]
  %v157 = vld [vmem:[%s0 + $0x490] sm:$0x7f]
  %v158 = vld [vmem:[%s0 + $0x498] sm:$0x7f]
  %v159 = vld [vmem:[%s0 + $0x4a0] sm:$0x7f]
  %v160 = vld [vmem:[%s0 + $0x4a8] sm:$0x7f]
  %v161 = vld [vmem:[%s0 + $0x4b0] sm:$0x7f]
  %v162 = vld [vmem:[%s0 + $0x4b8] sm:$0x7f]
  %v163 = vld [vmem:[%s0 + $0x4c0] sm:$0x7f]
  %v164 = vld [vmem:[%s0 + $0x4c8] sm:$0x7f]
  %v165 = vld [vmem:[%s0 + $0x4d0] sm:$0x7f]
  %v166 = vld [vmem:[%s0 + $0x4d8] sm:$0x7f]
  %v167 = vld [vmem:[%s0 + $0x4e0] sm:$0x7f]
  %v168 = vld [vmem:[%s0 + $0x4e8] sm:$0x7f]
  %v169 = vld [vmem:[%s0 + $0x4f0] sm:$0x7f]
  %v170 = vld [vmem:[%s0 + $0x4f8] sm:$0x7f]
  %v171 = vld [vmem:[%s0 + $0x500] sm:$0x7f]
  %v172 = vld [vmem:[%s0 + $0x508] sm:$0x7f]
  %v173 = vld [vmem:[%s0 + $0x510] sm:$0x7f]
  %v174 = vld [vmem:[%s0 + $0x518] sm:$0x7f]
  %v175 = vld [vmem:[%s0 + $0x520] sm:$0x7f]
  %v176 = vld [vmem:[%s0 + $0x528] sm:$0x7f]
  %v177 = vld [vmem:[%s0 + $0x530] sm:$0x7f]
  %v178 = vld [vmem:[%s0 + $0x538] sm:$0x7f]
  %v179 = vld [vmem:[%s0 + $0x540] sm:$0x7f]
  %v180 = vld [vmem:[%s0 + $0x548] sm:$0x7f]
  %v181 = vld [vmem:[%s0 + $0x550] sm:$0x7f]
  %v182 = vld [vmem:[%s0 + $0x558] sm:$0x7f]
  %v183 = vld [vmem:[%s0 + $0x560] sm:$0x7f]
  %v184 = vld [vmem:[%s0 + $0x568] sm:$0x7f]
  %v185 = vld [vmem:[%s0 + $0x570] sm:$0x7f]
  %v186 = vld [vmem:[%s0 + $0x578] sm:$0x7f]
  %v187 = vld [vmem:[%s0 + $0x580] sm:$0x7f]
  %v188 = vld [vmem:[%s0 + $0x588] sm:$0x7f]
  %v189 = vld [vmem:[%s0 + $0x590] sm:$0x7f]
  %v190 = vld [vmem:[%s0 + $0x598] sm:$0x7f]
  %v191 = vld [vmem:[%s0 + $0x5a0] sm:$0x7f]
  %v192 = vld [vmem:[%s0 + $0x5a8] sm:$0x7f]
  %v193 = vld [vmem:[%s0 + $0x5b0] sm:$0x7f]
  %v194 = vld [vmem:[%s0 + $0x5b8] sm:$0x7f]
  %v195 = vld [vmem:[%s0 + $0x5c0] sm:$0x7f]
  %v196 = vld [vmem:[%s0 + $0x5c8] sm:$0x7f]
  %v197 = vld [vmem:[%s0 + $0x5d0] sm:$0x7f]
  %v198 = vld [vmem:[%s0 + $0x5d8] sm:$0x7f]
  %v199 = vld [vmem:[%s0 + $0x5e0] sm:$0x7f]
  %v200 = vld [vmem:[%s0 + $0x5e8] sm:$0x7f]
  %v201 = vld [vmem:[%s0 + $0x5f0] sm:$0x7f]
  %v202 = vld [vmem:[%s0 + $0x5f8] sm:$0x7f]
  %v203 = vld [vmem:[%s0 + $0x600] sm:$0x7f]
  %v204 = vld [vmem:[%s0 + $0x608] sm:$0x7f]
  %v205 = vld [vmem:[%s0 + $0x610] sm:$0x7f]
  %v206 = vld [vmem:[%s0 + $0x618] sm:$0x7f]
  %v207 = vld [vmem:[%s0 + $0x620] sm:$0x7f]
  %v208 = vld [vmem:[%s0 + $0x628] sm:$0x7f]
  %v209 = vld [vmem:[%s0 + $0x630] sm:$0x7f]
  %v210 = vld [vmem:[%s0 + $0x638] sm:$0x7f]
  %v211 = vld [vmem:[%s0 + $0x640] sm:$0x7f]
  %v212 = vld [vmem:[%s0 + $0x648] sm:$0x7f]
  %v213 = vld [vmem:[%s0 + $0x650] sm:$0x7f]
  %v214 = vld [vmem:[%s0 + $0x658] sm:$0x7f]
  %v215 = vld [vmem:[%s0 + $0x660] sm:$0x7f]
  %v216 = vld [vmem:[%s0 + $0x668] sm:$0x7f]
  %v217 = vld [vmem:[%s0 + $0x670] sm:$0x7f]
  %v218 = vld [vmem:[%s0 + $0x678] sm:$0x7f]
  %v219 = vld [vmem:[%s0 + $0x680] sm:$0x7f]
  %v220 = vld [vmem:[%s0 + $0x688] sm:$0x7f]
  %v221 = vld [vmem:[%s0 + $0x690] sm:$0x7f]
  %v222 = vld [vmem:[%s0 + $0x698] sm:$0x7f]
  %v223 = vld [vmem:[%s0 + $0x6a0] sm:$0x7f]
  %v224 = vld [vmem:[%s0 + $0x6a8] sm:$0x7f]
  %v225 = vld [vmem:[%s0 + $0x6b0] sm:$0x7f]
  %v226 = vld [vmem:[%s0 + $0x6b8] sm:$0x7f]
  %v227 = vld [vmem:[%s0 + $0x6c0] sm:$0x7f]
  %v228 = vld [vmem:[%s0 + $0x6c8] sm:$0x7f]
  %v229 = vld [vmem:[%s0 + $0x6d0] sm:$0x7f]
  %v230 = vld [vmem:[%s0 + $0x6d8] sm:$0x7f]
  %v231 = vld [vmem:[%s0 + $0x6e0] sm:$0x7f]
  %v232 = vld [vmem:[%s0 + $0x6e8] sm:$0x7f]
  %v233 = vld [vmem:[%s0 + $0x6f0] sm:$0x7f]
  %v234 = vld [vmem:[%s0 + $0x6f8] sm:$0x7f]
  %v235 = vld [vmem:[%s0 + $0x700] sm:$0x7f]
  %v236 = vld [vmem:[%s0 + $0x708] sm:$0x7f]
  %v237 = vld [vmem:[%s0 + $0x710] sm:$0x7f]
  %v238 = vld [vmem:[%s0 + $0x718] sm:$0x7f]
  %v239 = vld [vmem:[%s0 + $0x720] sm:$0x7f]
  %v240 = vld [vmem:[%s0 + $0x728] sm:$0x7f]
  %v241 = vld [vmem:[%s0 + $0x730] sm:$0x7f]
  %v242 = vld [vmem:[%s0 + $0x738] sm:$0x7f]
  %v243 = vld [vmem:[%s0 + $0x740] sm:$0x7f]
  %v244 = vld [vmem:[%s0 + $0x748] sm:$0x7f]
  %v245 = vld [vmem:[%s0 + $0x750] sm:$0x7f]
  %v246 = vld [vmem:[%s0 + $0x758] sm:$0x7f]
  %v247 = vld [vmem:[%s0 + $0x760] sm:$0x7f]
  %v248 = vld [vmem:[%s0 + $0x768] sm:$0x7f]
  %v249 = vld [vmem:[%s0 + $0x770] sm:$0x7f]
  %v250 = vld [vmem:[%s0 + $0x778] sm:$0x7f]
  %v251 = vld [vmem:[%s0 + $0x780] sm:$0x7f]
  %v252 = vld [vmem:[%s0 + $0x788] sm:$0x7f]
  %v253 = vld [vmem:[%s0 + $0x790] sm:$0x7f]
  %v254 = vld [vmem:[%s0 + $0x798] sm:$0x7f]
  %v255 = vld [vmem:[%s0 + $0x7a0] sm:$0x7f]
  %v256 = vld [vmem:[%s0 + $0x7a8] sm:$0x7f]
  %v257 = vld [vmem:[%s0 + $0x7b0] sm:$0x7f]
  %v258 = vld [vmem:[%s0 + $0x7b8] sm:$0x7f]
  %v259 = vld [vmem:[%s0 + $0x7c0] sm:$0x7f]
  %v260 = vld [vmem:[%s0 + $0x7c8] sm:$0x7f]
  %v261 = vld [vmem:[%s0 + $0x7d0] sm:$0x7f]
  %v262 = vld [vmem:[%s0 + $0x7d8] sm:$0x7f]
  %v263 = vld [vmem:[%s0 + $0x7e0] sm:$0x7f]
  %v264 = vld [vmem:[%s0 + $0x7e8] sm:$0x7f]
  %v265 = vld [vmem:[%s0 + $0x7f0] sm:$0x7f]
  %v266 = vld [vmem:[%s0 + $0x7f8] sm:$0x7f]
  %v267 = vld [vmem:[%s0 + $0x800] sm:$0x7f]
  %v268 = vld [vmem:[%s0 + $0x808] sm:$0x7f]
  %v269 = vld [vmem:[%s0 + $0x810] sm:$0x7f]
  %v270 = vld [vmem:[%s0 + $0x818] sm:$0x7f]
  %v271 = vld [vmem:[%s0 + $0x820] sm:$0x7f]
  %v272 = vld [vmem:[%s0 + $0x828] sm:$0x7f]
  %v273 = vld [vmem:[%s0 + $0x830] sm:$0x7f]
  %v274 = vld [vmem:[%s0 + $0x838] sm:$0x7f]
  %v275 = vld [vmem:[%s0 + $0x840] sm:$0x7f]
  %v276 = vld [vmem:[%s0 + $0x848] sm:$0x7f]
  %v277 = vld [vmem:[%s0 + $0x850] sm:$0x7f]
  %v278 = vld [vmem:[%s0 + $0x858] sm:$0x7f]
  %v279 = vld [vmem:[%s0 + $0x860] sm:$0x7f]
  %v280 = vld [vmem:[%s0 + $0x868] sm:$0x7f]
  %v281 = vld [vmem:[%s0 + $0x870] sm:$0x7f]
  %v282 = vld [vmem:[%s0 + $0x878] sm:$0x7f]
  %v283 = vld [vmem:[%s0 + $0x880] sm:$0x7f]
  %v284 = vld [vmem:[%s0 + $0x888] sm:$0x7f]
  %v285 = vld [vmem:[%s0 + $0x890] sm:$0x7f]
  %v286 = vld [vmem:[%s0 + $0x898] sm:$0x7f]
  %v287 = vld [vmem:[%s0 + $0x8a0] sm:$0x7f]
  %v288 = vld [vmem:[%s0 + $0x8a8] sm:$0x7f]
  %v289 = vld [vmem:[%s0 + $0x8b0] sm:$0x7f]
  %v290 = vld [vmem:[%s0 + $0x8b8] sm:$0x7f]
  %v291 = vld [vmem:[%s0 + $0x8c0] sm:$0x7f]
  %v292 = vld [vmem:[%s0 + $0x8c8] sm:$0x7f]
  %v293 = vld [vmem:[%s0 + $0x8d0] sm:$0x7f]
  %v294 = vld [vmem:[%s0 + $0x8d8] sm:$0x7f]
  %v295 = vld [vmem:[%s0 + $0x8e0] sm:$0x7f]
  %v296 = vld [vmem:[%s0 + $0x8e8] sm:$0x7f]
  %v297 = vld [vmem:[%s0 + $0x8f0] sm:$0x7f]
  %v298 = vld [vmem:[%s0 + $0x8f8] sm:$0x7f]
  %v299 = vld [vmem:[%s0 + $0x900] sm:$0x7f]
  %v300 = vld [vmem:[%s0 + $0x908] sm:$0x7f]
  %v301 = vld [vmem:[%s0 + $0x910] sm:$0x7f]
  %v302 = vld [vmem:[%s0 + $0x918] sm:$0x7f]
  %v303 = vld [vmem:[%s0 + $0x920] sm:$0x7f]
  %v304 = vld [vmem:[%s0 + $0x928] sm:$0x7f]
  %v305 = vld [vmem:[%s0 + $0x930] sm:$0x7f]
  %v306 = vld [vmem:[%s0 + $0x938] sm:$0x7f]
  %v307 = vld [vmem:[%s0 + $0x940] sm:$0x7f]
  %v308 = vld [vmem:[%s0 + $0x948] sm:$0x7f]
  %v309 = vld [vmem:[%s0 + $0x950] sm:$0x7f]
  %v310 = vld [vmem:[%s0 + $0x958] sm:$0x7f]
  %v311 = vld [vmem:[%s0 + $0x960] sm:$0x7f]
  %v312 = vld [vmem:[%s0 + $0x968] sm:$0x7f]
  %v313 = vld [vmem:[%s0 + $0x970] sm:$0x7f]
  %v314 = vld [vmem:[%s0 + $0x978] sm:$0x7f]
  %v315 = vld [vmem:[%s0 + $0x980] sm:$0x7f]
  %v316 = vld [vmem:[%s0 + $0x988] sm:$0x7f]
  %v317 = vld [vmem:[%s0 + $0x990] sm:$0x7f]
  %v318 = vld [vmem:[%s0 + $0x998] sm:$0x7f]
  %v319 = vld [vmem:[%s0 + $0x9a0] sm:$0x7f]
  %v320 = vld [vmem:[%s0 + $0x9a8] sm:$0x7f]
  %v321 = vld [vmem:[%s0 + $0x9b0] sm:$0x7f]
  %v322 = vld [vmem:[%s0 + $0x9b8] sm:$0x7f]
  %v323 = vld [vmem:[%s0 + $0x9c0] sm:$0x7f]
  %v324 = vld [vmem:[%s0 + $0x9c8] sm:$0x7f]
  %v325 = vld [vmem:[%s0 + $0x9d0] sm:$0x7f]
  %v326 = vld [vmem:[%s0 + $0x9d8] sm:$0x7f]
  %v327 = vld [vmem:[%s0 + $0x9e0] sm:$0x7f]
  %v328 = vld [vmem:[%s0 + $0x9e8] sm:$0x7f]
  %v329 = vld [vmem:[%s0 + $0x9f0] sm:$0x7f]
  %v330 = vld [vmem:[%s0 + $0x9f8] sm:$0x7f]
  %v331 = vld [vmem:[%s0 + $0xa00] sm:$0x7f]
  %v332 = vld [vmem:[%s0 + $0xa08] sm:$0x7f]
  %v333 = vld [vmem:[%s0 + $0xa10] sm:$0x7f]
  %v334 = vld [vmem:[%s0 + $0xa18] sm:$0x7f]
  %v335 = vld [vmem:[%s0 + $0xa20] sm:$0x7f]
  %v336 = vld [vmem:[%s0 + $0xa28] sm:$0x7f]
  %v337 = vld [vmem:[%s0 + $0xa30] sm:$0x7f]
  %v338 = vld [vmem:[%s0 + $0xa38] sm:$0x7f]
  %v339 = vld [vmem:[%s0 + $0xa40] sm:$0x7f]
  %v340 = vld [vmem:[%s0 + $0xa48] sm:$0x7f]
  %v341 = vld [vmem:[%s0 + $0xa50] sm:$0x7f]
  %v342 = vld [vmem:[%s0 + $0xa58] sm:$0x7f]
  %v343 = vld [vmem:[%s0 + $0xa60] sm:$0x7f]
  %v344 = vld [vmem:[%s0 + $0xa68] sm:$0x7f]
  %v345 = vld [vmem:[%s0 + $0xa70] sm:$0x7f]
  %v346 = vld [vmem:[%s0 + $0xa78] sm:$0x7f]
  %v347 = vld [vmem:[%s0 + $0xa80] sm:$0x7f]
  %v348 = vld [vmem:[%s0 + $0xa88] sm:$0x7f]
  %v349 = vld [vmem:[%s0 + $0xa90] sm:$0x7f]
  %v350 = vld [vmem:[%s0 + $0xa98] sm:$0x7f]
  %v351 = vld [vmem:[%s0 + $0xaa0] sm:$0x7f]
  %v352 = vld [vmem:[%s0 + $0xaa8] sm:$0x7f]
  %v353 = vld [vmem:[%s0 + $0xab0] sm:$0x7f]
  %v354 = vld [vmem:[%s0 + $0xab8] sm:$0x7f]
  %v355 = vld [vmem:[%s0 + $0xac0] sm:$0x7f]
  %v356 = vld [vmem:[%s0 + $0xac8] sm:$0x7f]
  %v357 = vld [vmem:[%s0 + $0xad0] sm:$0x7f]
  %v358 = vld [vmem:[%s0 + $0xad8] sm:$0x7f]
  %v359 = vld [vmem:[%s0 + $0xae0] sm:$0x7f]
  %v360 = vld [vmem:[%s0 + $0xae8] sm:$0x7f]
  %v361 = vld [vmem:[%s0 + $0xaf0] sm:$0x7f]
  %v362 = vld [vmem:[%s0 + $0xaf8] sm:$0x7f]
  %v363 = vld [vmem:[%s0 + $0xb00] sm:$0x7f]
  %v364 = vld [vmem:[%s0 + $0xb08] sm:$0x7f]
  %v365 = vld [vmem:[%s0 + $0xb10] sm:$0x7f]
  %v366 = vld [vmem:[%s0 + $0xb18] sm:$0x7f]
  %v367 = vld [vmem:[%s0 + $0xb20] sm:$0x7f]
  %v368 = vld [vmem:[%s0 + $0xb28] sm:$0x7f]
  %v369 = vld [vmem:[%s0 + $0xb30] sm:$0x7f]
  %v370 = vld [vmem:[%s0 + $0xb38] sm:$0x7f]
  %v371 = vld [vmem:[%s0 + $0xb40] sm:$0x7f]
  %v372 = vld [vmem:[%s0 + $0xb48] sm:$0x7f]
  %v373 = vld [vmem:[%s0 + $0xb50] sm:$0x7f]
  %v374 = vld [vmem:[%s0 + $0xb58] sm:$0x7f]
  %v375 = vld [vmem:[%s0 + $0xb60] sm:$0x7f]
  %v376 = vld [vmem:[%s0 + $0xb68] sm:$0x7f]
  %v377 = vld [vmem:[%s0 + $0xb70] sm:$0x7f]
  %v378 = vld [vmem:[%s0 + $0xb78] sm:$0x7f]
  %v379 = vld [vmem:[%s0 + $0xb80] sm:$0x7f]
  %v380 = vld [vmem:[%s0 + $0xb88] sm:$0x7f]
  %v381 = vld [vmem:[%s0 + $0xb90] sm:$0x7f]
  %v382 = vld [vmem:[%s0 + $0xb98] sm:$0x7f]
  %v383 = vld [vmem:[%s0 + $0xba0] sm:$0x7f]
  %v384 = vld [vmem:[%s0 + $0xba8] sm:$0x7f]
  %v385 = vld [vmem:[%s0 + $0xbb0] sm:$0x7f]
  %v386 = vld [vmem:[%s0 + $0xbb8] sm:$0x7f]
  %v387 = vld [vmem:[%s0 + $0xbc0] sm:$0x7f]
  %v388 = vld [vmem:[%s0 + $0xbc8] sm:$0x7f]
  %v389 = vld [vmem:[%s0 + $0xbd0] sm:$0x7f]
  %v390 = vld [vmem:[%s0 + $0xbd8] sm:$0x7f]
  %v391 = vld [vmem:[%s0 + $0xbe0] sm:$0x7f]
  %v392 = vld [vmem:[%s0 + $0xbe8] sm:$0x7f]
  %v393 = vld [vmem:[%s0 + $0xbf0] sm:$0x7f]
  %v394 = vld [vmem:[%s0 + $0xbf8] sm:$0x7f]
  %v395 = vld [vmem:[%s0 + $0xc00] sm:$0x7f]
  %v396 = vld [vmem:[%s0 + $0xc08] sm:$0x7f]
  %v397 = vld [vmem:[%s0 + $0xc10] sm:$0x7f]
  %v398 = vld [vmem:[%s0 + $0xc18] sm:$0x7f]
  %v399 = vld [vmem:[%s0 + $0xc20] sm:$0x7f]
  %v400 = vld [vmem:[%s0 + $0xc28] sm:$0x7f]
  %v401 = vld [vmem:[%s0 + $0xc30] sm:$0x7f]
  %v402 = vld [vmem:[%s0 + $0xc38] sm:$0x7f]
  %v403 = vld [vmem:[%s0 + $0xc40] sm:$0x7f]
  %v404 = vld [vmem:[%s0 + $0xc48] sm:$0x7f]
  %v405 = vld [vmem:[%s0 + $0xc50] sm:$0x7f]
  %v406 = vld [vmem:[%s0 + $0xc58] sm:$0x7f]
  %v407 = vld [vmem:[%s0 + $0xc60] sm:$0x7f]
  %v408 = vld [vmem:[%s0 + $0xc68] sm:$0x7f]
  %v409 = vld [vmem:[%s0 + $0xc70] sm:$0x7f]
  %v410 = vld [vmem:[%s0 + $0xc78] sm:$0x7f]
  %v411 = vld [vmem:[%s0 + $0xc80] sm:$0x7f]
  %v412 = vld [vmem:[%s0 + $0xc88] sm:$0x7f]
  %v413 = vld [vmem:[%s0 + $0xc90] sm:$0x7f]
  %v414 = vld [vmem:[%s0 + $0xc98] sm:$0x7f]
  %v415 = vld [vmem:[%s0 + $0xca0] sm:$0x7f]
  %v416 = vld [vmem:[%s0 + $0xca8] sm:$0x7f]
  %v417 = vld [vmem:[%s0 + $0xcb0] sm:$0x7f]
  %v418 = vld [vmem:[%s0 + $0xcb8] sm:$0x7f]
  %v419 = vld [vmem:[%s0 + $0xcc0] sm:$0x7f]
  %v420 = vld [vmem:[%s0 + $0xcc8] sm:$0x7f]
  %v421 = vld [vmem:[%s0 + $0xcd0] sm:$0x7f]
  %v422 = vld [vmem:[%s0 + $0xcd8] sm:$0x7f]
  %v423 = vld [vmem:[%s0 + $0xce0] sm:$0x7f]
  %v424 = vld [vmem:[%s0 + $0xce8] sm:$0x7f]
  %v425 = vld [vmem:[%s0 + $0xcf0] sm:$0x7f]
  %v426 = vld [vmem:[%s0 + $0xcf8] sm:$0x7f]
  %v427 = vld [vmem:[%s0 + $0xd00] sm:$0x7f]
  %v428 = vld [vmem:[%s0 + $0xd08] sm:$0x7f]
  %v429 = vld [vmem:[%s0 + $0xd10] sm:$0x7f]
  %v430 = vld [vmem:[%s0 + $0xd18] sm:$0x7f]
  %v431 = vld [vmem:[%s0 + $0xd20] sm:$0x7f]
  %v432 = vld [vmem:[%s0 + $0xd28] sm:$0x7f]
  %v433 = vld [vmem:[%s0 + $0xd30] sm:$0x7f]
  %v434 = vld [vmem:[%s0 + $0xd38] sm:$0x7f]
  %v435 = vld [vmem:[%s0 + $0xd40] sm:$0x7f]
  %v436 = vld [vmem:[%s0 + $0xd48] sm:$0x7f]
  %v437 = vld [vmem:[%s0 + $0xd50] sm:$0x7f]
  %v438 = vld [vmem:[%s0 + $0xd58] sm:$0x7f]
  %v439 = vld [vmem:[%s0 + $0xd60] sm:$0x7f]
  %v440 = vld [vmem:[%s0 + $0xd68] sm:$0x7f]
  %v441 = vld [vmem:[%s0 + $0xd70] sm:$0x7f]
  %v442 = vld [vmem:[%s0 + $0xd78] sm:$0x7f]
  %v443 = vld [vmem:[%s0 + $0xd80] sm:$0x7f]
  %v444 = vld [vmem:[%s0 + $0xd88] sm:$0x7f]
  %v445 = vld [vmem:[%s0 + $0xd90] sm:$0x7f]
  %v446 = vld [vmem:[%s0 + $0xd98] sm:$0x7f]
  %v447 = vld [vmem:[%s0 + $0xda0] sm:$0x7f]
  %v448 = vld [vmem:[%s0 + $0xda8] sm:$0x7f]
  %v449 = vld [vmem:[%s0 + $0xdb0] sm:$0x7f]
  %v450 = vld [vmem:[%s0 + $0xdb8] sm:$0x7f]
  %v451 = vld [vmem:[%s0 + $0xdc0] sm:$0x7f]
  %v452 = vld [vmem:[%s0 + $0xdc8] sm:$0x7f]
  %v453 = vld [vmem:[%s0 + $0xdd0] sm:$0x7f]
  %v454 = vld [vmem:[%s0 + $0xdd8] sm:$0x7f]
  %v455 = vld [vmem:[%s0 + $0xde0] sm:$0x7f]
  %v456 = vld [vmem:[%s0 + $0xde8] sm:$0x7f]
  %v457 = vld [vmem:[%s0 + $0xdf0] sm:$0x7f]
  %v458 = vld [vmem:[%s0 + $0xdf8] sm:$0x7f]
  %v459 = vld [vmem:[%s0 + $0xe00] sm:$0x7f]
  %v460 = vld [vmem:[%s0 + $0xe08] sm:$0x7f]
  %v461 = vld [vmem:[%s0 + $0xe10] sm:$0x7f]
  %v462 = vld [vmem:[%s0 + $0xe18] sm:$0x7f]
  %v463 = vld [vmem:[%s0 + $0xe20] sm:$0x7f]
  %v464 = vld [vmem:[%s0 + $0xe28] sm:$0x7f]
  %v465 = vld [vmem:[%s0 + $0xe30] sm:$0x7f]
  %v466 = vld [vmem:[%s0 + $0xe38] sm:$0x7f]
  %v467 = vld [vmem:[%s0 + $0xe40] sm:$0x7f]
  %v468 = vld [vmem:[%s0 + $0xe48] sm:$0x7f]
  %v469 = vld [vmem:[%s0 + $0xe50] sm:$0x7f]
  %v470 = vld [vmem:[%s0 + $0xe58] sm:$0x7f]
  %v471 = vld [vmem:[%s0 + $0xe60] sm:$0x7f]
  %v472 = vld [vmem:[%s0 + $0xe68] sm:$0x7f]
  %v473 = vld [vmem:[%s0 + $0xe70] sm:$0x7f]
  %v474 = vld [vmem:[%s0 + $0xe78] sm:$0x7f]
  %v475 = vld [vmem:[%s0 + $0xe80] sm:$0x7f]
  %v476 = vld [vmem:[%s0 + $0xe88] sm:$0x7f]
  %v477 = vld [vmem:[%s0 + $0xe90] sm:$0x7f]
  %v478 = vld [vmem:[%s0 + $0xe98] sm:$0x7f]
  %v479 = vld [vmem:[%s0 + $0xea0] sm:$0x7f]
  %v480 = vld [vmem:[%s0 + $0xea8] sm:$0x7f]
  %v481 = vld [vmem:[%s0 + $0xeb0] sm:$0x7f]
  %v482 = vld [vmem:[%s0 + $0xeb8] sm:$0x7f]
  %v483 = vld [vmem:[%s0 + $0xec0] sm:$0x7f]
  %v484 = vld [vmem:[%s0 + $0xec8] sm:$0x7f]
  %v485 = vld [vmem:[%s0 + $0xed0] sm:$0x7f]
  %v486 = vld [vmem:[%s0 + $0xed8] sm:$0x7f]
  %v487 = vld [vmem:[%s0 + $0xee0] sm:$0x7f]
  %v488 = vld [vmem:[%s0 + $0xee8] sm:$0x7f]
  %v489 = vld [vmem:[%s0 + $0xef0] sm:$0x7f]
  %v490 = vld [vmem:[%s0 + $0xef8] sm:$0x7f]
  %v491 = vld [vmem:[%s0 + $0xf00] sm:$0x7f]
  %v492 = vld [vmem:[%s0 + $0xf08] sm:$0x7f]
  %v493 = vld [vmem:[%s0 + $0xf10] sm:$0x7f]
  %v494 = vld [vmem:[%s0 + $0xf18] sm:$0x7f]
  %v495 = vld [vmem:[%s0 + $0xf20] sm:$0x7f]
  %v496 = vld [vmem:[%s0 + $0xf28] sm:$0x7f]
  %v497 = vld [vmem:[%s0 + $0xf30] sm:$0x7f]
  %v498 = vld [vmem:[%s0 + $0xf38] sm:$0x7f]
  %v499 = vld [vmem:[%s0 + $0xf40] sm:$0x7f]
  %v500 = vld [vmem:[%s0 + $0xf48] sm:$0x7f]
  %v501 = vld [vmem:[%s0 + $0xf50] sm:$0x7f]
  %v502 = vld [vmem:[%s0 + $0xf58] sm:$0x7f]
  %v503 = vld [vmem:[%s0 + $0xf60] sm:$0x7f]
  %v504 = vld [vmem:[%s0 + $0xf68] sm:$0x7f]
  %v505 = vld [vmem:[%s0 + $0xf70] sm:$0x7f]
  %v506 = vld [vmem:[%s0 + $0xf78] sm:$0x7f]
  %v507 = vld [vmem:[%s0 + $0xf80] sm:$0x7f]
  %v508 = vld [vmem:[%s0 + $0xf88] sm:$0x7f]
  %v509 = vld [vmem:[%s0 + $0xf90] sm:$0x7f]
  %v510 = vld [vmem:[%s0 + $0xf98] sm:$0x7f]
  %v511 = vld [vmem:[%s0 + $0xfa0] sm:$0x7f]
  %v512 = vld [vmem:[%s0 + $0xfa8] sm:$0x7f]
  %v513 = vld [vmem:[%s0 + $0xfb0] sm:$0x7f]
  %v514 = vld [vmem:[%s0 + $0xfb8] sm:$0x7f]
  %v515 = vld [vmem:[%s0 + $0xfc0] sm:$0x7f]
  %v516 = vld [vmem:[%s0 + $0xfc8] sm:$0x7f]
  %v517 = vld [vmem:[%s0 + $0xfd0] sm:$0x7f]
  %v518 = vld [vmem:[%s0 + $0xfd8] sm:$0x7f]
  %v519 = vld [vmem:[%s0 + $0xfe0] sm:$0x7f]
  %v520 = vld [vmem:[%s0 + $0xfe8] sm:$0x7f]
  %v521 = vld [vmem:[%s0 + $0xff0] sm:$0x7f]
  %v522 = vld [vmem:[%s0 + $0xff8] sm:$0x7f]
  %v523 = vld [vmem:[%s0 + $0x1000] sm:$0x7f]
  %v524 = vld [vmem:[%s0 + $0x1008] sm:$0x7f]
  %v525 = vld [vmem:[%s0 + $0x1010] sm:$0x7f]
  %v526 = vld [vmem:[%s0 + $0x1018] sm:$0x7f]
  %v527 = vld [vmem:[%s0 + $0x1020] sm:$0x7f]
  %v528 = vld [vmem:[%s0 + $0x1028] sm:$0x7f]
  %v529 = vld [vmem:[%s0 + $0x1030] sm:$0x7f]
  %v530 = vld [vmem:[%s0 + $0x1038] sm:$0x7f]
  %v531 = vld [vmem:[%s0 + $0x1040] sm:$0x7f]
  %v532 = vld [vmem:[%s0 + $0x1048] sm:$0x7f]
  %v533 = vld [vmem:[%s0 + $0x1050] sm:$0x7f]
  %v534 = vld [vmem:[%s0 + $0x1058] sm:$0x7f]
  %v535 = vld [vmem:[%s0 + $0x1060] sm:$0x7f]
  %v536 = vld [vmem:[%s0 + $0x1068] sm:$0x7f]
  %v537 = vld [vmem:[%s0 + $0x1070] sm:$0x7f]
  %v538 = vld [vmem:[%s0 + $0x1078] sm:$0x7f]
  %v539 = vld [vmem:[%s0 + $0x1080] sm:$0x7f]
  %v540 = vld [vmem:[%s0 + $0x1088] sm:$0x7f]
  %v541 = vld [vmem:[%s0 + $0x1090] sm:$0x7f]
  %v542 = vld [vmem:[%s0 + $0x1098] sm:$0x7f]
  %v543 = vld [vmem:[%s0 + $0x10a0] sm:$0x7f]
  %v544 = vld [vmem:[%s0 + $0x10a8] sm:$0x7f]
  %v545 = vld [vmem:[%s0 + $0x10b0] sm:$0x7f]
  %v546 = vld [vmem:[%s0 + $0x10b8] sm:$0x7f]
  %v547 = vld [vmem:[%s0 + $0x10c0] sm:$0x7f]
  %v548 = vld [vmem:[%s0 + $0x10c8] sm:$0x7f]
  %v549 = vld [vmem:[%s0 + $0x10d0] sm:$0x7f]
  %v550 = vld [vmem:[%s0 + $0x10d8] sm:$0x7f]
  %v551 = vld [vmem:[%s0 + $0x10e0] sm:$0x7f]
  %v552 = vld [vmem:[%s0 + $0x10e8] sm:$0x7f]
  %v553 = vld [vmem:[%s0 + $0x10f0] sm:$0x7f]
  %v554 = vld [vmem:[%s0 + $0x10f8] sm:$0x7f]
  %v555 = vld [vmem:[%s0 + $0x1100] sm:$0x7f]
  %v556 = vld [vmem:[%s0 + $0x1108] sm:$0x7f]
  %v557 = vld [vmem:[%s0 + $0x1110] sm:$0x7f]
  %v558 = vld [vmem:[%s0 + $0x1118] sm:$0x7f]
  %v559 = vld [vmem:[%s0 + $0x1120] sm:$0x7f]
  %v560 = vld [vmem:[%s0 + $0x1128] sm:$0x7f]
  %v561 = vld [vmem:[%s0 + $0x1130] sm:$0x7f]
  %v562 = vld [vmem:[%s0 + $0x1138] sm:$0x7f]
  %v563 = vld [vmem:[%s0 + $0x1140] sm:$0x7f]
  %v564 = vld [vmem:[%s0 + $0x1148] sm:$0x7f]
  %v565 = vld [vmem:[%s0 + $0x1150] sm:$0x7f]
  %v566 = vld [vmem:[%s0 + $0x1158] sm:$0x7f]
  %v567 = vld [vmem:[%s0 + $0x1160] sm:$0x7f]
  %v568 = vld [vmem:[%s0 + $0x1168] sm:$0x7f]
  %v569 = vld [vmem:[%s0 + $0x1170] sm:$0x7f]
  %v570 = vld [vmem:[%s0 + $0x1178] sm:$0x7f]
  %v571 = vld [vmem:[%s0 + $0x1180] sm:$0x7f]
  %v572 = vld [vmem:[%s0 + $0x1188] sm:$0x7f]
  %v573 = vld [vmem:[%s0 + $0x1190] sm:$0x7f]
  %v574 = vld [vmem:[%s0 + $0x1198] sm:$0x7f]
  %v575 = vld [vmem:[%s0 + $0x11a0] sm:$0x7f]
  %v576 = vld [vmem:[%s0 + $0x11a8] sm:$0x7f]
  %v577 = vld [vmem:[%s0 + $0x11b0] sm:$0x7f]
  %v578 = vld [vmem:[%s0 + $0x11b8] sm:$0x7f]
  %v579 = vld [vmem:[%s0 + $0x11c0] sm:$0x7f]
  %v580 = vld [vmem:[%s0 + $0x11c8] sm:$0x7f]
  %v581 = vld [vmem:[%s0 + $0x11d0] sm:$0x7f]
  %v582 = vld [vmem:[%s0 + $0x11d8] sm:$0x7f]
  %v583 = vld [vmem:[%s0 + $0x11e0] sm:$0x7f]
  %v584 = vld [vmem:[%s0 + $0x11e8] sm:$0x7f]
  %v585 = vld [vmem:[%s0 + $0x11f0] sm:$0x7f]
  %v586 = vld [vmem:[%s0 + $0x11f8] sm:$0x7f]
  %v587 = vld [vmem:[%s0 + $0x1200] sm:$0x7f]
  %v588 = vld [vmem:[%s0 + $0x1208] sm:$0x7f]
  %v589 = vld [vmem:[%s0 + $0x1210] sm:$0x7f]
  %v590 = vld [vmem:[%s0 + $0x1218] sm:$0x7f]
  %v591 = vld [vmem:[%s0 + $0x1220] sm:$0x7f]
  %v592 = vld [vmem:[%s0 + $0x1228] sm:$0x7f]
  %v593 = vld [vmem:[%s0 + $0x1230] sm:$0x7f]
  %v594 = vld [vmem:[%s0 + $0x1238] sm:$0x7f]
  %v595 = vld [vmem:[%s0 + $0x1240] sm:$0x7f]
  %v596 = vld [vmem:[%s0 + $0x1248] sm:$0x7f]
  %v597 = vld [vmem:[%s0 + $0x1250] sm:$0x7f]
  %v598 = vld [vmem:[%s0 + $0x1258] sm:$0x7f]
  %v599 = vld [vmem:[%s0 + $0x1260] sm:$0x7f]
  %v600 = vld [vmem:[%s0 + $0x1268] sm:$0x7f]
  %v601 = vld [vmem:[%s0 + $0x1270] sm:$0x7f]
  %v602 = vld [vmem:[%s0 + $0x1278] sm:$0x7f]
  %v603 = vld [vmem:[%s0 + $0x1280] sm:$0x7f]
  %v604 = vld [vmem:[%s0 + $0x1288] sm:$0x7f]
  %v605 = vld [vmem:[%s0 + $0x1290] sm:$0x7f]
  %v606 = vld [vmem:[%s0 + $0x1298] sm:$0x7f]
  %v607 = vld [vmem:[%s0 + $0x12a0] sm:$0x7f]
  %v608 = vld [vmem:[%s0 + $0x12a8] sm:$0x7f]
  %v609 = vld [vmem:[%s0 + $0x12b0] sm:$0x7f]
  %v610 = vld [vmem:[%s0 + $0x12b8] sm:$0x7f]
  %v611 = vld [vmem:[%s0 + $0x12c0] sm:$0x7f]
  %v612 = vld [vmem:[%s0 + $0x12c8] sm:$0x7f]
  %v613 = vld [vmem:[%s0 + $0x12d0] sm:$0x7f]
  %v614 = vld [vmem:[%s0 + $0x12d8] sm:$0x7f]
  %v615 = vld [vmem:[%s0 + $0x12e0] sm:$0x7f]
  %v616 = vld [vmem:[%s0 + $0x12e8] sm:$0x7f]
  %v617 = vld [vmem:[%s0 + $0x12f0] sm:$0x7f]
  %v618 = vld [vmem:[%s0 + $0x12f8] sm:$0x7f]
  %v619 = vld [vmem:[%s0 + $0x1300] sm:$0x7f]
  %v620 = vld [vmem:[%s0 + $0x1308] sm:$0x7f]
  %v621 = vld [vmem:[%s0 + $0x1310] sm:$0x7f]
  %v622 = vld [vmem:[%s0 + $0x1318] sm:$0x7f]
  %v623 = vld [vmem:[%s0 + $0x1320] sm:$0x7f]
  %v624 = vld [vmem:[%s0 + $0x1328] sm:$0x7f]
  %v625 = vld [vmem:[%s0 + $0x1330] sm:$0x7f]
  %v626 = vld [vmem:[%s0 + $0x1338] sm:$0x7f]
  %v627 = vld [vmem:[%s0 + $0x1340] sm:$0x7f]
  %v628 = vld [vmem:[%s0 + $0x1348] sm:$0x7f]
  %v629 = vld [vmem:[%s0 + $0x1350] sm:$0x7f]
  %v630 = vld [vmem:[%s0 + $0x1358] sm:$0x7f]
  %v631 = vld [vmem:[%s0 + $0x1360] sm:$0x7f]
  %v632 = vld [vmem:[%s0 + $0x1368] sm:$0x7f]
  %v633 = vld [vmem:[%s0 + $0x1370] sm:$0x7f]
  %v634 = vld [vmem:[%s0 + $0x1378] sm:$0x7f]
  %v635 = vld [vmem:[%s0 + $0x1380] sm:$0x7f]
  %v636 = vld [vmem:[%s0 + $0x1388] sm:$0x7f]
  %v637 = vld [vmem:[%s0 + $0x1390] sm:$0x7f]
  %v638 = vld [vmem:[%s0 + $0x1398] sm:$0x7f]
  %v639 = vld [vmem:[%s0 + $0x13a0] sm:$0x7f]
  %v640 = vld [vmem:[%s0 + $0x13a8] sm:$0x7f]
  %v641 = vld [vmem:[%s0 + $0x13b0] sm:$0x7f]
  %v642 = vld [vmem:[%s0 + $0x13b8] sm:$0x7f]
  %v643 = vld [vmem:[%s0 + $0x13c0] sm:$0x7f]
  %v644 = vld [vmem:[%s0 + $0x13c8] sm:$0x7f]
  %v645 = vld [vmem:[%s0 + $0x13d0] sm:$0x7f]
  %v646 = vld [vmem:[%s0 + $0x13d8] sm:$0x7f]
  %v647 = vld [vmem:[%s0 + $0x13e0] sm:$0x7f]
  %v648 = vld [vmem:[%s0 + $0x13e8] sm:$0x7f]
  %v649 = vld [vmem:[%s0 + $0x13f0] sm:$0x7f]
  %v650 = vld [vmem:[%s0 + $0x13f8] sm:$0x7f]
  %v651 = vld [vmem:[%s1] sm:$0x7f]
  %v652 = vld [vmem:[%s1 + $0x8] sm:$0x7f]
  %v653 = vld [vmem:[%s1 + $0x10] sm:$0x7f]
  %v654 = vld [vmem:[%s1 + $0x18] sm:$0x7f]
  %v655 = vld [vmem:[%s1 + $0x20] sm:$0x7f]
  %v656 = vld [vmem:[%s1 + $0x28] sm:$0x7f]
  %v657 = vld [vmem:[%s1 + $0x30] sm:$0x7f]
  %v658 = vld [vmem:[%s1 + $0x38] sm:$0x7f]
  %v659 = vld [vmem:[%s1 + $0x40] sm:$0x7f]
  %v660 = vld [vmem:[%s1 + $0x48] sm:$0x7f]
  %v661 = vld [vmem:[%s1 + $0x50] sm:$0x7f]
  %v662 = vld [vmem:[%s1 + $0x58] sm:$0x7f]
  %v663 = vld [vmem:[%s1 + $0x60] sm:$0x7f]
  %v664 = vld [vmem:[%s1 + $0x68] sm:$0x7f]
  %v665 = vld [vmem:[%s1 + $0x70] sm:$0x7f]
  %v666 = vld [vmem:[%s1 + $0x78] sm:$0x7f]
  %v667 = vld [vmem:[%s1 + $0x80] sm:$0x7f]
  %v668 = vld [vmem:[%s1 + $0x88] sm:$0x7f]
  %v669 = vld [vmem:[%s1 + $0x90] sm:$0x7f]
  %v670 = vld [vmem:[%s1 + $0x98] sm:$0x7f]
  %v671 = vld [vmem:[%s1 + $0xa0] sm:$0x7f]
  %v672 = vld [vmem:[%s1 + $0xa8] sm:$0x7f]
  %v673 = vld [vmem:[%s1 + $0xb0] sm:$0x7f]
  %v674 = vld [vmem:[%s1 + $0xb8] sm:$0x7f]
  %v675 = vld [vmem:[%s1 + $0xc0] sm:$0x7f]
  %v676 = vld [vmem:[%s1 + $0xc8] sm:$0x7f]
  %v677 = vld [vmem:[%s1 + $0xd0] sm:$0x7f]
  %v678 = vld [vmem:[%s1 + $0xd8] sm:$0x7f]
  %v679 = vld [vmem:[%s1 + $0xe0] sm:$0x7f]
  %v680 = vld [vmem:[%s1 + $0xe8] sm:$0x7f]
  %v681 = vld [vmem:[%s1 + $0xf0] sm:$0x7f]
  %v682 = vld [vmem:[%s1 + $0xf8] sm:$0x7f]
  %v683 = vld [vmem:[%s1 + $0x100] sm:$0x7f]
  %v684 = vld [vmem:[%s1 + $0x108] sm:$0x7f]
  %v685 = vld [vmem:[%s1 + $0x110] sm:$0x7f]
  %v686 = vld [vmem:[%s1 + $0x118] sm:$0x7f]
  %v687 = vld [vmem:[%s1 + $0x120] sm:$0x7f]
  %v688 = vld [vmem:[%s1 + $0x128] sm:$0x7f]
  %v689 = vld [vmem:[%s1 + $0x130] sm:$0x7f]
  %v690 = vld [vmem:[%s1 + $0x138] sm:$0x7f]
  %v691 = vld [vmem:[%s1 + $0x140] sm:$0x7f]
  %v692 = vld [vmem:[%s1 + $0x148] sm:$0x7f]
  %v693 = vld [vmem:[%s1 + $0x150] sm:$0x7f]
  %v694 = vld [vmem:[%s1 + $0x158] sm:$0x7f]
  %v695 = vld [vmem:[%s1 + $0x160] sm:$0x7f]
  %v696 = vld [vmem:[%s1 + $0x168] sm:$0x7f]
  %v697 = vld [vmem:[%s1 + $0x170] sm:$0x7f]
  %v698 = vld [vmem:[%s1 + $0x178] sm:$0x7f]
  %v699 = vld [vmem:[%s1 + $0x180] sm:$0x7f]
  %v700 = vld [vmem:[%s1 + $0x188] sm:$0x7f]
  %v701 = vld [vmem:[%s1 + $0x190] sm:$0x7f]
  %v702 = vld [vmem:[%s1 + $0x198] sm:$0x7f]
  %v703 = vld [vmem:[%s1 + $0x1a0] sm:$0x7f]
  %v704 = vld [vmem:[%s1 + $0x1a8] sm:$0x7f]
  %v705 = vld [vmem:[%s1 + $0x1b0] sm:$0x7f]
  %v706 = vld [vmem:[%s1 + $0x1b8] sm:$0x7f]
  %v707 = vld [vmem:[%s1 + $0x1c0] sm:$0x7f]
  %v708 = vld [vmem:[%s1 + $0x1c8] sm:$0x7f]
  %v709 = vld [vmem:[%s1 + $0x1d0] sm:$0x7f]
  %v710 = vld [vmem:[%s1 + $0x1d8] sm:$0x7f]
  %v711 = vld [vmem:[%s1 + $0x1e0] sm:$0x7f]
  %v712 = vld [vmem:[%s1 + $0x1e8] sm:$0x7f]
  %v713 = vld [vmem:[%s1 + $0x1f0] sm:$0x7f]
  %v714 = vld [vmem:[%s1 + $0x1f8] sm:$0x7f]
  %v715 = vld [vmem:[%s1 + $0x200] sm:$0x7f]
  %v716 = vld [vmem:[%s1 + $0x208] sm:$0x7f]
  %v717 = vld [vmem:[%s1 + $0x210] sm:$0x7f]
  %v718 = vld [vmem:[%s1 + $0x218] sm:$0x7f]
  %v719 = vld [vmem:[%s1 + $0x220] sm:$0x7f]
  %v720 = vld [vmem:[%s1 + $0x228] sm:$0x7f]
  %v721 = vld [vmem:[%s1 + $0x230] sm:$0x7f]
  %v722 = vld [vmem:[%s1 + $0x238] sm:$0x7f]
  %v723 = vld [vmem:[%s1 + $0x240] sm:$0x7f]
  %v724 = vld [vmem:[%s1 + $0x248] sm:$0x7f]
  %v725 = vld [vmem:[%s1 + $0x250] sm:$0x7f]
  %v726 = vld [vmem:[%s1 + $0x258] sm:$0x7f]
  %v727 = vld [vmem:[%s1 + $0x260] sm:$0x7f]
  %v728 = vld [vmem:[%s1 + $0x268] sm:$0x7f]
  %v729 = vld [vmem:[%s1 + $0x270] sm:$0x7f]
  %v730 = vld [vmem:[%s1 + $0x278] sm:$0x7f]
  %v731 = vld [vmem:[%s1 + $0x280] sm:$0x7f]
  %v732 = vld [vmem:[%s1 + $0x288] sm:$0x7f]
  %v733 = vld [vmem:[%s1 + $0x290] sm:$0x7f]
  %v734 = vld [vmem:[%s1 + $0x298] sm:$0x7f]
  %v735 = vld [vmem:[%s1 + $0x2a0] sm:$0x7f]
  %v736 = vld [vmem:[%s1 + $0x2a8] sm:$0x7f]
  %v737 = vld [vmem:[%s1 + $0x2b0] sm:$0x7f]
  %v738 = vld [vmem:[%s1 + $0x2b8] sm:$0x7f]
  %v739 = vld [vmem:[%s1 + $0x2c0] sm:$0x7f]
  %v740 = vld [vmem:[%s1 + $0x2c8] sm:$0x7f]
  %v741 = vld [vmem:[%s1 + $0x2d0] sm:$0x7f]
  %v742 = vld [vmem:[%s1 + $0x2d8] sm:$0x7f]
  %v743 = vld [vmem:[%s1 + $0x2e0] sm:$0x7f]
  %v744 = vld [vmem:[%s1 + $0x2e8] sm:$0x7f]
  %v745 = vld [vmem:[%s1 + $0x2f0] sm:$0x7f]
  %v746 = vld [vmem:[%s1 + $0x2f8] sm:$0x7f]
  %v747 = vld [vmem:[%s1 + $0x300] sm:$0x7f]
  %v748 = vld [vmem:[%s1 + $0x308] sm:$0x7f]
  %v749 = vld [vmem:[%s1 + $0x310] sm:$0x7f]
  %v750 = vld [vmem:[%s1 + $0x318] sm:$0x7f]
  %v751 = vld [vmem:[%s1 + $0x320] sm:$0x7f]
  %v752 = vld [vmem:[%s1 + $0x328] sm:$0x7f]
  %v753 = vld [vmem:[%s1 + $0x330] sm:$0x7f]
  %v754 = vld [vmem:[%s1 + $0x338] sm:$0x7f]
  %v755 = vld [vmem:[%s1 + $0x340] sm:$0x7f]
  %v756 = vld [vmem:[%s1 + $0x348] sm:$0x7f]
  %v757 = vld [vmem:[%s1 + $0x350] sm:$0x7f]
  %v758 = vld [vmem:[%s1 + $0x358] sm:$0x7f]
  %v759 = vld [vmem:[%s1 + $0x360] sm:$0x7f]
  %v760 = vld [vmem:[%s1 + $0x368] sm:$0x7f]
  %v761 = vld [vmem:[%s1 + $0x370] sm:$0x7f]
  %v762 = vld [vmem:[%s1 + $0x378] sm:$0x7f]
  %v763 = vld [vmem:[%s1 + $0x380] sm:$0x7f]
  %v764 = vld [vmem:[%s1 + $0x388] sm:$0x7f]
  %v765 = vld [vmem:[%s1 + $0x390] sm:$0x7f]
  %v766 = vld [vmem:[%s1 + $0x398] sm:$0x7f]
  %v767 = vld [vmem:[%s1 + $0x3a0] sm:$0x7f]
  %v768 = vld [vmem:[%s1 + $0x3a8] sm:$0x7f]
  %v769 = vld [vmem:[%s1 + $0x3b0] sm:$0x7f]
  %v770 = vld [vmem:[%s1 + $0x3b8] sm:$0x7f]
  %v771 = vld [vmem:[%s1 + $0x3c0] sm:$0x7f]
  %v772 = vld [vmem:[%s1 + $0x3c8] sm:$0x7f]
  %v773 = vld [vmem:[%s1 + $0x3d0] sm:$0x7f]
  %v774 = vld [vmem:[%s1 + $0x3d8] sm:$0x7f]
  %v775 = vld [vmem:[%s1 + $0x3e0] sm:$0x7f]
  %v776 = vld [vmem:[%s1 + $0x3e8] sm:$0x7f]
  %v777 = vld [vmem:[%s1 + $0x3f0] sm:$0x7f]
  %v778 = vld [vmem:[%s1 + $0x3f8] sm:$0x7f]
  %v779 = vld [vmem:[%s1 + $0x400] sm:$0x7f]
  %v780 = vld [vmem:[%s1 + $0x408] sm:$0x7f]
  %v781 = vld [vmem:[%s1 + $0x410] sm:$0x7f]
  %v782 = vld [vmem:[%s1 + $0x418] sm:$0x7f]
  %v783 = vld [vmem:[%s1 + $0x420] sm:$0x7f]
  %v784 = vld [vmem:[%s1 + $0x428] sm:$0x7f]
  %v785 = vld [vmem:[%s1 + $0x430] sm:$0x7f]
  %v786 = vld [vmem:[%s1 + $0x438] sm:$0x7f]
  %v787 = vld [vmem:[%s1 + $0x440] sm:$0x7f]
  %v788 = vld [vmem:[%s1 + $0x448] sm:$0x7f]
  %v789 = vld [vmem:[%s1 + $0x450] sm:$0x7f]
  %v790 = vld [vmem:[%s1 + $0x458] sm:$0x7f]
  %v791 = vld [vmem:[%s1 + $0x460] sm:$0x7f]
  %v792 = vld [vmem:[%s1 + $0x468] sm:$0x7f]
  %v793 = vld [vmem:[%s1 + $0x470] sm:$0x7f]
  %v794 = vld [vmem:[%s1 + $0x478] sm:$0x7f]
  %v795 = vld [vmem:[%s1 + $0x480] sm:$0x7f]
  %v796 = vld [vmem:[%s1 + $0x488] sm:$0x7f]
  %v797 = vld [vmem:[%s1 + $0x490] sm:$0x7f]
  %v798 = vld [vmem:[%s1 + $0x498] sm:$0x7f]
  %v799 = vld [vmem:[%s1 + $0x4a0] sm:$0x7f]
  %v800 = vld [vmem:[%s1 + $0x4a8] sm:$0x7f]
  %v801 = vld [vmem:[%s1 + $0x4b0] sm:$0x7f]
  %v802 = vld [vmem:[%s1 + $0x4b8] sm:$0x7f]
  %v803 = vld [vmem:[%s1 + $0x4c0] sm:$0x7f]
  %v804 = vld [vmem:[%s1 + $0x4c8] sm:$0x7f]
  %v805 = vld [vmem:[%s1 + $0x4d0] sm:$0x7f]
  %v806 = vld [vmem:[%s1 + $0x4d8] sm:$0x7f]
  %v807 = vld [vmem:[%s1 + $0x4e0] sm:$0x7f]
  %v808 = vld [vmem:[%s1 + $0x4e8] sm:$0x7f]
  %v809 = vld [vmem:[%s1 + $0x4f0] sm:$0x7f]
  %v810 = vld [vmem:[%s1 + $0x4f8] sm:$0x7f]
  %v811 = vld [vmem:[%s1 + $0x500] sm:$0x7f]
  %v812 = vld [vmem:[%s1 + $0x508] sm:$0x7f]
  %v813 = vld [vmem:[%s1 + $0x510] sm:$0x7f]
  %v814 = vld [vmem:[%s1 + $0x518] sm:$0x7f]
  %v815 = vld [vmem:[%s1 + $0x520] sm:$0x7f]
  %v816 = vld [vmem:[%s1 + $0x528] sm:$0x7f]
  %v817 = vld [vmem:[%s1 + $0x530] sm:$0x7f]
  %v818 = vld [vmem:[%s1 + $0x538] sm:$0x7f]
  %v819 = vld [vmem:[%s1 + $0x540] sm:$0x7f]
  %v820 = vld [vmem:[%s1 + $0x548] sm:$0x7f]
  %v821 = vld [vmem:[%s1 + $0x550] sm:$0x7f]
  %v822 = vld [vmem:[%s1 + $0x558] sm:$0x7f]
  %v823 = vld [vmem:[%s1 + $0x560] sm:$0x7f]
  %v824 = vld [vmem:[%s1 + $0x568] sm:$0x7f]
  %v825 = vld [vmem:[%s1 + $0x570] sm:$0x7f]
  %v826 = vld [vmem:[%s1 + $0x578] sm:$0x7f]
  %v827 = vld [vmem:[%s1 + $0x580] sm:$0x7f]
  %v828 = vld [vmem:[%s1 + $0x588] sm:$0x7f]
  %v829 = vld [vmem:[%s1 + $0x590] sm:$0x7f]
  %v830 = vld [vmem:[%s1 + $0x598] sm:$0x7f]
  %v831 = vld [vmem:[%s1 + $0x5a0] sm:$0x7f]
  %v832 = vld [vmem:[%s1 + $0x5a8] sm:$0x7f]
  %v833 = vld [vmem:[%s1 + $0x5b0] sm:$0x7f]
  %v834 = vld [vmem:[%s1 + $0x5b8] sm:$0x7f]
  %v835 = vld [vmem:[%s1 + $0x5c0] sm:$0x7f]
  %v836 = vld [vmem:[%s1 + $0x5c8] sm:$0x7f]
  %v837 = vld [vmem:[%s1 + $0x5d0] sm:$0x7f]
  %v838 = vld [vmem:[%s1 + $0x5d8] sm:$0x7f]
  %v839 = vld [vmem:[%s1 + $0x5e0] sm:$0x7f]
  %v840 = vld [vmem:[%s1 + $0x5e8] sm:$0x7f]
  %v841 = vld [vmem:[%s1 + $0x5f0] sm:$0x7f]
  %v842 = vld [vmem:[%s1 + $0x5f8] sm:$0x7f]
  %v843 = vld [vmem:[%s1 + $0x600] sm:$0x7f]
  %v844 = vld [vmem:[%s1 + $0x608] sm:$0x7f]
  %v845 = vld [vmem:[%s1 + $0x610] sm:$0x7f]
  %v846 = vld [vmem:[%s1 + $0x618] sm:$0x7f]
  %v847 = vld [vmem:[%s1 + $0x620] sm:$0x7f]
  %v848 = vld [vmem:[%s1 + $0x628] sm:$0x7f]
  %v849 = vld [vmem:[%s1 + $0x630] sm:$0x7f]
  %v850 = vld [vmem:[%s1 + $0x638] sm:$0x7f]
  %v851 = vld [vmem:[%s1 + $0x640] sm:$0x7f]
  %v852 = vld [vmem:[%s1 + $0x648] sm:$0x7f]
  %v853 = vld [vmem:[%s1 + $0x650] sm:$0x7f]
  %v854 = vld [vmem:[%s1 + $0x658] sm:$0x7f]
  %v855 = vld [vmem:[%s1 + $0x660] sm:$0x7f]
  %v856 = vld [vmem:[%s1 + $0x668] sm:$0x7f]
  %v857 = vld [vmem:[%s1 + $0x670] sm:$0x7f]
  %v858 = vld [vmem:[%s1 + $0x678] sm:$0x7f]
  %v859 = vld [vmem:[%s1 + $0x680] sm:$0x7f]
  %v860 = vld [vmem:[%s1 + $0x688] sm:$0x7f]
  %v861 = vld [vmem:[%s1 + $0x690] sm:$0x7f]
  %v862 = vld [vmem:[%s1 + $0x698] sm:$0x7f]
  %v863 = vld [vmem:[%s1 + $0x6a0] sm:$0x7f]
  %v864 = vld [vmem:[%s1 + $0x6a8] sm:$0x7f]
  %v865 = vld [vmem:[%s1 + $0x6b0] sm:$0x7f]
  %v866 = vld [vmem:[%s1 + $0x6b8] sm:$0x7f]
  %v867 = vld [vmem:[%s1 + $0x6c0] sm:$0x7f]
  %v868 = vld [vmem:[%s1 + $0x6c8] sm:$0x7f]
  %v869 = vld [vmem:[%s1 + $0x6d0] sm:$0x7f]
  %v870 = vld [vmem:[%s1 + $0x6d8] sm:$0x7f]
  %v871 = vld [vmem:[%s1 + $0x6e0] sm:$0x7f]
  %v872 = vld [vmem:[%s1 + $0x6e8] sm:$0x7f]
  %v873 = vld [vmem:[%s1 + $0x6f0] sm:$0x7f]
  %v874 = vld [vmem:[%s1 + $0x6f8] sm:$0x7f]
  %v875 = vld [vmem:[%s1 + $0x700] sm:$0x7f]
  %v876 = vld [vmem:[%s1 + $0x708] sm:$0x7f]
  %v877 = vld [vmem:[%s1 + $0x710] sm:$0x7f]
  %v878 = vld [vmem:[%s1 + $0x718] sm:$0x7f]
  %v879 = vld [vmem:[%s1 + $0x720] sm:$0x7f]
  %v880 = vld [vmem:[%s1 + $0x728] sm:$0x7f]
  %v881 = vld [vmem:[%s1 + $0x730] sm:$0x7f]
  %v882 = vld [vmem:[%s1 + $0x738] sm:$0x7f]
  %v883 = vld [vmem:[%s1 + $0x740] sm:$0x7f]
  %v884 = vld [vmem:[%s1 + $0x748] sm:$0x7f]
  %v885 = vld [vmem:[%s1 + $0x750] sm:$0x7f]
  %v886 = vld [vmem:[%s1 + $0x758] sm:$0x7f]
  %v887 = vld [vmem:[%s1 + $0x760] sm:$0x7f]
  %v888 = vld [vmem:[%s1 + $0x768] sm:$0x7f]
  %v889 = vld [vmem:[%s1 + $0x770] sm:$0x7f]
  %v890 = vld [vmem:[%s1 + $0x778] sm:$0x7f]
  %v891 = vld [vmem:[%s1 + $0x780] sm:$0x7f]
  %v892 = vld [vmem:[%s1 + $0x788] sm:$0x7f]
  %v893 = vld [vmem:[%s1 + $0x790] sm:$0x7f]
  %v894 = vld [vmem:[%s1 + $0x798] sm:$0x7f]
  %v895 = vld [vmem:[%s1 + $0x7a0] sm:$0x7f]
  %v896 = vld [vmem:[%s1 + $0x7a8] sm:$0x7f]
  %v897 = vld [vmem:[%s1 + $0x7b0] sm:$0x7f]
  %v898 = vld [vmem:[%s1 + $0x7b8] sm:$0x7f]
  %v899 = vld [vmem:[%s1 + $0x7c0] sm:$0x7f]
  %v900 = vld [vmem:[%s1 + $0x7c8] sm:$0x7f]
  %v901 = vld [vmem:[%s1 + $0x7d0] sm:$0x7f]
  %v902 = vld [vmem:[%s1 + $0x7d8] sm:$0x7f]
  %v903 = vld [vmem:[%s1 + $0x7e0] sm:$0x7f]
  %v904 = vld [vmem:[%s1 + $0x7e8] sm:$0x7f]
  %v905 = vld [vmem:[%s1 + $0x7f0] sm:$0x7f]
  %v906 = vld [vmem:[%s1 + $0x7f8] sm:$0x7f]
  %v907 = vld [vmem:[%s1 + $0x800] sm:$0x7f]
  %v908 = vld [vmem:[%s1 + $0x808] sm:$0x7f]
  %v909 = vld [vmem:[%s1 + $0x810] sm:$0x7f]
  %v910 = vld [vmem:[%s1 + $0x818] sm:$0x7f]
  %v911 = vld [vmem:[%s1 + $0x820] sm:$0x7f]
  %v912 = vld [vmem:[%s1 + $0x828] sm:$0x7f]
  %v913 = vld [vmem:[%s1 + $0x830] sm:$0x7f]
  %v914 = vld [vmem:[%s1 + $0x838] sm:$0x7f]
  %v915 = vld [vmem:[%s1 + $0x840] sm:$0x7f]
  %v916 = vld [vmem:[%s1 + $0x848] sm:$0x7f]
  %v917 = vld [vmem:[%s1 + $0x850] sm:$0x7f]
  %v918 = vld [vmem:[%s1 + $0x858] sm:$0x7f]
  %v919 = vld [vmem:[%s1 + $0x860] sm:$0x7f]
  %v920 = vld [vmem:[%s1 + $0x868] sm:$0x7f]
  %v921 = vld [vmem:[%s1 + $0x870] sm:$0x7f]
  %v922 = vld [vmem:[%s1 + $0x878] sm:$0x7f]
  %v923 = vld [vmem:[%s1 + $0x880] sm:$0x7f]
  %v924 = vld [vmem:[%s1 + $0x888] sm:$0x7f]
  %v925 = vld [vmem:[%s1 + $0x890] sm:$0x7f]
  %v926 = vld [vmem:[%s1 + $0x898] sm:$0x7f]
  %v927 = vld [vmem:[%s1 + $0x8a0] sm:$0x7f]
  %v928 = vld [vmem:[%s1 + $0x8a8] sm:$0x7f]
  %v929 = vld [vmem:[%s1 + $0x8b0] sm:$0x7f]
  %v930 = vld [vmem:[%s1 + $0x8b8] sm:$0x7f]
  %v931 = vld [vmem:[%s1 + $0x8c0] sm:$0x7f]
  %v932 = vld [vmem:[%s1 + $0x8c8] sm:$0x7f]
  %v933 = vld [vmem:[%s1 + $0x8d0] sm:$0x7f]
  %v934 = vld [vmem:[%s1 + $0x8d8] sm:$0x7f]
  %v935 = vld [vmem:[%s1 + $0x8e0] sm:$0x7f]
  %v936 = vld [vmem:[%s1 + $0x8e8] sm:$0x7f]
  %v937 = vld [vmem:[%s1 + $0x8f0] sm:$0x7f]
  %v938 = vld [vmem:[%s1 + $0x8f8] sm:$0x7f]
  %v939 = vld [vmem:[%s1 + $0x900] sm:$0x7f]
  %v940 = vld [vmem:[%s1 + $0x908] sm:$0x7f]
  %v941 = vld [vmem:[%s1 + $0x910] sm:$0x7f]
  %v942 = vld [vmem:[%s1 + $0x918] sm:$0x7f]
  %v943 = vld [vmem:[%s1 + $0x920] sm:$0x7f]
  %v944 = vld [vmem:[%s1 + $0x928] sm:$0x7f]
  %v945 = vld [vmem:[%s1 + $0x930] sm:$0x7f]
  %v946 = vld [vmem:[%s1 + $0x938] sm:$0x7f]
  %v947 = vld [vmem:[%s1 + $0x940] sm:$0x7f]
  %v948 = vld [vmem:[%s1 + $0x948] sm:$0x7f]
  %v949 = vld [vmem:[%s1 + $0x950] sm:$0x7f]
  %v950 = vld [vmem:[%s1 + $0x958] sm:$0x7f]
  %v951 = vld [vmem:[%s1 + $0x960] sm:$0x7f]
  %v952 = vld [vmem:[%s1 + $0x968] sm:$0x7f]
  %v953 = vld [vmem:[%s1 + $0x970] sm:$0x7f]
  %v954 = vld [vmem:[%s1 + $0x978] sm:$0x7f]
  %v955 = vld [vmem:[%s1 + $0x980] sm:$0x7f]
  %v956 = vld [vmem:[%s1 + $0x988] sm:$0x7f]
  %v957 = vld [vmem:[%s1 + $0x990] sm:$0x7f]
  %v958 = vld [vmem:[%s1 + $0x998] sm:$0x7f]
  %v959 = vld [vmem:[%s1 + $0x9a0] sm:$0x7f]
  %v960 = vld [vmem:[%s1 + $0x9a8] sm:$0x7f]
  %v961 = vld [vmem:[%s1 + $0x9b0] sm:$0x7f]
  %v962 = vld [vmem:[%s1 + $0x9b8] sm:$0x7f]
  %v963 = vld [vmem:[%s1 + $0x9c0] sm:$0x7f]
  %v964 = vld [vmem:[%s1 + $0x9c8] sm:$0x7f]
  %v965 = vld [vmem:[%s1 + $0x9d0] sm:$0x7f]
  %v966 = vld [vmem:[%s1 + $0x9d8] sm:$0x7f]
  %v967 = vld [vmem:[%s1 + $0x9e0] sm:$0x7f]
  %v968 = vld [vmem:[%s1 + $0x9e8] sm:$0x7f]
  %v969 = vld [vmem:[%s1 + $0x9f0] sm:$0x7f]
  %v970 = vld [vmem:[%s1 + $0x9f8] sm:$0x7f]
  %v971 = vld [vmem:[%s1 + $0xa00] sm:$0x7f]
  %v972 = vld [vmem:[%s1 + $0xa08] sm:$0x7f]
  %v973 = vld [vmem:[%s1 + $0xa10] sm:$0x7f]
  %v974 = vld [vmem:[%s1 + $0xa18] sm:$0x7f]
  %v975 = vld [vmem:[%s1 + $0xa20] sm:$0x7f]
  %v976 = vld [vmem:[%s1 + $0xa28] sm:$0x7f]
  %v977 = vld [vmem:[%s1 + $0xa30] sm:$0x7f]
  %v978 = vld [vmem:[%s1 + $0xa38] sm:$0x7f]
  %v979 = vld [vmem:[%s1 + $0xa40] sm:$0x7f]
  %v980 = vld [vmem:[%s1 + $0xa48] sm:$0x7f]
  %v981 = vld [vmem:[%s1 + $0xa50] sm:$0x7f]
  %v982 = vld [vmem:[%s1 + $0xa58] sm:$0x7f]
  %v983 = vld [vmem:[%s1 + $0xa60] sm:$0x7f]
  %v984 = vld [vmem:[%s1 + $0xa68] sm:$0x7f]
  %v985 = vld [vmem:[%s1 + $0xa70] sm:$0x7f]
  %v986 = vld [vmem:[%s1 + $0xa78] sm:$0x7f]
  %v987 = vld [vmem:[%s1 + $0xa80] sm:$0x7f]
  %v988 = vld [vmem:[%s1 + $0xa88] sm:$0x7f]
  %v989 = vld [vmem:[%s1 + $0xa90] sm:$0x7f]
  %v990 = vld [vmem:[%s1 + $0xa98] sm:$0x7f]
  %v991 = vld [vmem:[%s1 + $0xaa0] sm:$0x7f]
  %v992 = vld [vmem:[%s1 + $0xaa8] sm:$0x7f]
  %v993 = vld [vmem:[%s1 + $0xab0] sm:$0x7f]
  %v994 = vld [vmem:[%s1 + $0xab8] sm:$0x7f]
  %v995 = vld [vmem:[%s1 + $0xac0] sm:$0x7f]
  %v996 = vld [vmem:[%s1 + $0xac8] sm:$0x7f]
  %v997 = vld [vmem:[%s1 + $0xad0] sm:$0x7f]
  %v998 = vld [vmem:[%s1 + $0xad8] sm:$0x7f]
  %v999 = vld [vmem:[%s1 + $0xae0] sm:$0x7f]
  %v1000 = vld [vmem:[%s1 + $0xae8] sm:$0x7f]
  %v1001 = vld [vmem:[%s1 + $0xaf0] sm:$0x7f]
  %v1002 = vld [vmem:[%s1 + $0xaf8] sm:$0x7f]
  %v1003 = vld [vmem:[%s1 + $0xb00] sm:$0x7f]
  %v1004 = vld [vmem:[%s1 + $0xb08] sm:$0x7f]
  %v1005 = vld [vmem:[%s1 + $0xb10] sm:$0x7f]
  %v1006 = vld [vmem:[%s1 + $0xb18] sm:$0x7f]
  %v1007 = vld [vmem:[%s1 + $0xb20] sm:$0x7f]
  %v1008 = vld [vmem:[%s1 + $0xb28] sm:$0x7f]
  %v1009 = vld [vmem:[%s1 + $0xb30] sm:$0x7f]
  %v1010 = vld [vmem:[%s1 + $0xb38] sm:$0x7f]
  %v1011 = vld [vmem:[%s1 + $0xb40] sm:$0x7f]
  %v1012 = vld [vmem:[%s1 + $0xb48] sm:$0x7f]
  %v1013 = vld [vmem:[%s1 + $0xb50] sm:$0x7f]
  %v1014 = vld [vmem:[%s1 + $0xb58] sm:$0x7f]
  %v1015 = vld [vmem:[%s1 + $0xb60] sm:$0x7f]
  %v1016 = vld [vmem:[%s1 + $0xb68] sm:$0x7f]
  %v1017 = vld [vmem:[%s1 + $0xb70] sm:$0x7f]
  %v1018 = vld [vmem:[%s1 + $0xb78] sm:$0x7f]
  %v1019 = vld [vmem:[%s1 + $0xb80] sm:$0x7f]
  %v1020 = vld [vmem:[%s1 + $0xb88] sm:$0x7f]
  %v1021 = vld [vmem:[%s1 + $0xb90] sm:$0x7f]
  %v1022 = vld [vmem:[%s1 + $0xb98] sm:$0x7f]
  %v1023 = vld [vmem:[%s1 + $0xba0] sm:$0x7f]
  %v1024 = vld [vmem:[%s1 + $0xba8] sm:$0x7f]
  %v1025 = vld [vmem:[%s1 + $0xbb0] sm:$0x7f]
  %v1026 = vld [vmem:[%s1 + $0xbb8] sm:$0x7f]
  %v1027 = vld [vmem:[%s1 + $0xbc0] sm:$0x7f]
  %v1028 = vld [vmem:[%s1 + $0xbc8] sm:$0x7f]
  %v1029 = vld [vmem:[%s1 + $0xbd0] sm:$0x7f]
  %v1030 = vld [vmem:[%s1 + $0xbd8] sm:$0x7f]
  %v1031 = vld [vmem:[%s1 + $0xbe0] sm:$0x7f]
  %v1032 = vld [vmem:[%s1 + $0xbe8] sm:$0x7f]
  %v1033 = vld [vmem:[%s1 + $0xbf0] sm:$0x7f]
  %v1034 = vld [vmem:[%s1 + $0xbf8] sm:$0x7f]
  %v1035 = vld [vmem:[%s1 + $0xc00] sm:$0x7f]
  %v1036 = vld [vmem:[%s1 + $0xc08] sm:$0x7f]
  %v1037 = vld [vmem:[%s1 + $0xc10] sm:$0x7f]
  %v1038 = vld [vmem:[%s1 + $0xc18] sm:$0x7f]
  %v1039 = vld [vmem:[%s1 + $0xc20] sm:$0x7f]
  %v1040 = vld [vmem:[%s1 + $0xc28] sm:$0x7f]
  %v1041 = vld [vmem:[%s1 + $0xc30] sm:$0x7f]
  %v1042 = vld [vmem:[%s1 + $0xc38] sm:$0x7f]
  %v1043 = vld [vmem:[%s1 + $0xc40] sm:$0x7f]
  %v1044 = vld [vmem:[%s1 + $0xc48] sm:$0x7f]
  %v1045 = vld [vmem:[%s1 + $0xc50] sm:$0x7f]
  %v1046 = vld [vmem:[%s1 + $0xc58] sm:$0x7f]
  %v1047 = vld [vmem:[%s1 + $0xc60] sm:$0x7f]
  %v1048 = vld [vmem:[%s1 + $0xc68] sm:$0x7f]
  %v1049 = vld [vmem:[%s1 + $0xc70] sm:$0x7f]
  %v1050 = vld [vmem:[%s1 + $0xc78] sm:$0x7f]
  %v1051 = vld [vmem:[%s1 + $0xc80] sm:$0x7f]
  %v1052 = vld [vmem:[%s1 + $0xc88] sm:$0x7f]
  %v1053 = vld [vmem:[%s1 + $0xc90] sm:$0x7f]
  %v1054 = vld [vmem:[%s1 + $0xc98] sm:$0x7f]
  %v1055 = vld [vmem:[%s1 + $0xca0] sm:$0x7f]
  %v1056 = vld [vmem:[%s1 + $0xca8] sm:$0x7f]
  %v1057 = vld [vmem:[%s1 + $0xcb0] sm:$0x7f]
  %v1058 = vld [vmem:[%s1 + $0xcb8] sm:$0x7f]
  %v1059 = vld [vmem:[%s1 + $0xcc0] sm:$0x7f]
  %v1060 = vld [vmem:[%s1 + $0xcc8] sm:$0x7f]
  %v1061 = vld [vmem:[%s1 + $0xcd0] sm:$0x7f]
  %v1062 = vld [vmem:[%s1 + $0xcd8] sm:$0x7f]
  %v1063 = vld [vmem:[%s1 + $0xce0] sm:$0x7f]
  %v1064 = vld [vmem:[%s1 + $0xce8] sm:$0x7f]
  %v1065 = vld [vmem:[%s1 + $0xcf0] sm:$0x7f]
  %v1066 = vld [vmem:[%s1 + $0xcf8] sm:$0x7f]
  %v1067 = vld [vmem:[%s1 + $0xd00] sm:$0x7f]
  %v1068 = vld [vmem:[%s1 + $0xd08] sm:$0x7f]
  %v1069 = vld [vmem:[%s1 + $0xd10] sm:$0x7f]
  %v1070 = vld [vmem:[%s1 + $0xd18] sm:$0x7f]
  %v1071 = vld [vmem:[%s1 + $0xd20] sm:$0x7f]
  %v1072 = vld [vmem:[%s1 + $0xd28] sm:$0x7f]
  %v1073 = vld [vmem:[%s1 + $0xd30] sm:$0x7f]
  %v1074 = vld [vmem:[%s1 + $0xd38] sm:$0x7f]
  %v1075 = vld [vmem:[%s1 + $0xd40] sm:$0x7f]
  %v1076 = vld [vmem:[%s1 + $0xd48] sm:$0x7f]
  %v1077 = vld [vmem:[%s1 + $0xd50] sm:$0x7f]
  %v1078 = vld [vmem:[%s1 + $0xd58] sm:$0x7f]
  %v1079 = vld [vmem:[%s1 + $0xd60] sm:$0x7f]
  %v1080 = vld [vmem:[%s1 + $0xd68] sm:$0x7f]
  %v1081 = vld [vmem:[%s1 + $0xd70] sm:$0x7f]
  %v1082 = vld [vmem:[%s1 + $0xd78] sm:$0x7f]
  %v1083 = vld [vmem:[%s1 + $0xd80] sm:$0x7f]
  %v1084 = vld [vmem:[%s1 + $0xd88] sm:$0x7f]
  %v1085 = vld [vmem:[%s1 + $0xd90] sm:$0x7f]
  %v1086 = vld [vmem:[%s1 + $0xd98] sm:$0x7f]
  %v1087 = vld [vmem:[%s1 + $0xda0] sm:$0x7f]
  %v1088 = vld [vmem:[%s1 + $0xda8] sm:$0x7f]
  %v1089 = vld [vmem:[%s1 + $0xdb0] sm:$0x7f]
  %v1090 = vld [vmem:[%s1 + $0xdb8] sm:$0x7f]
  %v1091 = vld [vmem:[%s1 + $0xdc0] sm:$0x7f]
  %v1092 = vld [vmem:[%s1 + $0xdc8] sm:$0x7f]
  %v1093 = vld [vmem:[%s1 + $0xdd0] sm:$0x7f]
  %v1094 = vld [vmem:[%s1 + $0xdd8] sm:$0x7f]
  %v1095 = vld [vmem:[%s1 + $0xde0] sm:$0x7f]
  %v1096 = vld [vmem:[%s1 + $0xde8] sm:$0x7f]
  %v1097 = vld [vmem:[%s1 + $0xdf0] sm:$0x7f]
  %v1098 = vld [vmem:[%s1 + $0xdf8] sm:$0x7f]
  %v1099 = vld [vmem:[%s1 + $0xe00] sm:$0x7f]
  %v1100 = vld [vmem:[%s1 + $0xe08] sm:$0x7f]
  %v1101 = vld [vmem:[%s1 + $0xe10] sm:$0x7f]
  %v1102 = vld [vmem:[%s1 + $0xe18] sm:$0x7f]
  %v1103 = vld [vmem:[%s1 + $0xe20] sm:$0x7f]
  %v1104 = vld [vmem:[%s1 + $0xe28] sm:$0x7f]
  %v1105 = vld [vmem:[%s1 + $0xe30] sm:$0x7f]
  %v1106 = vld [vmem:[%s1 + $0xe38] sm:$0x7f]
  %v1107 = vld [vmem:[%s1 + $0xe40] sm:$0x7f]
  %v1108 = vld [vmem:[%s1 + $0xe48] sm:$0x7f]
  %v1109 = vld [vmem:[%s1 + $0xe50] sm:$0x7f]
  %v1110 = vld [vmem:[%s1 + $0xe58] sm:$0x7f]
  %v1111 = vld [vmem:[%s1 + $0xe60] sm:$0x7f]
  %v1112 = vld [vmem:[%s1 + $0xe68] sm:$0x7f]
  %v1113 = vld [vmem:[%s1 + $0xe70] sm:$0x7f]
  %v1114 = vld [vmem:[%s1 + $0xe78] sm:$0x7f]
  %v1115 = vld [vmem:[%s1 + $0xe80] sm:$0x7f]
  %v1116 = vld [vmem:[%s1 + $0xe88] sm:$0x7f]
  %v1117 = vld [vmem:[%s1 + $0xe90] sm:$0x7f]
  %v1118 = vld [vmem:[%s1 + $0xe98] sm:$0x7f]
  %v1119 = vld [vmem:[%s1 + $0xea0] sm:$0x7f]
  %v1120 = vld [vmem:[%s1 + $0xea8] sm:$0x7f]
  %v1121 = vld [vmem:[%s1 + $0xeb0] sm:$0x7f]
  %v1122 = vld [vmem:[%s1 + $0xeb8] sm:$0x7f]
  %v1123 = vld [vmem:[%s1 + $0xec0] sm:$0x7f]
  %v1124 = vld [vmem:[%s1 + $0xec8] sm:$0x7f]
  %v1125 = vld [vmem:[%s1 + $0xed0] sm:$0x7f]
  %v1126 = vld [vmem:[%s1 + $0xed8] sm:$0x7f]
  %v1127 = vld [vmem:[%s1 + $0xee0] sm:$0x7f]
  %v1128 = vld [vmem:[%s1 + $0xee8] sm:$0x7f]
  %v1129 = vld [vmem:[%s1 + $0xef0] sm:$0x7f]
  %v1130 = vld [vmem:[%s1 + $0xef8] sm:$0x7f]
  %v1131 = vld [vmem:[%s1 + $0xf00] sm:$0x7f]
  %v1132 = vld [vmem:[%s1 + $0xf08] sm:$0x7f]
  %v1133 = vld [vmem:[%s1 + $0xf10] sm:$0x7f]
  %v1134 = vld [vmem:[%s1 + $0xf18] sm:$0x7f]
  %v1135 = vld [vmem:[%s1 + $0xf20] sm:$0x7f]
  %v1136 = vld [vmem:[%s1 + $0xf28] sm:$0x7f]
  %v1137 = vld [vmem:[%s1 + $0xf30] sm:$0x7f]
  %v1138 = vld [vmem:[%s1 + $0xf38] sm:$0x7f]
  %v1139 = vld [vmem:[%s1 + $0xf40] sm:$0x7f]
  %v1140 = vld [vmem:[%s1 + $0xf48] sm:$0x7f]
  %v1141 = vld [vmem:[%s1 + $0xf50] sm:$0x7f]
  %v1142 = vld [vmem:[%s1 + $0xf58] sm:$0x7f]
  %v1143 = vld [vmem:[%s1 + $0xf60] sm:$0x7f]
  %v1144 = vld [vmem:[%s1 + $0xf68] sm:$0x7f]
  %v1145 = vld [vmem:[%s1 + $0xf70] sm:$0x7f]
  %v1146 = vld [vmem:[%s1 + $0xf78] sm:$0x7f]
  %v1147 = vld [vmem:[%s1 + $0xf80] sm:$0x7f]
  %v1148 = vld [vmem:[%s1 + $0xf88] sm:$0x7f]
  %v1149 = vld [vmem:[%s1 + $0xf90] sm:$0x7f]
  %v1150 = vld [vmem:[%s1 + $0xf98] sm:$0x7f]
  %v1151 = vld [vmem:[%s1 + $0xfa0] sm:$0x7f]
  %v1152 = vld [vmem:[%s1 + $0xfa8] sm:$0x7f]
  %v1153 = vld [vmem:[%s1 + $0xfb0] sm:$0x7f]
  %v1154 = vld [vmem:[%s1 + $0xfb8] sm:$0x7f]
  %v1155 = vld [vmem:[%s1 + $0xfc0] sm:$0x7f]
  %v1156 = vld [vmem:[%s1 + $0xfc8] sm:$0x7f]
  %v1157 = vld [vmem:[%s1 + $0xfd0] sm:$0x7f]
  %v1158 = vld [vmem:[%s1 + $0xfd8] sm:$0x7f]
  %v1159 = vld [vmem:[%s1 + $0xfe0] sm:$0x7f]
  %v1160 = vld [vmem:[%s1 + $0xfe8] sm:$0x7f]
  %v1161 = vld [vmem:[%s1 + $0xff0] sm:$0x7f]
  %v1162 = vld [vmem:[%s1 + $0xff8] sm:$0x7f]
  %v1163 = vld [vmem:[%s1 + $0x1000] sm:$0x7f]
  %v1164 = vld [vmem:[%s1 + $0x1008] sm:$0x7f]
  %v1165 = vld [vmem:[%s1 + $0x1010] sm:$0x7f]
  %v1166 = vld [vmem:[%s1 + $0x1018] sm:$0x7f]
  %v1167 = vld [vmem:[%s1 + $0x1020] sm:$0x7f]
  %v1168 = vld [vmem:[%s1 + $0x1028] sm:$0x7f]
  %v1169 = vld [vmem:[%s1 + $0x1030] sm:$0x7f]
  %v1170 = vld [vmem:[%s1 + $0x1038] sm:$0x7f]
  %v1171 = vld [vmem:[%s1 + $0x1040] sm:$0x7f]
  %v1172 = vld [vmem:[%s1 + $0x1048] sm:$0x7f]
  %v1173 = vld [vmem:[%s1 + $0x1050] sm:$0x7f]
  %v1174 = vld [vmem:[%s1 + $0x1058] sm:$0x7f]
  %v1175 = vld [vmem:[%s1 + $0x1060] sm:$0x7f]
  %v1176 = vld [vmem:[%s1 + $0x1068] sm:$0x7f]
  %v1177 = vld [vmem:[%s1 + $0x1070] sm:$0x7f]
  %v1178 = vld [vmem:[%s1 + $0x1078] sm:$0x7f]
  %v1179 = vld [vmem:[%s1 + $0x1080] sm:$0x7f]
  %v1180 = vld [vmem:[%s1 + $0x1088] sm:$0x7f]
  %v1181 = vld [vmem:[%s1 + $0x1090] sm:$0x7f]
  %v1182 = vld [vmem:[%s1 + $0x1098] sm:$0x7f]
  %v1183 = vld [vmem:[%s1 + $0x10a0] sm:$0x7f]
  %v1184 = vld [vmem:[%s1 + $0x10a8] sm:$0x7f]
  %v1185 = vld [vmem:[%s1 + $0x10b0] sm:$0x7f]
  %v1186 = vld [vmem:[%s1 + $0x10b8] sm:$0x7f]
  %v1187 = vld [vmem:[%s1 + $0x10c0] sm:$0x7f]
  %v1188 = vld [vmem:[%s1 + $0x10c8] sm:$0x7f]
  %v1189 = vld [vmem:[%s1 + $0x10d0] sm:$0x7f]
  %v1190 = vld [vmem:[%s1 + $0x10d8] sm:$0x7f]
  %v1191 = vld [vmem:[%s1 + $0x10e0] sm:$0x7f]
  %v1192 = vld [vmem:[%s1 + $0x10e8] sm:$0x7f]
  %v1193 = vld [vmem:[%s1 + $0x10f0] sm:$0x7f]
  %v1194 = vld [vmem:[%s1 + $0x10f8] sm:$0x7f]
  %v1195 = vld [vmem:[%s1 + $0x1100] sm:$0x7f]
  %v1196 = vld [vmem:[%s1 + $0x1108] sm:$0x7f]
  %v1197 = vld [vmem:[%s1 + $0x1110] sm:$0x7f]
  %v1198 = vld [vmem:[%s1 + $0x1118] sm:$0x7f]
  %v1199 = vld [vmem:[%s1 + $0x1120] sm:$0x7f]
  %v1200 = vld [vmem:[%s1 + $0x1128] sm:$0x7f]
  %v1201 = vld [vmem:[%s1 + $0x1130] sm:$0x7f]
  %v1202 = vld [vmem:[%s1 + $0x1138] sm:$0x7f]
  %v1203 = vld [vmem:[%s1 + $0x1140] sm:$0x7f]
  %v1204 = vld [vmem:[%s1 + $0x1148] sm:$0x7f]
  %v1205 = vld [vmem:[%s1 + $0x1150] sm:$0x7f]
  %v1206 = vld [vmem:[%s1 + $0x1158] sm:$0x7f]
  %v1207 = vld [vmem:[%s1 + $0x1160] sm:$0x7f]
  %v1208 = vld [vmem:[%s1 + $0x1168] sm:$0x7f]
  %v1209 = vld [vmem:[%s1 + $0x1170] sm:$0x7f]
  %v1210 = vld [vmem:[%s1 + $0x1178] sm:$0x7f]
  %v1211 = vld [vmem:[%s1 + $0x1180] sm:$0x7f]
  %v1212 = vld [vmem:[%s1 + $0x1188] sm:$0x7f]
  %v1213 = vld [vmem:[%s1 + $0x1190] sm:$0x7f]
  %v1214 = vld [vmem:[%s1 + $0x1198] sm:$0x7f]
  %v1215 = vld [vmem:[%s1 + $0x11a0] sm:$0x7f]
  %v1216 = vld [vmem:[%s1 + $0x11a8] sm:$0x7f]
  %v1217 = vld [vmem:[%s1 + $0x11b0] sm:$0x7f]
  %v1218 = vld [vmem:[%s1 + $0x11b8] sm:$0x7f]
  %v1219 = vld [vmem:[%s1 + $0x11c0] sm:$0x7f]
  %v1220 = vld [vmem:[%s1 + $0x11c8] sm:$0x7f]
  %v1221 = vld [vmem:[%s1 + $0x11d0] sm:$0x7f]
  %v1222 = vld [vmem:[%s1 + $0x11d8] sm:$0x7f]
  %v1223 = vld [vmem:[%s1 + $0x11e0] sm:$0x7f]
  %v1224 = vld [vmem:[%s1 + $0x11e8] sm:$0x7f]
  %v1225 = vld [vmem:[%s1 + $0x11f0] sm:$0x7f]
  %v1226 = vld [vmem:[%s1 + $0x11f8] sm:$0x7f]
  %v1227 = vld [vmem:[%s1 + $0x1200] sm:$0x7f]
  %v1228 = vld [vmem:[%s1 + $0x1208] sm:$0x7f]
  %v1229 = vld [vmem:[%s1 + $0x1210] sm:$0x7f]
  %v1230 = vld [vmem:[%s1 + $0x1218] sm:$0x7f]
  %v1231 = vld [vmem:[%s1 + $0x1220] sm:$0x7f]
  %v1232 = vld [vmem:[%s1 + $0x1228] sm:$0x7f]
  %v1233 = vld [vmem:[%s1 + $0x1230] sm:$0x7f]
  %v1234 = vld [vmem:[%s1 + $0x1238] sm:$0x7f]
  %v1235 = vld [vmem:[%s1 + $0x1240] sm:$0x7f]
  %v1236 = vld [vmem:[%s1 + $0x1248] sm:$0x7f]
  %v1237 = vld [vmem:[%s1 + $0x1250] sm:$0x7f]
  %v1238 = vld [vmem:[%s1 + $0x1258] sm:$0x7f]
  %v1239 = vld [vmem:[%s1 + $0x1260] sm:$0x7f]
  %v1240 = vld [vmem:[%s1 + $0x1268] sm:$0x7f]
  %v1241 = vld [vmem:[%s1 + $0x1270] sm:$0x7f]
  %v1242 = vld [vmem:[%s1 + $0x1278] sm:$0x7f]
  %v1243 = vld [vmem:[%s1 + $0x1280] sm:$0x7f]
  %v1244 = vld [vmem:[%s1 + $0x1288] sm:$0x7f]
  %v1245 = vld [vmem:[%s1 + $0x1290] sm:$0x7f]
  %v1246 = vld [vmem:[%s1 + $0x1298] sm:$0x7f]
  %v1247 = vld [vmem:[%s1 + $0x12a0] sm:$0x7f]
  %v1248 = vld [vmem:[%s1 + $0x12a8] sm:$0x7f]
  %v1249 = vld [vmem:[%s1 + $0x12b0] sm:$0x7f]
  %v1250 = vld [vmem:[%s1 + $0x12b8] sm:$0x7f]
  %v1251 = vld [vmem:[%s1 + $0x12c0] sm:$0x7f]
  %v1252 = vld [vmem:[%s1 + $0x12c8] sm:$0x7f]
  %v1253 = vld [vmem:[%s1 + $0x12d0] sm:$0x7f]
  %v1254 = vld [vmem:[%s1 + $0x12d8] sm:$0x7f]
  %v1255 = vld [vmem:[%s1 + $0x12e0] sm:$0x7f]
  %v1256 = vld [vmem:[%s1 + $0x12e8] sm:$0x7f]
  %v1257 = vld [vmem:[%s1 + $0x12f0] sm:$0x7f]
  %v1258 = vld [vmem:[%s1 + $0x12f8] sm:$0x7f]
  %v1259 = vld [vmem:[%s1 + $0x1300] sm:$0x7f]
  %v1260 = vld [vmem:[%s1 + $0x1308] sm:$0x7f]
  %v1261 = vld [vmem:[%s1 + $0x1310] sm:$0x7f]
  %v1262 = vld [vmem:[%s1 + $0x1318] sm:$0x7f]
  %v1263 = vld [vmem:[%s1 + $0x1320] sm:$0x7f]
  %v1264 = vld [vmem:[%s1 + $0x1328] sm:$0x7f]
  %v1265 = vld [vmem:[%s1 + $0x1330] sm:$0x7f]
  %v1266 = vld [vmem:[%s1 + $0x1338] sm:$0x7f]
  %v1267 = vld [vmem:[%s1 + $0x1340] sm:$0x7f]
  %v1268 = vld [vmem:[%s1 + $0x1348] sm:$0x7f]
  %v1269 = vld [vmem:[%s1 + $0x1350] sm:$0x7f]
  %v1270 = vld [vmem:[%s1 + $0x1358] sm:$0x7f]
  %v1271 = vld [vmem:[%s1 + $0x1360] sm:$0x7f]
  %v1272 = vld [vmem:[%s1 + $0x1368] sm:$0x7f]
  %v1273 = vld [vmem:[%s1 + $0x1370] sm:$0x7f]
  %v1274 = vld [vmem:[%s1 + $0x1378] sm:$0x7f]
  %v1275 = vld [vmem:[%s1 + $0x1380] sm:$0x7f]
  %v1276 = vld [vmem:[%s1 + $0x1388] sm:$0x7f]
  %v1277 = vld [vmem:[%s1 + $0x1390] sm:$0x7f]
  %v1278 = vld [vmem:[%s1 + $0x1398] sm:$0x7f]
  %v1279 = vld [vmem:[%s1 + $0x13a0] sm:$0x7f]
  %v1280 = vld [vmem:[%s1 + $0x13a8] sm:$0x7f]
  %v1281 = vld [vmem:[%s1 + $0x13b0] sm:$0x7f]
  %v1282 = vld [vmem:[%s1 + $0x13b8] sm:$0x7f]
  %v1283 = vld [vmem:[%s1 + $0x13c0] sm:$0x7f]
  %v1284 = vld [vmem:[%s1 + $0x13c8] sm:$0x7f]
  %v1285 = vld [vmem:[%s1 + $0x13d0] sm:$0x7f]
  %v1286 = vld [vmem:[%s1 + $0x13d8] sm:$0x7f]
  %v1287 = vld [vmem:[%s1 + $0x13e0] sm:$0x7f]
  %v1288 = vld [vmem:[%s1 + $0x13e8] sm:$0x7f]
  %v1289 = vld [vmem:[%s1 + $0x13f0] sm:$0x7f]
  %v1290 = vld [vmem:[%s1 + $0x13f8] sm:$0x7f]
  %v1291 = vadd.f32 %v11, %v651
  %v1292 = vadd.f32 %v12, %v652
  %v1293 = vadd.f32 %v13, %v653
  %v1294 = vadd.f32 %v14, %v654
  %v1295 = vadd.f32 %v15, %v655
  %v1296 = vadd.f32 %v16, %v656
  %v1297 = vadd.f32 %v17, %v657
  %v1298 = vadd.f32 %v18, %v658
  %v1299 = vadd.f32 %v19, %v659
  %v1300 = vadd.f32 %v20, %v660
  %v1301 = vadd.f32 %v21, %v661
  %v1302 = vadd.f32 %v22, %v662
  %v1303 = vadd.f32 %v23, %v663
  %v1304 = vadd.f32 %v24, %v664
  %v1305 = vadd.f32 %v25, %v665
  %v1306 = vadd.f32 %v26, %v666
  %v1307 = vadd.f32 %v27, %v667
  %v1308 = vadd.f32 %v28, %v668
  %v1309 = vadd.f32 %v29, %v669
  %v1310 = vadd.f32 %v30, %v670
  %v1311 = vadd.f32 %v31, %v671
  %v1312 = vadd.f32 %v32, %v672
  %v1313 = vadd.f32 %v33, %v673
  %v1314 = vadd.f32 %v34, %v674
  %v1315 = vadd.f32 %v35, %v675
  %v1316 = vadd.f32 %v36, %v676
  %v1317 = vadd.f32 %v37, %v677
  %v1318 = vadd.f32 %v38, %v678
  %v1319 = vadd.f32 %v39, %v679
  %v1320 = vadd.f32 %v40, %v680
  %v1321 = vadd.f32 %v41, %v681
  %v1322 = vadd.f32 %v42, %v682
  %v1323 = vadd.f32 %v43, %v683
  %v1324 = vadd.f32 %v44, %v684
  %v1325 = vadd.f32 %v45, %v685
  %v1326 = vadd.f32 %v46, %v686
  %v1327 = vadd.f32 %v47, %v687
  %v1328 = vadd.f32 %v48, %v688
  %v1329 = vadd.f32 %v49, %v689
  %v1330 = vadd.f32 %v50, %v690
  %v1331 = vadd.f32 %v51, %v691
  %v1332 = vadd.f32 %v52, %v692
  %v1333 = vadd.f32 %v53, %v693
  %v1334 = vadd.f32 %v54, %v694
  %v1335 = vadd.f32 %v55, %v695
  %v1336 = vadd.f32 %v56, %v696
  %v1337 = vadd.f32 %v57, %v697
  %v1338 = vadd.f32 %v58, %v698
  %v1339 = vadd.f32 %v59, %v699
  %v1340 = vadd.f32 %v60, %v700
  %v1341 = vadd.f32 %v61, %v701
  %v1342 = vadd.f32 %v62, %v702
  %v1343 = vadd.f32 %v63, %v703
  %v1344 = vadd.f32 %v64, %v704
  %v1345 = vadd.f32 %v65, %v705
  %v1346 = vadd.f32 %v66, %v706
  %v1347 = vadd.f32 %v67, %v707
  %v1348 = vadd.f32 %v68, %v708
  %v1349 = vadd.f32 %v69, %v709
  %v1350 = vadd.f32 %v70, %v710
  %v1351 = vadd.f32 %v71, %v711
  %v1352 = vadd.f32 %v72, %v712
  %v1353 = vadd.f32 %v73, %v713
  %v1354 = vadd.f32 %v74, %v714
  %v1355 = vadd.f32 %v75, %v715
  %v1356 = vadd.f32 %v76, %v716
  %v1357 = vadd.f32 %v77, %v717
  %v1358 = vadd.f32 %v78, %v718
  %v1359 = vadd.f32 %v79, %v719
  %v1360 = vadd.f32 %v80, %v720
  %v1361 = vadd.f32 %v81, %v721
  %v1362 = vadd.f32 %v82, %v722
  %v1363 = vadd.f32 %v83, %v723
  %v1364 = vadd.f32 %v84, %v724
  %v1365 = vadd.f32 %v85, %v725
  %v1366 = vadd.f32 %v86, %v726
  %v1367 = vadd.f32 %v87, %v727
  %v1368 = vadd.f32 %v88, %v728
  %v1369 = vadd.f32 %v89, %v729
  %v1370 = vadd.f32 %v90, %v730
  %v1371 = vadd.f32 %v91, %v731
  %v1372 = vadd.f32 %v92, %v732
  %v1373 = vadd.f32 %v93, %v733
  %v1374 = vadd.f32 %v94, %v734
  %v1375 = vadd.f32 %v95, %v735
  %v1376 = vadd.f32 %v96, %v736
  %v1377 = vadd.f32 %v97, %v737
  %v1378 = vadd.f32 %v98, %v738
  %v1379 = vadd.f32 %v99, %v739
  %v1380 = vadd.f32 %v100, %v740
  %v1381 = vadd.f32 %v101, %v741
  %v1382 = vadd.f32 %v102, %v742
  %v1383 = vadd.f32 %v103, %v743
  %v1384 = vadd.f32 %v104, %v744
  %v1385 = vadd.f32 %v105, %v745
  %v1386 = vadd.f32 %v106, %v746
  %v1387 = vadd.f32 %v107, %v747
  %v1388 = vadd.f32 %v108, %v748
  %v1389 = vadd.f32 %v109, %v749
  %v1390 = vadd.f32 %v110, %v750
  %v1391 = vadd.f32 %v111, %v751
  %v1392 = vadd.f32 %v112, %v752
  %v1393 = vadd.f32 %v113, %v753
  %v1394 = vadd.f32 %v114, %v754
  %v1395 = vadd.f32 %v115, %v755
  %v1396 = vadd.f32 %v116, %v756
  %v1397 = vadd.f32 %v117, %v757
  %v1398 = vadd.f32 %v118, %v758
  %v1399 = vadd.f32 %v119, %v759
  %v1400 = vadd.f32 %v120, %v760
  %v1401 = vadd.f32 %v121, %v761
  %v1402 = vadd.f32 %v122, %v762
  %v1403 = vadd.f32 %v123, %v763
  %v1404 = vadd.f32 %v124, %v764
  %v1405 = vadd.f32 %v125, %v765
  %v1406 = vadd.f32 %v126, %v766
  %v1407 = vadd.f32 %v127, %v767
  %v1408 = vadd.f32 %v128, %v768
  %v1409 = vadd.f32 %v129, %v769
  %v1410 = vadd.f32 %v130, %v770
  %v1411 = vadd.f32 %v131, %v771
  %v1412 = vadd.f32 %v132, %v772
  %v1413 = vadd.f32 %v133, %v773
  %v1414 = vadd.f32 %v134, %v774
  %v1415 = vadd.f32 %v135, %v775
  %v1416 = vadd.f32 %v136, %v776
  %v1417 = vadd.f32 %v137, %v777
  %v1418 = vadd.f32 %v138, %v778
  %v1419 = vadd.f32 %v139, %v779
  %v1420 = vadd.f32 %v140, %v780
  %v1421 = vadd.f32 %v141, %v781
  %v1422 = vadd.f32 %v142, %v782
  %v1423 = vadd.f32 %v143, %v783
  %v1424 = vadd.f32 %v144, %v784
  %v1425 = vadd.f32 %v145, %v785
  %v1426 = vadd.f32 %v146, %v786
  %v1427 = vadd.f32 %v147, %v787
  %v1428 = vadd.f32 %v148, %v788
  %v1429 = vadd.f32 %v149, %v789
  %v1430 = vadd.f32 %v150, %v790
  %v1431 = vadd.f32 %v151, %v791
  %v1432 = vadd.f32 %v152, %v792
  %v1433 = vadd.f32 %v153, %v793
  %v1434 = vadd.f32 %v154, %v794
  %v1435 = vadd.f32 %v155, %v795
  %v1436 = vadd.f32 %v156, %v796
  %v1437 = vadd.f32 %v157, %v797
  %v1438 = vadd.f32 %v158, %v798
  %v1439 = vadd.f32 %v159, %v799
  %v1440 = vadd.f32 %v160, %v800
  %v1441 = vadd.f32 %v161, %v801
  %v1442 = vadd.f32 %v162, %v802
  %v1443 = vadd.f32 %v163, %v803
  %v1444 = vadd.f32 %v164, %v804
  %v1445 = vadd.f32 %v165, %v805
  %v1446 = vadd.f32 %v166, %v806
  %v1447 = vadd.f32 %v167, %v807
  %v1448 = vadd.f32 %v168, %v808
  %v1449 = vadd.f32 %v169, %v809
  %v1450 = vadd.f32 %v170, %v810
  %v1451 = vadd.f32 %v171, %v811
  %v1452 = vadd.f32 %v172, %v812
  %v1453 = vadd.f32 %v173, %v813
  %v1454 = vadd.f32 %v174, %v814
  %v1455 = vadd.f32 %v175, %v815
  %v1456 = vadd.f32 %v176, %v816
  %v1457 = vadd.f32 %v177, %v817
  %v1458 = vadd.f32 %v178, %v818
  %v1459 = vadd.f32 %v179, %v819
  %v1460 = vadd.f32 %v180, %v820
  %v1461 = vadd.f32 %v181, %v821
  %v1462 = vadd.f32 %v182, %v822
  %v1463 = vadd.f32 %v183, %v823
  %v1464 = vadd.f32 %v184, %v824
  %v1465 = vadd.f32 %v185, %v825
  %v1466 = vadd.f32 %v186, %v826
  %v1467 = vadd.f32 %v187, %v827
  %v1468 = vadd.f32 %v188, %v828
  %v1469 = vadd.f32 %v189, %v829
  %v1470 = vadd.f32 %v190, %v830
  %v1471 = vadd.f32 %v191, %v831
  %v1472 = vadd.f32 %v192, %v832
  %v1473 = vadd.f32 %v193, %v833
  %v1474 = vadd.f32 %v194, %v834
  %v1475 = vadd.f32 %v195, %v835
  %v1476 = vadd.f32 %v196, %v836
  %v1477 = vadd.f32 %v197, %v837
  %v1478 = vadd.f32 %v198, %v838
  %v1479 = vadd.f32 %v199, %v839
  %v1480 = vadd.f32 %v200, %v840
  %v1481 = vadd.f32 %v201, %v841
  %v1482 = vadd.f32 %v202, %v842
  %v1483 = vadd.f32 %v203, %v843
  %v1484 = vadd.f32 %v204, %v844
  %v1485 = vadd.f32 %v205, %v845
  %v1486 = vadd.f32 %v206, %v846
  %v1487 = vadd.f32 %v207, %v847
  %v1488 = vadd.f32 %v208, %v848
  %v1489 = vadd.f32 %v209, %v849
  %v1490 = vadd.f32 %v210, %v850
  %v1491 = vadd.f32 %v211, %v851
  %v1492 = vadd.f32 %v212, %v852
  %v1493 = vadd.f32 %v213, %v853
  %v1494 = vadd.f32 %v214, %v854
  %v1495 = vadd.f32 %v215, %v855
  %v1496 = vadd.f32 %v216, %v856
  %v1497 = vadd.f32 %v217, %v857
  %v1498 = vadd.f32 %v218, %v858
  %v1499 = vadd.f32 %v219, %v859
  %v1500 = vadd.f32 %v220, %v860
  %v1501 = vadd.f32 %v221, %v861
  %v1502 = vadd.f32 %v222, %v862
  %v1503 = vadd.f32 %v223, %v863
  %v1504 = vadd.f32 %v224, %v864
  %v1505 = vadd.f32 %v225, %v865
  %v1506 = vadd.f32 %v226, %v866
  %v1507 = vadd.f32 %v227, %v867
  %v1508 = vadd.f32 %v228, %v868
  %v1509 = vadd.f32 %v229, %v869
  %v1510 = vadd.f32 %v230, %v870
  %v1511 = vadd.f32 %v231, %v871
  %v1512 = vadd.f32 %v232, %v872
  %v1513 = vadd.f32 %v233, %v873
  %v1514 = vadd.f32 %v234, %v874
  %v1515 = vadd.f32 %v235, %v875
  %v1516 = vadd.f32 %v236, %v876
  %v1517 = vadd.f32 %v237, %v877
  %v1518 = vadd.f32 %v238, %v878
  %v1519 = vadd.f32 %v239, %v879
  %v1520 = vadd.f32 %v240, %v880
  %v1521 = vadd.f32 %v241, %v881
  %v1522 = vadd.f32 %v242, %v882
  %v1523 = vadd.f32 %v243, %v883
  %v1524 = vadd.f32 %v244, %v884
  %v1525 = vadd.f32 %v245, %v885
  %v1526 = vadd.f32 %v246, %v886
  %v1527 = vadd.f32 %v247, %v887
  %v1528 = vadd.f32 %v248, %v888
  %v1529 = vadd.f32 %v249, %v889
  %v1530 = vadd.f32 %v250, %v890
  %v1531 = vadd.f32 %v251, %v891
  %v1532 = vadd.f32 %v252, %v892
  %v1533 = vadd.f32 %v253, %v893
  %v1534 = vadd.f32 %v254, %v894
  %v1535 = vadd.f32 %v255, %v895
  %v1536 = vadd.f32 %v256, %v896
  %v1537 = vadd.f32 %v257, %v897
  %v1538 = vadd.f32 %v258, %v898
  %v1539 = vadd.f32 %v259, %v899
  %v1540 = vadd.f32 %v260, %v900
  %v1541 = vadd.f32 %v261, %v901
  %v1542 = vadd.f32 %v262, %v902
  %v1543 = vadd.f32 %v263, %v903
  %v1544 = vadd.f32 %v264, %v904
  %v1545 = vadd.f32 %v265, %v905
  %v1546 = vadd.f32 %v266, %v906
  %v1547 = vadd.f32 %v267, %v907
  %v1548 = vadd.f32 %v268, %v908
  %v1549 = vadd.f32 %v269, %v909
  %v1550 = vadd.f32 %v270, %v910
  %v1551 = vadd.f32 %v271, %v911
  %v1552 = vadd.f32 %v272, %v912
  %v1553 = vadd.f32 %v273, %v913
  %v1554 = vadd.f32 %v274, %v914
  %v1555 = vadd.f32 %v275, %v915
  %v1556 = vadd.f32 %v276, %v916
  %v1557 = vadd.f32 %v277, %v917
  %v1558 = vadd.f32 %v278, %v918
  %v1559 = vadd.f32 %v279, %v919
  %v1560 = vadd.f32 %v280, %v920
  %v1561 = vadd.f32 %v281, %v921
  %v1562 = vadd.f32 %v282, %v922
  %v1563 = vadd.f32 %v283, %v923
  %v1564 = vadd.f32 %v284, %v924
  %v1565 = vadd.f32 %v285, %v925
  %v1566 = vadd.f32 %v286, %v926
  %v1567 = vadd.f32 %v287, %v927
  %v1568 = vadd.f32 %v288, %v928
  %v1569 = vadd.f32 %v289, %v929
  %v1570 = vadd.f32 %v290, %v930
  %v1571 = vadd.f32 %v291, %v931
  %v1572 = vadd.f32 %v292, %v932
  %v1573 = vadd.f32 %v293, %v933
  %v1574 = vadd.f32 %v294, %v934
  %v1575 = vadd.f32 %v295, %v935
  %v1576 = vadd.f32 %v296, %v936
  %v1577 = vadd.f32 %v297, %v937
  %v1578 = vadd.f32 %v298, %v938
  %v1579 = vadd.f32 %v299, %v939
  %v1580 = vadd.f32 %v300, %v940
  %v1581 = vadd.f32 %v301, %v941
  %v1582 = vadd.f32 %v302, %v942
  %v1583 = vadd.f32 %v303, %v943
  %v1584 = vadd.f32 %v304, %v944
  %v1585 = vadd.f32 %v305, %v945
  %v1586 = vadd.f32 %v306, %v946
  %v1587 = vadd.f32 %v307, %v947
  %v1588 = vadd.f32 %v308, %v948
  %v1589 = vadd.f32 %v309, %v949
  %v1590 = vadd.f32 %v310, %v950
  %v1591 = vadd.f32 %v311, %v951
  %v1592 = vadd.f32 %v312, %v952
  %v1593 = vadd.f32 %v313, %v953
  %v1594 = vadd.f32 %v314, %v954
  %v1595 = vadd.f32 %v315, %v955
  %v1596 = vadd.f32 %v316, %v956
  %v1597 = vadd.f32 %v317, %v957
  %v1598 = vadd.f32 %v318, %v958
  %v1599 = vadd.f32 %v319, %v959
  %v1600 = vadd.f32 %v320, %v960
  %v1601 = vadd.f32 %v321, %v961
  %v1602 = vadd.f32 %v322, %v962
  %v1603 = vadd.f32 %v323, %v963
  %v1604 = vadd.f32 %v324, %v964
  %v1605 = vadd.f32 %v325, %v965
  %v1606 = vadd.f32 %v326, %v966
  %v1607 = vadd.f32 %v327, %v967
  %v1608 = vadd.f32 %v328, %v968
  %v1609 = vadd.f32 %v329, %v969
  %v1610 = vadd.f32 %v330, %v970
  %v1611 = vadd.f32 %v331, %v971
  %v1612 = vadd.f32 %v332, %v972
  %v1613 = vadd.f32 %v333, %v973
  %v1614 = vadd.f32 %v334, %v974
  %v1615 = vadd.f32 %v335, %v975
  %v1616 = vadd.f32 %v336, %v976
  %v1617 = vadd.f32 %v337, %v977
  %v1618 = vadd.f32 %v338, %v978
  %v1619 = vadd.f32 %v339, %v979
  %v1620 = vadd.f32 %v340, %v980
  %v1621 = vadd.f32 %v341, %v981
  %v1622 = vadd.f32 %v342, %v982
  %v1623 = vadd.f32 %v343, %v983
  %v1624 = vadd.f32 %v344, %v984
  %v1625 = vadd.f32 %v345, %v985
  %v1626 = vadd.f32 %v346, %v986
  %v1627 = vadd.f32 %v347, %v987
  %v1628 = vadd.f32 %v348, %v988
  %v1629 = vadd.f32 %v349, %v989
  %v1630 = vadd.f32 %v350, %v990
  %v1631 = vadd.f32 %v351, %v991
  %v1632 = vadd.f32 %v352, %v992
  %v1633 = vadd.f32 %v353, %v993
  %v1634 = vadd.f32 %v354, %v994
  %v1635 = vadd.f32 %v355, %v995
  %v1636 = vadd.f32 %v356, %v996
  %v1637 = vadd.f32 %v357, %v997
  %v1638 = vadd.f32 %v358, %v998
  %v1639 = vadd.f32 %v359, %v999
  %v1640 = vadd.f32 %v360, %v1000
  %v1641 = vadd.f32 %v361, %v1001
  %v1642 = vadd.f32 %v362, %v1002
  %v1643 = vadd.f32 %v363, %v1003
  %v1644 = vadd.f32 %v364, %v1004
  %v1645 = vadd.f32 %v365, %v1005
  %v1646 = vadd.f32 %v366, %v1006
  %v1647 = vadd.f32 %v367, %v1007
  %v1648 = vadd.f32 %v368, %v1008
  %v1649 = vadd.f32 %v369, %v1009
  %v1650 = vadd.f32 %v370, %v1010
  %v1651 = vadd.f32 %v371, %v1011
  %v1652 = vadd.f32 %v372, %v1012
  %v1653 = vadd.f32 %v373, %v1013
  %v1654 = vadd.f32 %v374, %v1014
  %v1655 = vadd.f32 %v375, %v1015
  %v1656 = vadd.f32 %v376, %v1016
  %v1657 = vadd.f32 %v377, %v1017
  %v1658 = vadd.f32 %v378, %v1018
  %v1659 = vadd.f32 %v379, %v1019
  %v1660 = vadd.f32 %v380, %v1020
  %v1661 = vadd.f32 %v381, %v1021
  %v1662 = vadd.f32 %v382, %v1022
  %v1663 = vadd.f32 %v383, %v1023
  %v1664 = vadd.f32 %v384, %v1024
  %v1665 = vadd.f32 %v385, %v1025
  %v1666 = vadd.f32 %v386, %v1026
  %v1667 = vadd.f32 %v387, %v1027
  %v1668 = vadd.f32 %v388, %v1028
  %v1669 = vadd.f32 %v389, %v1029
  %v1670 = vadd.f32 %v390, %v1030
  %v1671 = vadd.f32 %v391, %v1031
  %v1672 = vadd.f32 %v392, %v1032
  %v1673 = vadd.f32 %v393, %v1033
  %v1674 = vadd.f32 %v394, %v1034
  %v1675 = vadd.f32 %v395, %v1035
  %v1676 = vadd.f32 %v396, %v1036
  %v1677 = vadd.f32 %v397, %v1037
  %v1678 = vadd.f32 %v398, %v1038
  %v1679 = vadd.f32 %v399, %v1039
  %v1680 = vadd.f32 %v400, %v1040
  %v1681 = vadd.f32 %v401, %v1041
  %v1682 = vadd.f32 %v402, %v1042
  %v1683 = vadd.f32 %v403, %v1043
  %v1684 = vadd.f32 %v404, %v1044
  %v1685 = vadd.f32 %v405, %v1045
  %v1686 = vadd.f32 %v406, %v1046
  %v1687 = vadd.f32 %v407, %v1047
  %v1688 = vadd.f32 %v408, %v1048
  %v1689 = vadd.f32 %v409, %v1049
  %v1690 = vadd.f32 %v410, %v1050
  %v1691 = vadd.f32 %v411, %v1051
  %v1692 = vadd.f32 %v412, %v1052
  %v1693 = vadd.f32 %v413, %v1053
  %v1694 = vadd.f32 %v414, %v1054
  %v1695 = vadd.f32 %v415, %v1055
  %v1696 = vadd.f32 %v416, %v1056
  %v1697 = vadd.f32 %v417, %v1057
  %v1698 = vadd.f32 %v418, %v1058
  %v1699 = vadd.f32 %v419, %v1059
  %v1700 = vadd.f32 %v420, %v1060
  %v1701 = vadd.f32 %v421, %v1061
  %v1702 = vadd.f32 %v422, %v1062
  %v1703 = vadd.f32 %v423, %v1063
  %v1704 = vadd.f32 %v424, %v1064
  %v1705 = vadd.f32 %v425, %v1065
  %v1706 = vadd.f32 %v426, %v1066
  %v1707 = vadd.f32 %v427, %v1067
  %v1708 = vadd.f32 %v428, %v1068
  %v1709 = vadd.f32 %v429, %v1069
  %v1710 = vadd.f32 %v430, %v1070
  %v1711 = vadd.f32 %v431, %v1071
  %v1712 = vadd.f32 %v432, %v1072
  %v1713 = vadd.f32 %v433, %v1073
  %v1714 = vadd.f32 %v434, %v1074
  %v1715 = vadd.f32 %v435, %v1075
  %v1716 = vadd.f32 %v436, %v1076
  %v1717 = vadd.f32 %v437, %v1077
  %v1718 = vadd.f32 %v438, %v1078
  %v1719 = vadd.f32 %v439, %v1079
  %v1720 = vadd.f32 %v440, %v1080
  %v1721 = vadd.f32 %v441, %v1081
  %v1722 = vadd.f32 %v442, %v1082
  %v1723 = vadd.f32 %v443, %v1083
  %v1724 = vadd.f32 %v444, %v1084
  %v1725 = vadd.f32 %v445, %v1085
  %v1726 = vadd.f32 %v446, %v1086
  %v1727 = vadd.f32 %v447, %v1087
  %v1728 = vadd.f32 %v448, %v1088
  %v1729 = vadd.f32 %v449, %v1089
  %v1730 = vadd.f32 %v450, %v1090
  %v1731 = vadd.f32 %v451, %v1091
  %v1732 = vadd.f32 %v452, %v1092
  %v1733 = vadd.f32 %v453, %v1093
  %v1734 = vadd.f32 %v454, %v1094
  %v1735 = vadd.f32 %v455, %v1095
  %v1736 = vadd.f32 %v456, %v1096
  %v1737 = vadd.f32 %v457, %v1097
  %v1738 = vadd.f32 %v458, %v1098
  %v1739 = vadd.f32 %v459, %v1099
  %v1740 = vadd.f32 %v460, %v1100
  %v1741 = vadd.f32 %v461, %v1101
  %v1742 = vadd.f32 %v462, %v1102
  %v1743 = vadd.f32 %v463, %v1103
  %v1744 = vadd.f32 %v464, %v1104
  %v1745 = vadd.f32 %v465, %v1105
  %v1746 = vadd.f32 %v466, %v1106
  %v1747 = vadd.f32 %v467, %v1107
  %v1748 = vadd.f32 %v468, %v1108
  %v1749 = vadd.f32 %v469, %v1109
  %v1750 = vadd.f32 %v470, %v1110
  %v1751 = vadd.f32 %v471, %v1111
  %v1752 = vadd.f32 %v472, %v1112
  %v1753 = vadd.f32 %v473, %v1113
  %v1754 = vadd.f32 %v474, %v1114
  %v1755 = vadd.f32 %v475, %v1115
  %v1756 = vadd.f32 %v476, %v1116
  %v1757 = vadd.f32 %v477, %v1117
  %v1758 = vadd.f32 %v478, %v1118
  %v1759 = vadd.f32 %v479, %v1119
  %v1760 = vadd.f32 %v480, %v1120
  %v1761 = vadd.f32 %v481, %v1121
  %v1762 = vadd.f32 %v482, %v1122
  %v1763 = vadd.f32 %v483, %v1123
  %v1764 = vadd.f32 %v484, %v1124
  %v1765 = vadd.f32 %v485, %v1125
  %v1766 = vadd.f32 %v486, %v1126
  %v1767 = vadd.f32 %v487, %v1127
  %v1768 = vadd.f32 %v488, %v1128
  %v1769 = vadd.f32 %v489, %v1129
  %v1770 = vadd.f32 %v490, %v1130
  %v1771 = vadd.f32 %v491, %v1131
  %v1772 = vadd.f32 %v492, %v1132
  %v1773 = vadd.f32 %v493, %v1133
  %v1774 = vadd.f32 %v494, %v1134
  %v1775 = vadd.f32 %v495, %v1135
  %v1776 = vadd.f32 %v496, %v1136
  %v1777 = vadd.f32 %v497, %v1137
  %v1778 = vadd.f32 %v498, %v1138
  %v1779 = vadd.f32 %v499, %v1139
  %v1780 = vadd.f32 %v500, %v1140
  %v1781 = vadd.f32 %v501, %v1141
  %v1782 = vadd.f32 %v502, %v1142
  %v1783 = vadd.f32 %v503, %v1143
  %v1784 = vadd.f32 %v504, %v1144
  %v1785 = vadd.f32 %v505, %v1145
  %v1786 = vadd.f32 %v506, %v1146
  %v1787 = vadd.f32 %v507, %v1147
  %v1788 = vadd.f32 %v508, %v1148
  %v1789 = vadd.f32 %v509, %v1149
  %v1790 = vadd.f32 %v510, %v1150
  %v1791 = vadd.f32 %v511, %v1151
  %v1792 = vadd.f32 %v512, %v1152
  %v1793 = vadd.f32 %v513, %v1153
  %v1794 = vadd.f32 %v514, %v1154
  %v1795 = vadd.f32 %v515, %v1155
  %v1796 = vadd.f32 %v516, %v1156
  %v1797 = vadd.f32 %v517, %v1157
  %v1798 = vadd.f32 %v518, %v1158
  %v1799 = vadd.f32 %v519, %v1159
  %v1800 = vadd.f32 %v520, %v1160
  %v1801 = vadd.f32 %v521, %v1161
  %v1802 = vadd.f32 %v522, %v1162
  %v1803 = vadd.f32 %v523, %v1163
  %v1804 = vadd.f32 %v524, %v1164
  %v1805 = vadd.f32 %v525, %v1165
  %v1806 = vadd.f32 %v526, %v1166
  %v1807 = vadd.f32 %v527, %v1167
  %v1808 = vadd.f32 %v528, %v1168
  %v1809 = vadd.f32 %v529, %v1169
  %v1810 = vadd.f32 %v530, %v1170
  %v1811 = vadd.f32 %v531, %v1171
  %v1812 = vadd.f32 %v532, %v1172
  %v1813 = vadd.f32 %v533, %v1173
  %v1814 = vadd.f32 %v534, %v1174
  %v1815 = vadd.f32 %v535, %v1175
  %v1816 = vadd.f32 %v536, %v1176
  %v1817 = vadd.f32 %v537, %v1177
  %v1818 = vadd.f32 %v538, %v1178
  %v1819 = vadd.f32 %v539, %v1179
  %v1820 = vadd.f32 %v540, %v1180
  %v1821 = vadd.f32 %v541, %v1181
  %v1822 = vadd.f32 %v542, %v1182
  %v1823 = vadd.f32 %v543, %v1183
  %v1824 = vadd.f32 %v544, %v1184
  %v1825 = vadd.f32 %v545, %v1185
  %v1826 = vadd.f32 %v546, %v1186
  %v1827 = vadd.f32 %v547, %v1187
  %v1828 = vadd.f32 %v548, %v1188
  %v1829 = vadd.f32 %v549, %v1189
  %v1830 = vadd.f32 %v550, %v1190
  %v1831 = vadd.f32 %v551, %v1191
  %v1832 = vadd.f32 %v552, %v1192
  %v1833 = vadd.f32 %v553, %v1193
  %v1834 = vadd.f32 %v554, %v1194
  %v1835 = vadd.f32 %v555, %v1195
  %v1836 = vadd.f32 %v556, %v1196
  %v1837 = vadd.f32 %v557, %v1197
  %v1838 = vadd.f32 %v558, %v1198
  %v1839 = vadd.f32 %v559, %v1199
  %v1840 = vadd.f32 %v560, %v1200
  %v1841 = vadd.f32 %v561, %v1201
  %v1842 = vadd.f32 %v562, %v1202
  %v1843 = vadd.f32 %v563, %v1203
  %v1844 = vadd.f32 %v564, %v1204
  %v1845 = vadd.f32 %v565, %v1205
  %v1846 = vadd.f32 %v566, %v1206
  %v1847 = vadd.f32 %v567, %v1207
  %v1848 = vadd.f32 %v568, %v1208
  %v1849 = vadd.f32 %v569, %v1209
  %v1850 = vadd.f32 %v570, %v1210
  %v1851 = vadd.f32 %v571, %v1211
  %v1852 = vadd.f32 %v572, %v1212
  %v1853 = vadd.f32 %v573, %v1213
  %v1854 = vadd.f32 %v574, %v1214
  %v1855 = vadd.f32 %v575, %v1215
  %v1856 = vadd.f32 %v576, %v1216
  %v1857 = vadd.f32 %v577, %v1217
  %v1858 = vadd.f32 %v578, %v1218
  %v1859 = vadd.f32 %v579, %v1219
  %v1860 = vadd.f32 %v580, %v1220
  %v1861 = vadd.f32 %v581, %v1221
  %v1862 = vadd.f32 %v582, %v1222
  %v1863 = vadd.f32 %v583, %v1223
  %v1864 = vadd.f32 %v584, %v1224
  %v1865 = vadd.f32 %v585, %v1225
  %v1866 = vadd.f32 %v586, %v1226
  %v1867 = vadd.f32 %v587, %v1227
  %v1868 = vadd.f32 %v588, %v1228
  %v1869 = vadd.f32 %v589, %v1229
  %v1870 = vadd.f32 %v590, %v1230
  %v1871 = vadd.f32 %v591, %v1231
  %v1872 = vadd.f32 %v592, %v1232
  %v1873 = vadd.f32 %v593, %v1233
  %v1874 = vadd.f32 %v594, %v1234
  %v1875 = vadd.f32 %v595, %v1235
  %v1876 = vadd.f32 %v596, %v1236
  %v1877 = vadd.f32 %v597, %v1237
  %v1878 = vadd.f32 %v598, %v1238
  %v1879 = vadd.f32 %v599, %v1239
  %v1880 = vadd.f32 %v600, %v1240
  %v1881 = vadd.f32 %v601, %v1241
  %v1882 = vadd.f32 %v602, %v1242
  %v1883 = vadd.f32 %v603, %v1243
  %v1884 = vadd.f32 %v604, %v1244
  %v1885 = vadd.f32 %v605, %v1245
  %v1886 = vadd.f32 %v606, %v1246
  %v1887 = vadd.f32 %v607, %v1247
  %v1888 = vadd.f32 %v608, %v1248
  %v1889 = vadd.f32 %v609, %v1249
  %v1890 = vadd.f32 %v610, %v1250
  %v1891 = vadd.f32 %v611, %v1251
  %v1892 = vadd.f32 %v612, %v1252
  %v1893 = vadd.f32 %v613, %v1253
  %v1894 = vadd.f32 %v614, %v1254
  %v1895 = vadd.f32 %v615, %v1255
  %v1896 = vadd.f32 %v616, %v1256
  %v1897 = vadd.f32 %v617, %v1257
  %v1898 = vadd.f32 %v618, %v1258
  %v1899 = vadd.f32 %v619, %v1259
  %v1900 = vadd.f32 %v620, %v1260
  %v1901 = vadd.f32 %v621, %v1261
  %v1902 = vadd.f32 %v622, %v1262
  %v1903 = vadd.f32 %v623, %v1263
  %v1904 = vadd.f32 %v624, %v1264
  %v1905 = vadd.f32 %v625, %v1265
  %v1906 = vadd.f32 %v626, %v1266
  %v1907 = vadd.f32 %v627, %v1267
  %v1908 = vadd.f32 %v628, %v1268
  %v1909 = vadd.f32 %v629, %v1269
  %v1910 = vadd.f32 %v630, %v1270
  %v1911 = vadd.f32 %v631, %v1271
  %v1912 = vadd.f32 %v632, %v1272
  %v1913 = vadd.f32 %v633, %v1273
  %v1914 = vadd.f32 %v634, %v1274
  %v1915 = vadd.f32 %v635, %v1275
  %v1916 = vadd.f32 %v636, %v1276
  %v1917 = vadd.f32 %v637, %v1277
  %v1918 = vadd.f32 %v638, %v1278
  %v1919 = vadd.f32 %v639, %v1279
  %v1920 = vadd.f32 %v640, %v1280
  %v1921 = vadd.f32 %v641, %v1281
  %v1922 = vadd.f32 %v642, %v1282
  %v1923 = vadd.f32 %v643, %v1283
  %v1924 = vadd.f32 %v644, %v1284
  %v1925 = vadd.f32 %v645, %v1285
  %v1926 = vadd.f32 %v646, %v1286
  %v1927 = vadd.f32 %v647, %v1287
  %v1928 = vadd.f32 %v648, %v1288
  %v1929 = vadd.f32 %v649, %v1289
  %v1930 = vadd.f32 %v650, %v1290
  %vm1931 = vcmask 55296
  %1932 = vst.msk [vmem:[%s2] sm:$0x7f] %vm1931, %v1291
  %1933 = vst.msk [vmem:[%s2 + $0x8] sm:$0x7f] %vm1931, %v1292
  %1934 = vst.msk [vmem:[%s2 + $0x10] sm:$0x7f] %vm1931, %v1293
  %1935 = vst.msk [vmem:[%s2 + $0x18] sm:$0x7f] %vm1931, %v1294
  %1936 = vst.msk [vmem:[%s2 + $0x20] sm:$0x7f] %vm1931, %v1295
  %1937 = vst.msk [vmem:[%s2 + $0x28] sm:$0x7f] %vm1931, %v1296
  %1938 = vst.msk [vmem:[%s2 + $0x30] sm:$0x7f] %vm1931, %v1297
  %1939 = vst.msk [vmem:[%s2 + $0x38] sm:$0x7f] %vm1931, %v1298
  %1940 = vst.msk [vmem:[%s2 + $0x40] sm:$0x7f] %vm1931, %v1299
  %1941 = vst.msk [vmem:[%s2 + $0x48] sm:$0x7f] %vm1931, %v1300
  %1942 = vst.msk [vmem:[%s2 + $0x50] sm:$0x7f] %vm1931, %v1301
  %1943 = vst.msk [vmem:[%s2 + $0x58] sm:$0x7f] %vm1931, %v1302
  %1944 = vst.msk [vmem:[%s2 + $0x60] sm:$0x7f] %vm1931, %v1303
  %1945 = vst.msk [vmem:[%s2 + $0x68] sm:$0x7f] %vm1931, %v1304
  %1946 = vst.msk [vmem:[%s2 + $0x70] sm:$0x7f] %vm1931, %v1305
  %1947 = vst.msk [vmem:[%s2 + $0x78] sm:$0x7f] %vm1931, %v1306
  %1948 = vst.msk [vmem:[%s2 + $0x80] sm:$0x7f] %vm1931, %v1307
  %1949 = vst.msk [vmem:[%s2 + $0x88] sm:$0x7f] %vm1931, %v1308
  %1950 = vst.msk [vmem:[%s2 + $0x90] sm:$0x7f] %vm1931, %v1309
  %1951 = vst.msk [vmem:[%s2 + $0x98] sm:$0x7f] %vm1931, %v1310
  %1952 = vst.msk [vmem:[%s2 + $0xa0] sm:$0x7f] %vm1931, %v1311
  %1953 = vst.msk [vmem:[%s2 + $0xa8] sm:$0x7f] %vm1931, %v1312
  %1954 = vst.msk [vmem:[%s2 + $0xb0] sm:$0x7f] %vm1931, %v1313
  %1955 = vst.msk [vmem:[%s2 + $0xb8] sm:$0x7f] %vm1931, %v1314
  %1956 = vst.msk [vmem:[%s2 + $0xc0] sm:$0x7f] %vm1931, %v1315
  %1957 = vst.msk [vmem:[%s2 + $0xc8] sm:$0x7f] %vm1931, %v1316
  %1958 = vst.msk [vmem:[%s2 + $0xd0] sm:$0x7f] %vm1931, %v1317
  %1959 = vst.msk [vmem:[%s2 + $0xd8] sm:$0x7f] %vm1931, %v1318
  %1960 = vst.msk [vmem:[%s2 + $0xe0] sm:$0x7f] %vm1931, %v1319
  %1961 = vst.msk [vmem:[%s2 + $0xe8] sm:$0x7f] %vm1931, %v1320
  %1962 = vst.msk [vmem:[%s2 + $0xf0] sm:$0x7f] %vm1931, %v1321
  %1963 = vst.msk [vmem:[%s2 + $0xf8] sm:$0x7f] %vm1931, %v1322
  %1964 = vst.msk [vmem:[%s2 + $0x100] sm:$0x7f] %vm1931, %v1323
  %1965 = vst.msk [vmem:[%s2 + $0x108] sm:$0x7f] %vm1931, %v1324
  %1966 = vst.msk [vmem:[%s2 + $0x110] sm:$0x7f] %vm1931, %v1325
  %1967 = vst.msk [vmem:[%s2 + $0x118] sm:$0x7f] %vm1931, %v1326
  %1968 = vst.msk [vmem:[%s2 + $0x120] sm:$0x7f] %vm1931, %v1327
  %1969 = vst.msk [vmem:[%s2 + $0x128] sm:$0x7f] %vm1931, %v1328
  %1970 = vst.msk [vmem:[%s2 + $0x130] sm:$0x7f] %vm1931, %v1329
  %1971 = vst.msk [vmem:[%s2 + $0x138] sm:$0x7f] %vm1931, %v1330
  %1972 = vst.msk [vmem:[%s2 + $0x140] sm:$0x7f] %vm1931, %v1331
  %1973 = vst.msk [vmem:[%s2 + $0x148] sm:$0x7f] %vm1931, %v1332
  %1974 = vst.msk [vmem:[%s2 + $0x150] sm:$0x7f] %vm1931, %v1333
  %1975 = vst.msk [vmem:[%s2 + $0x158] sm:$0x7f] %vm1931, %v1334
  %1976 = vst.msk [vmem:[%s2 + $0x160] sm:$0x7f] %vm1931, %v1335
  %1977 = vst.msk [vmem:[%s2 + $0x168] sm:$0x7f] %vm1931, %v1336
  %1978 = vst.msk [vmem:[%s2 + $0x170] sm:$0x7f] %vm1931, %v1337
  %1979 = vst.msk [vmem:[%s2 + $0x178] sm:$0x7f] %vm1931, %v1338
  %1980 = vst.msk [vmem:[%s2 + $0x180] sm:$0x7f] %vm1931, %v1339
  %1981 = vst.msk [vmem:[%s2 + $0x188] sm:$0x7f] %vm1931, %v1340
  %1982 = vst.msk [vmem:[%s2 + $0x190] sm:$0x7f] %vm1931, %v1341
  %1983 = vst.msk [vmem:[%s2 + $0x198] sm:$0x7f] %vm1931, %v1342
  %1984 = vst.msk [vmem:[%s2 + $0x1a0] sm:$0x7f] %vm1931, %v1343
  %1985 = vst.msk [vmem:[%s2 + $0x1a8] sm:$0x7f] %vm1931, %v1344
  %1986 = vst.msk [vmem:[%s2 + $0x1b0] sm:$0x7f] %vm1931, %v1345
  %1987 = vst.msk [vmem:[%s2 + $0x1b8] sm:$0x7f] %vm1931, %v1346
  %1988 = vst.msk [vmem:[%s2 + $0x1c0] sm:$0x7f] %vm1931, %v1347
  %1989 = vst.msk [vmem:[%s2 + $0x1c8] sm:$0x7f] %vm1931, %v1348
  %1990 = vst.msk [vmem:[%s2 + $0x1d0] sm:$0x7f] %vm1931, %v1349
  %1991 = vst.msk [vmem:[%s2 + $0x1d8] sm:$0x7f] %vm1931, %v1350
  %1992 = vst.msk [vmem:[%s2 + $0x1e0] sm:$0x7f] %vm1931, %v1351
  %1993 = vst.msk [vmem:[%s2 + $0x1e8] sm:$0x7f] %vm1931, %v1352
  %1994 = vst.msk [vmem:[%s2 + $0x1f0] sm:$0x7f] %vm1931, %v1353
  %1995 = vst.msk [vmem:[%s2 + $0x1f8] sm:$0x7f] %vm1931, %v1354
  %1996 = vst.msk [vmem:[%s2 + $0x200] sm:$0x7f] %vm1931, %v1355
  %1997 = vst.msk [vmem:[%s2 + $0x208] sm:$0x7f] %vm1931, %v1356
  %1998 = vst.msk [vmem:[%s2 + $0x210] sm:$0x7f] %vm1931, %v1357
  %1999 = vst.msk [vmem:[%s2 + $0x218] sm:$0x7f] %vm1931, %v1358
  %2000 = vst.msk [vmem:[%s2 + $0x220] sm:$0x7f] %vm1931, %v1359
  %2001 = vst.msk [vmem:[%s2 + $0x228] sm:$0x7f] %vm1931, %v1360
  %2002 = vst.msk [vmem:[%s2 + $0x230] sm:$0x7f] %vm1931, %v1361
  %2003 = vst.msk [vmem:[%s2 + $0x238] sm:$0x7f] %vm1931, %v1362
  %2004 = vst.msk [vmem:[%s2 + $0x240] sm:$0x7f] %vm1931, %v1363
  %2005 = vst.msk [vmem:[%s2 + $0x248] sm:$0x7f] %vm1931, %v1364
  %2006 = vst.msk [vmem:[%s2 + $0x250] sm:$0x7f] %vm1931, %v1365
  %2007 = vst.msk [vmem:[%s2 + $0x258] sm:$0x7f] %vm1931, %v1366
  %2008 = vst.msk [vmem:[%s2 + $0x260] sm:$0x7f] %vm1931, %v1367
  %2009 = vst.msk [vmem:[%s2 + $0x268] sm:$0x7f] %vm1931, %v1368
  %2010 = vst.msk [vmem:[%s2 + $0x270] sm:$0x7f] %vm1931, %v1369
  %2011 = vst.msk [vmem:[%s2 + $0x278] sm:$0x7f] %vm1931, %v1370
  %2012 = vst.msk [vmem:[%s2 + $0x280] sm:$0x7f] %vm1931, %v1371
  %2013 = vst.msk [vmem:[%s2 + $0x288] sm:$0x7f] %vm1931, %v1372
  %2014 = vst.msk [vmem:[%s2 + $0x290] sm:$0x7f] %vm1931, %v1373
  %2015 = vst.msk [vmem:[%s2 + $0x298] sm:$0x7f] %vm1931, %v1374
  %2016 = vst.msk [vmem:[%s2 + $0x2a0] sm:$0x7f] %vm1931, %v1375
  %2017 = vst.msk [vmem:[%s2 + $0x2a8] sm:$0x7f] %vm1931, %v1376
  %2018 = vst.msk [vmem:[%s2 + $0x2b0] sm:$0x7f] %vm1931, %v1377
  %2019 = vst.msk [vmem:[%s2 + $0x2b8] sm:$0x7f] %vm1931, %v1378
  %2020 = vst.msk [vmem:[%s2 + $0x2c0] sm:$0x7f] %vm1931, %v1379
  %2021 = vst.msk [vmem:[%s2 + $0x2c8] sm:$0x7f] %vm1931, %v1380
  %2022 = vst.msk [vmem:[%s2 + $0x2d0] sm:$0x7f] %vm1931, %v1381
  %2023 = vst.msk [vmem:[%s2 + $0x2d8] sm:$0x7f] %vm1931, %v1382
  %2024 = vst.msk [vmem:[%s2 + $0x2e0] sm:$0x7f] %vm1931, %v1383
  %2025 = vst.msk [vmem:[%s2 + $0x2e8] sm:$0x7f] %vm1931, %v1384
  %2026 = vst.msk [vmem:[%s2 + $0x2f0] sm:$0x7f] %vm1931, %v1385
  %2027 = vst.msk [vmem:[%s2 + $0x2f8] sm:$0x7f] %vm1931, %v1386
  %2028 = vst.msk [vmem:[%s2 + $0x300] sm:$0x7f] %vm1931, %v1387
  %2029 = vst.msk [vmem:[%s2 + $0x308] sm:$0x7f] %vm1931, %v1388
  %2030 = vst.msk [vmem:[%s2 + $0x310] sm:$0x7f] %vm1931, %v1389
  %2031 = vst.msk [vmem:[%s2 + $0x318] sm:$0x7f] %vm1931, %v1390
  %2032 = vst.msk [vmem:[%s2 + $0x320] sm:$0x7f] %vm1931, %v1391
  %2033 = vst.msk [vmem:[%s2 + $0x328] sm:$0x7f] %vm1931, %v1392
  %2034 = vst.msk [vmem:[%s2 + $0x330] sm:$0x7f] %vm1931, %v1393
  %2035 = vst.msk [vmem:[%s2 + $0x338] sm:$0x7f] %vm1931, %v1394
  %2036 = vst.msk [vmem:[%s2 + $0x340] sm:$0x7f] %vm1931, %v1395
  %2037 = vst.msk [vmem:[%s2 + $0x348] sm:$0x7f] %vm1931, %v1396
  %2038 = vst.msk [vmem:[%s2 + $0x350] sm:$0x7f] %vm1931, %v1397
  %2039 = vst.msk [vmem:[%s2 + $0x358] sm:$0x7f] %vm1931, %v1398
  %2040 = vst.msk [vmem:[%s2 + $0x360] sm:$0x7f] %vm1931, %v1399
  %2041 = vst.msk [vmem:[%s2 + $0x368] sm:$0x7f] %vm1931, %v1400
  %2042 = vst.msk [vmem:[%s2 + $0x370] sm:$0x7f] %vm1931, %v1401
  %2043 = vst.msk [vmem:[%s2 + $0x378] sm:$0x7f] %vm1931, %v1402
  %2044 = vst.msk [vmem:[%s2 + $0x380] sm:$0x7f] %vm1931, %v1403
  %2045 = vst.msk [vmem:[%s2 + $0x388] sm:$0x7f] %vm1931, %v1404
  %2046 = vst.msk [vmem:[%s2 + $0x390] sm:$0x7f] %vm1931, %v1405
  %2047 = vst.msk [vmem:[%s2 + $0x398] sm:$0x7f] %vm1931, %v1406
  %2048 = vst.msk [vmem:[%s2 + $0x3a0] sm:$0x7f] %vm1931, %v1407
  %2049 = vst.msk [vmem:[%s2 + $0x3a8] sm:$0x7f] %vm1931, %v1408
  %2050 = vst.msk [vmem:[%s2 + $0x3b0] sm:$0x7f] %vm1931, %v1409
  %2051 = vst.msk [vmem:[%s2 + $0x3b8] sm:$0x7f] %vm1931, %v1410
  %2052 = vst.msk [vmem:[%s2 + $0x3c0] sm:$0x7f] %vm1931, %v1411
  %2053 = vst.msk [vmem:[%s2 + $0x3c8] sm:$0x7f] %vm1931, %v1412
  %2054 = vst.msk [vmem:[%s2 + $0x3d0] sm:$0x7f] %vm1931, %v1413
  %2055 = vst.msk [vmem:[%s2 + $0x3d8] sm:$0x7f] %vm1931, %v1414
  %2056 = vst.msk [vmem:[%s2 + $0x3e0] sm:$0x7f] %vm1931, %v1415
  %2057 = vst.msk [vmem:[%s2 + $0x3e8] sm:$0x7f] %vm1931, %v1416
  %2058 = vst.msk [vmem:[%s2 + $0x3f0] sm:$0x7f] %vm1931, %v1417
  %2059 = vst.msk [vmem:[%s2 + $0x3f8] sm:$0x7f] %vm1931, %v1418
  %2060 = vst.msk [vmem:[%s2 + $0x400] sm:$0x7f] %vm1931, %v1419
  %2061 = vst.msk [vmem:[%s2 + $0x408] sm:$0x7f] %vm1931, %v1420
  %2062 = vst.msk [vmem:[%s2 + $0x410] sm:$0x7f] %vm1931, %v1421
  %2063 = vst.msk [vmem:[%s2 + $0x418] sm:$0x7f] %vm1931, %v1422
  %2064 = vst.msk [vmem:[%s2 + $0x420] sm:$0x7f] %vm1931, %v1423
  %2065 = vst.msk [vmem:[%s2 + $0x428] sm:$0x7f] %vm1931, %v1424
  %2066 = vst.msk [vmem:[%s2 + $0x430] sm:$0x7f] %vm1931, %v1425
  %2067 = vst.msk [vmem:[%s2 + $0x438] sm:$0x7f] %vm1931, %v1426
  %2068 = vst.msk [vmem:[%s2 + $0x440] sm:$0x7f] %vm1931, %v1427
  %2069 = vst.msk [vmem:[%s2 + $0x448] sm:$0x7f] %vm1931, %v1428
  %2070 = vst.msk [vmem:[%s2 + $0x450] sm:$0x7f] %vm1931, %v1429
  %2071 = vst.msk [vmem:[%s2 + $0x458] sm:$0x7f] %vm1931, %v1430
  %2072 = vst.msk [vmem:[%s2 + $0x460] sm:$0x7f] %vm1931, %v1431
  %2073 = vst.msk [vmem:[%s2 + $0x468] sm:$0x7f] %vm1931, %v1432
  %2074 = vst.msk [vmem:[%s2 + $0x470] sm:$0x7f] %vm1931, %v1433
  %2075 = vst.msk [vmem:[%s2 + $0x478] sm:$0x7f] %vm1931, %v1434
  %2076 = vst.msk [vmem:[%s2 + $0x480] sm:$0x7f] %vm1931, %v1435
  %2077 = vst.msk [vmem:[%s2 + $0x488] sm:$0x7f] %vm1931, %v1436
  %2078 = vst.msk [vmem:[%s2 + $0x490] sm:$0x7f] %vm1931, %v1437
  %2079 = vst.msk [vmem:[%s2 + $0x498] sm:$0x7f] %vm1931, %v1438
  %2080 = vst.msk [vmem:[%s2 + $0x4a0] sm:$0x7f] %vm1931, %v1439
  %2081 = vst.msk [vmem:[%s2 + $0x4a8] sm:$0x7f] %vm1931, %v1440
  %2082 = vst.msk [vmem:[%s2 + $0x4b0] sm:$0x7f] %vm1931, %v1441
  %2083 = vst.msk [vmem:[%s2 + $0x4b8] sm:$0x7f] %vm1931, %v1442
  %2084 = vst.msk [vmem:[%s2 + $0x4c0] sm:$0x7f] %vm1931, %v1443
  %2085 = vst.msk [vmem:[%s2 + $0x4c8] sm:$0x7f] %vm1931, %v1444
  %2086 = vst.msk [vmem:[%s2 + $0x4d0] sm:$0x7f] %vm1931, %v1445
  %2087 = vst.msk [vmem:[%s2 + $0x4d8] sm:$0x7f] %vm1931, %v1446
  %2088 = vst.msk [vmem:[%s2 + $0x4e0] sm:$0x7f] %vm1931, %v1447
  %2089 = vst.msk [vmem:[%s2 + $0x4e8] sm:$0x7f] %vm1931, %v1448
  %2090 = vst.msk [vmem:[%s2 + $0x4f0] sm:$0x7f] %vm1931, %v1449
  %2091 = vst.msk [vmem:[%s2 + $0x4f8] sm:$0x7f] %vm1931, %v1450
  %2092 = vst.msk [vmem:[%s2 + $0x500] sm:$0x7f] %vm1931, %v1451
  %2093 = vst.msk [vmem:[%s2 + $0x508] sm:$0x7f] %vm1931, %v1452
  %2094 = vst.msk [vmem:[%s2 + $0x510] sm:$0x7f] %vm1931, %v1453
  %2095 = vst.msk [vmem:[%s2 + $0x518] sm:$0x7f] %vm1931, %v1454
  %2096 = vst.msk [vmem:[%s2 + $0x520] sm:$0x7f] %vm1931, %v1455
  %2097 = vst.msk [vmem:[%s2 + $0x528] sm:$0x7f] %vm1931, %v1456
  %2098 = vst.msk [vmem:[%s2 + $0x530] sm:$0x7f] %vm1931, %v1457
  %2099 = vst.msk [vmem:[%s2 + $0x538] sm:$0x7f] %vm1931, %v1458
  %2100 = vst.msk [vmem:[%s2 + $0x540] sm:$0x7f] %vm1931, %v1459
  %2101 = vst.msk [vmem:[%s2 + $0x548] sm:$0x7f] %vm1931, %v1460
  %2102 = vst.msk [vmem:[%s2 + $0x550] sm:$0x7f] %vm1931, %v1461
  %2103 = vst.msk [vmem:[%s2 + $0x558] sm:$0x7f] %vm1931, %v1462
  %2104 = vst.msk [vmem:[%s2 + $0x560] sm:$0x7f] %vm1931, %v1463
  %2105 = vst.msk [vmem:[%s2 + $0x568] sm:$0x7f] %vm1931, %v1464
  %2106 = vst.msk [vmem:[%s2 + $0x570] sm:$0x7f] %vm1931, %v1465
  %2107 = vst.msk [vmem:[%s2 + $0x578] sm:$0x7f] %vm1931, %v1466
  %2108 = vst.msk [vmem:[%s2 + $0x580] sm:$0x7f] %vm1931, %v1467
  %2109 = vst.msk [vmem:[%s2 + $0x588] sm:$0x7f] %vm1931, %v1468
  %2110 = vst.msk [vmem:[%s2 + $0x590] sm:$0x7f] %vm1931, %v1469
  %2111 = vst.msk [vmem:[%s2 + $0x598] sm:$0x7f] %vm1931, %v1470
  %2112 = vst.msk [vmem:[%s2 + $0x5a0] sm:$0x7f] %vm1931, %v1471
  %2113 = vst.msk [vmem:[%s2 + $0x5a8] sm:$0x7f] %vm1931, %v1472
  %2114 = vst.msk [vmem:[%s2 + $0x5b0] sm:$0x7f] %vm1931, %v1473
  %2115 = vst.msk [vmem:[%s2 + $0x5b8] sm:$0x7f] %vm1931, %v1474
  %2116 = vst.msk [vmem:[%s2 + $0x5c0] sm:$0x7f] %vm1931, %v1475
  %2117 = vst.msk [vmem:[%s2 + $0x5c8] sm:$0x7f] %vm1931, %v1476
  %2118 = vst.msk [vmem:[%s2 + $0x5d0] sm:$0x7f] %vm1931, %v1477
  %2119 = vst.msk [vmem:[%s2 + $0x5d8] sm:$0x7f] %vm1931, %v1478
  %2120 = vst.msk [vmem:[%s2 + $0x5e0] sm:$0x7f] %vm1931, %v1479
  %2121 = vst.msk [vmem:[%s2 + $0x5e8] sm:$0x7f] %vm1931, %v1480
  %2122 = vst.msk [vmem:[%s2 + $0x5f0] sm:$0x7f] %vm1931, %v1481
  %2123 = vst.msk [vmem:[%s2 + $0x5f8] sm:$0x7f] %vm1931, %v1482
  %2124 = vst.msk [vmem:[%s2 + $0x600] sm:$0x7f] %vm1931, %v1483
  %2125 = vst.msk [vmem:[%s2 + $0x608] sm:$0x7f] %vm1931, %v1484
  %2126 = vst.msk [vmem:[%s2 + $0x610] sm:$0x7f] %vm1931, %v1485
  %2127 = vst.msk [vmem:[%s2 + $0x618] sm:$0x7f] %vm1931, %v1486
  %2128 = vst.msk [vmem:[%s2 + $0x620] sm:$0x7f] %vm1931, %v1487
  %2129 = vst.msk [vmem:[%s2 + $0x628] sm:$0x7f] %vm1931, %v1488
  %2130 = vst.msk [vmem:[%s2 + $0x630] sm:$0x7f] %vm1931, %v1489
  %2131 = vst.msk [vmem:[%s2 + $0x638] sm:$0x7f] %vm1931, %v1490
  %2132 = vst.msk [vmem:[%s2 + $0x640] sm:$0x7f] %vm1931, %v1491
  %2133 = vst.msk [vmem:[%s2 + $0x648] sm:$0x7f] %vm1931, %v1492
  %2134 = vst.msk [vmem:[%s2 + $0x650] sm:$0x7f] %vm1931, %v1493
  %2135 = vst.msk [vmem:[%s2 + $0x658] sm:$0x7f] %vm1931, %v1494
  %2136 = vst.msk [vmem:[%s2 + $0x660] sm:$0x7f] %vm1931, %v1495
  %2137 = vst.msk [vmem:[%s2 + $0x668] sm:$0x7f] %vm1931, %v1496
  %2138 = vst.msk [vmem:[%s2 + $0x670] sm:$0x7f] %vm1931, %v1497
  %2139 = vst.msk [vmem:[%s2 + $0x678] sm:$0x7f] %vm1931, %v1498
  %2140 = vst.msk [vmem:[%s2 + $0x680] sm:$0x7f] %vm1931, %v1499
  %2141 = vst.msk [vmem:[%s2 + $0x688] sm:$0x7f] %vm1931, %v1500
  %2142 = vst.msk [vmem:[%s2 + $0x690] sm:$0x7f] %vm1931, %v1501
  %2143 = vst.msk [vmem:[%s2 + $0x698] sm:$0x7f] %vm1931, %v1502
  %2144 = vst.msk [vmem:[%s2 + $0x6a0] sm:$0x7f] %vm1931, %v1503
  %2145 = vst.msk [vmem:[%s2 + $0x6a8] sm:$0x7f] %vm1931, %v1504
  %2146 = vst.msk [vmem:[%s2 + $0x6b0] sm:$0x7f] %vm1931, %v1505
  %2147 = vst.msk [vmem:[%s2 + $0x6b8] sm:$0x7f] %vm1931, %v1506
  %2148 = vst.msk [vmem:[%s2 + $0x6c0] sm:$0x7f] %vm1931, %v1507
  %2149 = vst.msk [vmem:[%s2 + $0x6c8] sm:$0x7f] %vm1931, %v1508
  %2150 = vst.msk [vmem:[%s2 + $0x6d0] sm:$0x7f] %vm1931, %v1509
  %2151 = vst.msk [vmem:[%s2 + $0x6d8] sm:$0x7f] %vm1931, %v1510
  %2152 = vst.msk [vmem:[%s2 + $0x6e0] sm:$0x7f] %vm1931, %v1511
  %2153 = vst.msk [vmem:[%s2 + $0x6e8] sm:$0x7f] %vm1931, %v1512
  %2154 = vst.msk [vmem:[%s2 + $0x6f0] sm:$0x7f] %vm1931, %v1513
  %2155 = vst.msk [vmem:[%s2 + $0x6f8] sm:$0x7f] %vm1931, %v1514
  %2156 = vst.msk [vmem:[%s2 + $0x700] sm:$0x7f] %vm1931, %v1515
  %2157 = vst.msk [vmem:[%s2 + $0x708] sm:$0x7f] %vm1931, %v1516
  %2158 = vst.msk [vmem:[%s2 + $0x710] sm:$0x7f] %vm1931, %v1517
  %2159 = vst.msk [vmem:[%s2 + $0x718] sm:$0x7f] %vm1931, %v1518
  %2160 = vst.msk [vmem:[%s2 + $0x720] sm:$0x7f] %vm1931, %v1519
  %2161 = vst.msk [vmem:[%s2 + $0x728] sm:$0x7f] %vm1931, %v1520
  %2162 = vst.msk [vmem:[%s2 + $0x730] sm:$0x7f] %vm1931, %v1521
  %2163 = vst.msk [vmem:[%s2 + $0x738] sm:$0x7f] %vm1931, %v1522
  %2164 = vst.msk [vmem:[%s2 + $0x740] sm:$0x7f] %vm1931, %v1523
  %2165 = vst.msk [vmem:[%s2 + $0x748] sm:$0x7f] %vm1931, %v1524
  %2166 = vst.msk [vmem:[%s2 + $0x750] sm:$0x7f] %vm1931, %v1525
  %2167 = vst.msk [vmem:[%s2 + $0x758] sm:$0x7f] %vm1931, %v1526
  %2168 = vst.msk [vmem:[%s2 + $0x760] sm:$0x7f] %vm1931, %v1527
  %2169 = vst.msk [vmem:[%s2 + $0x768] sm:$0x7f] %vm1931, %v1528
  %2170 = vst.msk [vmem:[%s2 + $0x770] sm:$0x7f] %vm1931, %v1529
  %2171 = vst.msk [vmem:[%s2 + $0x778] sm:$0x7f] %vm1931, %v1530
  %2172 = vst.msk [vmem:[%s2 + $0x780] sm:$0x7f] %vm1931, %v1531
  %2173 = vst.msk [vmem:[%s2 + $0x788] sm:$0x7f] %vm1931, %v1532
  %2174 = vst.msk [vmem:[%s2 + $0x790] sm:$0x7f] %vm1931, %v1533
  %2175 = vst.msk [vmem:[%s2 + $0x798] sm:$0x7f] %vm1931, %v1534
  %2176 = vst.msk [vmem:[%s2 + $0x7a0] sm:$0x7f] %vm1931, %v1535
  %2177 = vst.msk [vmem:[%s2 + $0x7a8] sm:$0x7f] %vm1931, %v1536
  %2178 = vst.msk [vmem:[%s2 + $0x7b0] sm:$0x7f] %vm1931, %v1537
  %2179 = vst.msk [vmem:[%s2 + $0x7b8] sm:$0x7f] %vm1931, %v1538
  %2180 = vst.msk [vmem:[%s2 + $0x7c0] sm:$0x7f] %vm1931, %v1539
  %2181 = vst.msk [vmem:[%s2 + $0x7c8] sm:$0x7f] %vm1931, %v1540
  %2182 = vst.msk [vmem:[%s2 + $0x7d0] sm:$0x7f] %vm1931, %v1541
  %2183 = vst.msk [vmem:[%s2 + $0x7d8] sm:$0x7f] %vm1931, %v1542
  %2184 = vst.msk [vmem:[%s2 + $0x7e0] sm:$0x7f] %vm1931, %v1543
  %2185 = vst.msk [vmem:[%s2 + $0x7e8] sm:$0x7f] %vm1931, %v1544
  %2186 = vst.msk [vmem:[%s2 + $0x7f0] sm:$0x7f] %vm1931, %v1545
  %2187 = vst.msk [vmem:[%s2 + $0x7f8] sm:$0x7f] %vm1931, %v1546
  %2188 = vst.msk [vmem:[%s2 + $0x800] sm:$0x7f] %vm1931, %v1547
  %2189 = vst.msk [vmem:[%s2 + $0x808] sm:$0x7f] %vm1931, %v1548
  %2190 = vst.msk [vmem:[%s2 + $0x810] sm:$0x7f] %vm1931, %v1549
  %2191 = vst.msk [vmem:[%s2 + $0x818] sm:$0x7f] %vm1931, %v1550
  %2192 = vst.msk [vmem:[%s2 + $0x820] sm:$0x7f] %vm1931, %v1551
  %2193 = vst.msk [vmem:[%s2 + $0x828] sm:$0x7f] %vm1931, %v1552
  %2194 = vst.msk [vmem:[%s2 + $0x830] sm:$0x7f] %vm1931, %v1553
  %2195 = vst.msk [vmem:[%s2 + $0x838] sm:$0x7f] %vm1931, %v1554
  %2196 = vst.msk [vmem:[%s2 + $0x840] sm:$0x7f] %vm1931, %v1555
  %2197 = vst.msk [vmem:[%s2 + $0x848] sm:$0x7f] %vm1931, %v1556
  %2198 = vst.msk [vmem:[%s2 + $0x850] sm:$0x7f] %vm1931, %v1557
  %2199 = vst.msk [vmem:[%s2 + $0x858] sm:$0x7f] %vm1931, %v1558
  %2200 = vst.msk [vmem:[%s2 + $0x860] sm:$0x7f] %vm1931, %v1559
  %2201 = vst.msk [vmem:[%s2 + $0x868] sm:$0x7f] %vm1931, %v1560
  %2202 = vst.msk [vmem:[%s2 + $0x870] sm:$0x7f] %vm1931, %v1561
  %2203 = vst.msk [vmem:[%s2 + $0x878] sm:$0x7f] %vm1931, %v1562
  %2204 = vst.msk [vmem:[%s2 + $0x880] sm:$0x7f] %vm1931, %v1563
  %2205 = vst.msk [vmem:[%s2 + $0x888] sm:$0x7f] %vm1931, %v1564
  %2206 = vst.msk [vmem:[%s2 + $0x890] sm:$0x7f] %vm1931, %v1565
  %2207 = vst.msk [vmem:[%s2 + $0x898] sm:$0x7f] %vm1931, %v1566
  %2208 = vst.msk [vmem:[%s2 + $0x8a0] sm:$0x7f] %vm1931, %v1567
  %2209 = vst.msk [vmem:[%s2 + $0x8a8] sm:$0x7f] %vm1931, %v1568
  %2210 = vst.msk [vmem:[%s2 + $0x8b0] sm:$0x7f] %vm1931, %v1569
  %2211 = vst.msk [vmem:[%s2 + $0x8b8] sm:$0x7f] %vm1931, %v1570
  %2212 = vst.msk [vmem:[%s2 + $0x8c0] sm:$0x7f] %vm1931, %v1571
  %2213 = vst.msk [vmem:[%s2 + $0x8c8] sm:$0x7f] %vm1931, %v1572
  %2214 = vst.msk [vmem:[%s2 + $0x8d0] sm:$0x7f] %vm1931, %v1573
  %2215 = vst.msk [vmem:[%s2 + $0x8d8] sm:$0x7f] %vm1931, %v1574
  %2216 = vst.msk [vmem:[%s2 + $0x8e0] sm:$0x7f] %vm1931, %v1575
  %2217 = vst.msk [vmem:[%s2 + $0x8e8] sm:$0x7f] %vm1931, %v1576
  %2218 = vst.msk [vmem:[%s2 + $0x8f0] sm:$0x7f] %vm1931, %v1577
  %2219 = vst.msk [vmem:[%s2 + $0x8f8] sm:$0x7f] %vm1931, %v1578
  %2220 = vst.msk [vmem:[%s2 + $0x900] sm:$0x7f] %vm1931, %v1579
  %2221 = vst.msk [vmem:[%s2 + $0x908] sm:$0x7f] %vm1931, %v1580
  %2222 = vst.msk [vmem:[%s2 + $0x910] sm:$0x7f] %vm1931, %v1581
  %2223 = vst.msk [vmem:[%s2 + $0x918] sm:$0x7f] %vm1931, %v1582
  %2224 = vst.msk [vmem:[%s2 + $0x920] sm:$0x7f] %vm1931, %v1583
  %2225 = vst.msk [vmem:[%s2 + $0x928] sm:$0x7f] %vm1931, %v1584
  %2226 = vst.msk [vmem:[%s2 + $0x930] sm:$0x7f] %vm1931, %v1585
  %2227 = vst.msk [vmem:[%s2 + $0x938] sm:$0x7f] %vm1931, %v1586
  %2228 = vst.msk [vmem:[%s2 + $0x940] sm:$0x7f] %vm1931, %v1587
  %2229 = vst.msk [vmem:[%s2 + $0x948] sm:$0x7f] %vm1931, %v1588
  %2230 = vst.msk [vmem:[%s2 + $0x950] sm:$0x7f] %vm1931, %v1589
  %2231 = vst.msk [vmem:[%s2 + $0x958] sm:$0x7f] %vm1931, %v1590
  %2232 = vst.msk [vmem:[%s2 + $0x960] sm:$0x7f] %vm1931, %v1591
  %2233 = vst.msk [vmem:[%s2 + $0x968] sm:$0x7f] %vm1931, %v1592
  %2234 = vst.msk [vmem:[%s2 + $0x970] sm:$0x7f] %vm1931, %v1593
  %2235 = vst.msk [vmem:[%s2 + $0x978] sm:$0x7f] %vm1931, %v1594
  %2236 = vst.msk [vmem:[%s2 + $0x980] sm:$0x7f] %vm1931, %v1595
  %2237 = vst.msk [vmem:[%s2 + $0x988] sm:$0x7f] %vm1931, %v1596
  %2238 = vst.msk [vmem:[%s2 + $0x990] sm:$0x7f] %vm1931, %v1597
  %2239 = vst.msk [vmem:[%s2 + $0x998] sm:$0x7f] %vm1931, %v1598
  %2240 = vst.msk [vmem:[%s2 + $0x9a0] sm:$0x7f] %vm1931, %v1599
  %2241 = vst.msk [vmem:[%s2 + $0x9a8] sm:$0x7f] %vm1931, %v1600
  %2242 = vst.msk [vmem:[%s2 + $0x9b0] sm:$0x7f] %vm1931, %v1601
  %2243 = vst.msk [vmem:[%s2 + $0x9b8] sm:$0x7f] %vm1931, %v1602
  %2244 = vst.msk [vmem:[%s2 + $0x9c0] sm:$0x7f] %vm1931, %v1603
  %2245 = vst.msk [vmem:[%s2 + $0x9c8] sm:$0x7f] %vm1931, %v1604
  %2246 = vst.msk [vmem:[%s2 + $0x9d0] sm:$0x7f] %vm1931, %v1605
  %2247 = vst.msk [vmem:[%s2 + $0x9d8] sm:$0x7f] %vm1931, %v1606
  %2248 = vst.msk [vmem:[%s2 + $0x9e0] sm:$0x7f] %vm1931, %v1607
  %2249 = vst.msk [vmem:[%s2 + $0x9e8] sm:$0x7f] %vm1931, %v1608
  %2250 = vst.msk [vmem:[%s2 + $0x9f0] sm:$0x7f] %vm1931, %v1609
  %2251 = vst.msk [vmem:[%s2 + $0x9f8] sm:$0x7f] %vm1931, %v1610
  %2252 = vst.msk [vmem:[%s2 + $0xa00] sm:$0x7f] %vm1931, %v1611
  %2253 = vst.msk [vmem:[%s2 + $0xa08] sm:$0x7f] %vm1931, %v1612
  %2254 = vst.msk [vmem:[%s2 + $0xa10] sm:$0x7f] %vm1931, %v1613
  %2255 = vst.msk [vmem:[%s2 + $0xa18] sm:$0x7f] %vm1931, %v1614
  %2256 = vst.msk [vmem:[%s2 + $0xa20] sm:$0x7f] %vm1931, %v1615
  %2257 = vst.msk [vmem:[%s2 + $0xa28] sm:$0x7f] %vm1931, %v1616
  %2258 = vst.msk [vmem:[%s2 + $0xa30] sm:$0x7f] %vm1931, %v1617
  %2259 = vst.msk [vmem:[%s2 + $0xa38] sm:$0x7f] %vm1931, %v1618
  %2260 = vst.msk [vmem:[%s2 + $0xa40] sm:$0x7f] %vm1931, %v1619
  %2261 = vst.msk [vmem:[%s2 + $0xa48] sm:$0x7f] %vm1931, %v1620
  %2262 = vst.msk [vmem:[%s2 + $0xa50] sm:$0x7f] %vm1931, %v1621
  %2263 = vst.msk [vmem:[%s2 + $0xa58] sm:$0x7f] %vm1931, %v1622
  %2264 = vst.msk [vmem:[%s2 + $0xa60] sm:$0x7f] %vm1931, %v1623
  %2265 = vst.msk [vmem:[%s2 + $0xa68] sm:$0x7f] %vm1931, %v1624
  %2266 = vst.msk [vmem:[%s2 + $0xa70] sm:$0x7f] %vm1931, %v1625
  %2267 = vst.msk [vmem:[%s2 + $0xa78] sm:$0x7f] %vm1931, %v1626
  %2268 = vst.msk [vmem:[%s2 + $0xa80] sm:$0x7f] %vm1931, %v1627
  %2269 = vst.msk [vmem:[%s2 + $0xa88] sm:$0x7f] %vm1931, %v1628
  %2270 = vst.msk [vmem:[%s2 + $0xa90] sm:$0x7f] %vm1931, %v1629
  %2271 = vst.msk [vmem:[%s2 + $0xa98] sm:$0x7f] %vm1931, %v1630
  %2272 = vst.msk [vmem:[%s2 + $0xaa0] sm:$0x7f] %vm1931, %v1631
  %2273 = vst.msk [vmem:[%s2 + $0xaa8] sm:$0x7f] %vm1931, %v1632
  %2274 = vst.msk [vmem:[%s2 + $0xab0] sm:$0x7f] %vm1931, %v1633
  %2275 = vst.msk [vmem:[%s2 + $0xab8] sm:$0x7f] %vm1931, %v1634
  %2276 = vst.msk [vmem:[%s2 + $0xac0] sm:$0x7f] %vm1931, %v1635
  %2277 = vst.msk [vmem:[%s2 + $0xac8] sm:$0x7f] %vm1931, %v1636
  %2278 = vst.msk [vmem:[%s2 + $0xad0] sm:$0x7f] %vm1931, %v1637
  %2279 = vst.msk [vmem:[%s2 + $0xad8] sm:$0x7f] %vm1931, %v1638
  %2280 = vst.msk [vmem:[%s2 + $0xae0] sm:$0x7f] %vm1931, %v1639
  %2281 = vst.msk [vmem:[%s2 + $0xae8] sm:$0x7f] %vm1931, %v1640
  %2282 = vst.msk [vmem:[%s2 + $0xaf0] sm:$0x7f] %vm1931, %v1641
  %2283 = vst.msk [vmem:[%s2 + $0xaf8] sm:$0x7f] %vm1931, %v1642
  %2284 = vst.msk [vmem:[%s2 + $0xb00] sm:$0x7f] %vm1931, %v1643
  %2285 = vst.msk [vmem:[%s2 + $0xb08] sm:$0x7f] %vm1931, %v1644
  %2286 = vst.msk [vmem:[%s2 + $0xb10] sm:$0x7f] %vm1931, %v1645
  %2287 = vst.msk [vmem:[%s2 + $0xb18] sm:$0x7f] %vm1931, %v1646
  %2288 = vst.msk [vmem:[%s2 + $0xb20] sm:$0x7f] %vm1931, %v1647
  %2289 = vst.msk [vmem:[%s2 + $0xb28] sm:$0x7f] %vm1931, %v1648
  %2290 = vst.msk [vmem:[%s2 + $0xb30] sm:$0x7f] %vm1931, %v1649
  %2291 = vst.msk [vmem:[%s2 + $0xb38] sm:$0x7f] %vm1931, %v1650
  %2292 = vst.msk [vmem:[%s2 + $0xb40] sm:$0x7f] %vm1931, %v1651
  %2293 = vst.msk [vmem:[%s2 + $0xb48] sm:$0x7f] %vm1931, %v1652
  %2294 = vst.msk [vmem:[%s2 + $0xb50] sm:$0x7f] %vm1931, %v1653
  %2295 = vst.msk [vmem:[%s2 + $0xb58] sm:$0x7f] %vm1931, %v1654
  %2296 = vst.msk [vmem:[%s2 + $0xb60] sm:$0x7f] %vm1931, %v1655
  %2297 = vst.msk [vmem:[%s2 + $0xb68] sm:$0x7f] %vm1931, %v1656
  %2298 = vst.msk [vmem:[%s2 + $0xb70] sm:$0x7f] %vm1931, %v1657
  %2299 = vst.msk [vmem:[%s2 + $0xb78] sm:$0x7f] %vm1931, %v1658
  %2300 = vst.msk [vmem:[%s2 + $0xb80] sm:$0x7f] %vm1931, %v1659
  %2301 = vst.msk [vmem:[%s2 + $0xb88] sm:$0x7f] %vm1931, %v1660
  %2302 = vst.msk [vmem:[%s2 + $0xb90] sm:$0x7f] %vm1931, %v1661
  %2303 = vst.msk [vmem:[%s2 + $0xb98] sm:$0x7f] %vm1931, %v1662
  %2304 = vst.msk [vmem:[%s2 + $0xba0] sm:$0x7f] %vm1931, %v1663
  %2305 = vst.msk [vmem:[%s2 + $0xba8] sm:$0x7f] %vm1931, %v1664
  %2306 = vst.msk [vmem:[%s2 + $0xbb0] sm:$0x7f] %vm1931, %v1665
  %2307 = vst.msk [vmem:[%s2 + $0xbb8] sm:$0x7f] %vm1931, %v1666
  %2308 = vst.msk [vmem:[%s2 + $0xbc0] sm:$0x7f] %vm1931, %v1667
  %2309 = vst.msk [vmem:[%s2 + $0xbc8] sm:$0x7f] %vm1931, %v1668
  %2310 = vst.msk [vmem:[%s2 + $0xbd0] sm:$0x7f] %vm1931, %v1669
  %2311 = vst.msk [vmem:[%s2 + $0xbd8] sm:$0x7f] %vm1931, %v1670
  %2312 = vst.msk [vmem:[%s2 + $0xbe0] sm:$0x7f] %vm1931, %v1671
  %2313 = vst.msk [vmem:[%s2 + $0xbe8] sm:$0x7f] %vm1931, %v1672
  %2314 = vst.msk [vmem:[%s2 + $0xbf0] sm:$0x7f] %vm1931, %v1673
  %2315 = vst.msk [vmem:[%s2 + $0xbf8] sm:$0x7f] %vm1931, %v1674
  %2316 = vst.msk [vmem:[%s2 + $0xc00] sm:$0x7f] %vm1931, %v1675
  %2317 = vst.msk [vmem:[%s2 + $0xc08] sm:$0x7f] %vm1931, %v1676
  %2318 = vst.msk [vmem:[%s2 + $0xc10] sm:$0x7f] %vm1931, %v1677
  %2319 = vst.msk [vmem:[%s2 + $0xc18] sm:$0x7f] %vm1931, %v1678
  %2320 = vst.msk [vmem:[%s2 + $0xc20] sm:$0x7f] %vm1931, %v1679
  %2321 = vst.msk [vmem:[%s2 + $0xc28] sm:$0x7f] %vm1931, %v1680
  %2322 = vst.msk [vmem:[%s2 + $0xc30] sm:$0x7f] %vm1931, %v1681
  %2323 = vst.msk [vmem:[%s2 + $0xc38] sm:$0x7f] %vm1931, %v1682
  %2324 = vst.msk [vmem:[%s2 + $0xc40] sm:$0x7f] %vm1931, %v1683
  %2325 = vst.msk [vmem:[%s2 + $0xc48] sm:$0x7f] %vm1931, %v1684
  %2326 = vst.msk [vmem:[%s2 + $0xc50] sm:$0x7f] %vm1931, %v1685
  %2327 = vst.msk [vmem:[%s2 + $0xc58] sm:$0x7f] %vm1931, %v1686
  %2328 = vst.msk [vmem:[%s2 + $0xc60] sm:$0x7f] %vm1931, %v1687
  %2329 = vst.msk [vmem:[%s2 + $0xc68] sm:$0x7f] %vm1931, %v1688
  %2330 = vst.msk [vmem:[%s2 + $0xc70] sm:$0x7f] %vm1931, %v1689
  %2331 = vst.msk [vmem:[%s2 + $0xc78] sm:$0x7f] %vm1931, %v1690
  %2332 = vst.msk [vmem:[%s2 + $0xc80] sm:$0x7f] %vm1931, %v1691
  %2333 = vst.msk [vmem:[%s2 + $0xc88] sm:$0x7f] %vm1931, %v1692
  %2334 = vst.msk [vmem:[%s2 + $0xc90] sm:$0x7f] %vm1931, %v1693
  %2335 = vst.msk [vmem:[%s2 + $0xc98] sm:$0x7f] %vm1931, %v1694
  %2336 = vst.msk [vmem:[%s2 + $0xca0] sm:$0x7f] %vm1931, %v1695
  %2337 = vst.msk [vmem:[%s2 + $0xca8] sm:$0x7f] %vm1931, %v1696
  %2338 = vst.msk [vmem:[%s2 + $0xcb0] sm:$0x7f] %vm1931, %v1697
  %2339 = vst.msk [vmem:[%s2 + $0xcb8] sm:$0x7f] %vm1931, %v1698
  %2340 = vst.msk [vmem:[%s2 + $0xcc0] sm:$0x7f] %vm1931, %v1699
  %2341 = vst.msk [vmem:[%s2 + $0xcc8] sm:$0x7f] %vm1931, %v1700
  %2342 = vst.msk [vmem:[%s2 + $0xcd0] sm:$0x7f] %vm1931, %v1701
  %2343 = vst.msk [vmem:[%s2 + $0xcd8] sm:$0x7f] %vm1931, %v1702
  %2344 = vst.msk [vmem:[%s2 + $0xce0] sm:$0x7f] %vm1931, %v1703
  %2345 = vst.msk [vmem:[%s2 + $0xce8] sm:$0x7f] %vm1931, %v1704
  %2346 = vst.msk [vmem:[%s2 + $0xcf0] sm:$0x7f] %vm1931, %v1705
  %2347 = vst.msk [vmem:[%s2 + $0xcf8] sm:$0x7f] %vm1931, %v1706
  %2348 = vst.msk [vmem:[%s2 + $0xd00] sm:$0x7f] %vm1931, %v1707
  %2349 = vst.msk [vmem:[%s2 + $0xd08] sm:$0x7f] %vm1931, %v1708
  %2350 = vst.msk [vmem:[%s2 + $0xd10] sm:$0x7f] %vm1931, %v1709
  %2351 = vst.msk [vmem:[%s2 + $0xd18] sm:$0x7f] %vm1931, %v1710
  %2352 = vst.msk [vmem:[%s2 + $0xd20] sm:$0x7f] %vm1931, %v1711
  %2353 = vst.msk [vmem:[%s2 + $0xd28] sm:$0x7f] %vm1931, %v1712
  %2354 = vst.msk [vmem:[%s2 + $0xd30] sm:$0x7f] %vm1931, %v1713
  %2355 = vst.msk [vmem:[%s2 + $0xd38] sm:$0x7f] %vm1931, %v1714
  %2356 = vst.msk [vmem:[%s2 + $0xd40] sm:$0x7f] %vm1931, %v1715
  %2357 = vst.msk [vmem:[%s2 + $0xd48] sm:$0x7f] %vm1931, %v1716
  %2358 = vst.msk [vmem:[%s2 + $0xd50] sm:$0x7f] %vm1931, %v1717
  %2359 = vst.msk [vmem:[%s2 + $0xd58] sm:$0x7f] %vm1931, %v1718
  %2360 = vst.msk [vmem:[%s2 + $0xd60] sm:$0x7f] %vm1931, %v1719
  %2361 = vst.msk [vmem:[%s2 + $0xd68] sm:$0x7f] %vm1931, %v1720
  %2362 = vst.msk [vmem:[%s2 + $0xd70] sm:$0x7f] %vm1931, %v1721
  %2363 = vst.msk [vmem:[%s2 + $0xd78] sm:$0x7f] %vm1931, %v1722
  %2364 = vst.msk [vmem:[%s2 + $0xd80] sm:$0x7f] %vm1931, %v1723
  %2365 = vst.msk [vmem:[%s2 + $0xd88] sm:$0x7f] %vm1931, %v1724
  %2366 = vst.msk [vmem:[%s2 + $0xd90] sm:$0x7f] %vm1931, %v1725
  %2367 = vst.msk [vmem:[%s2 + $0xd98] sm:$0x7f] %vm1931, %v1726
  %2368 = vst.msk [vmem:[%s2 + $0xda0] sm:$0x7f] %vm1931, %v1727
  %2369 = vst.msk [vmem:[%s2 + $0xda8] sm:$0x7f] %vm1931, %v1728
  %2370 = vst.msk [vmem:[%s2 + $0xdb0] sm:$0x7f] %vm1931, %v1729
  %2371 = vst.msk [vmem:[%s2 + $0xdb8] sm:$0x7f] %vm1931, %v1730
  %2372 = vst.msk [vmem:[%s2 + $0xdc0] sm:$0x7f] %vm1931, %v1731
  %2373 = vst.msk [vmem:[%s2 + $0xdc8] sm:$0x7f] %vm1931, %v1732
  %2374 = vst.msk [vmem:[%s2 + $0xdd0] sm:$0x7f] %vm1931, %v1733
  %2375 = vst.msk [vmem:[%s2 + $0xdd8] sm:$0x7f] %vm1931, %v1734
  %2376 = vst.msk [vmem:[%s2 + $0xde0] sm:$0x7f] %vm1931, %v1735
  %2377 = vst.msk [vmem:[%s2 + $0xde8] sm:$0x7f] %vm1931, %v1736
  %2378 = vst.msk [vmem:[%s2 + $0xdf0] sm:$0x7f] %vm1931, %v1737
  %2379 = vst.msk [vmem:[%s2 + $0xdf8] sm:$0x7f] %vm1931, %v1738
  %2380 = vst.msk [vmem:[%s2 + $0xe00] sm:$0x7f] %vm1931, %v1739
  %2381 = vst.msk [vmem:[%s2 + $0xe08] sm:$0x7f] %vm1931, %v1740
  %2382 = vst.msk [vmem:[%s2 + $0xe10] sm:$0x7f] %vm1931, %v1741
  %2383 = vst.msk [vmem:[%s2 + $0xe18] sm:$0x7f] %vm1931, %v1742
  %2384 = vst.msk [vmem:[%s2 + $0xe20] sm:$0x7f] %vm1931, %v1743
  %2385 = vst.msk [vmem:[%s2 + $0xe28] sm:$0x7f] %vm1931, %v1744
  %2386 = vst.msk [vmem:[%s2 + $0xe30] sm:$0x7f] %vm1931, %v1745
  %2387 = vst.msk [vmem:[%s2 + $0xe38] sm:$0x7f] %vm1931, %v1746
  %2388 = vst.msk [vmem:[%s2 + $0xe40] sm:$0x7f] %vm1931, %v1747
  %2389 = vst.msk [vmem:[%s2 + $0xe48] sm:$0x7f] %vm1931, %v1748
  %2390 = vst.msk [vmem:[%s2 + $0xe50] sm:$0x7f] %vm1931, %v1749
  %2391 = vst.msk [vmem:[%s2 + $0xe58] sm:$0x7f] %vm1931, %v1750
  %2392 = vst.msk [vmem:[%s2 + $0xe60] sm:$0x7f] %vm1931, %v1751
  %2393 = vst.msk [vmem:[%s2 + $0xe68] sm:$0x7f] %vm1931, %v1752
  %2394 = vst.msk [vmem:[%s2 + $0xe70] sm:$0x7f] %vm1931, %v1753
  %2395 = vst.msk [vmem:[%s2 + $0xe78] sm:$0x7f] %vm1931, %v1754
  %2396 = vst.msk [vmem:[%s2 + $0xe80] sm:$0x7f] %vm1931, %v1755
  %2397 = vst.msk [vmem:[%s2 + $0xe88] sm:$0x7f] %vm1931, %v1756
  %2398 = vst.msk [vmem:[%s2 + $0xe90] sm:$0x7f] %vm1931, %v1757
  %2399 = vst.msk [vmem:[%s2 + $0xe98] sm:$0x7f] %vm1931, %v1758
  %2400 = vst.msk [vmem:[%s2 + $0xea0] sm:$0x7f] %vm1931, %v1759
  %2401 = vst.msk [vmem:[%s2 + $0xea8] sm:$0x7f] %vm1931, %v1760
  %2402 = vst.msk [vmem:[%s2 + $0xeb0] sm:$0x7f] %vm1931, %v1761
  %2403 = vst.msk [vmem:[%s2 + $0xeb8] sm:$0x7f] %vm1931, %v1762
  %2404 = vst.msk [vmem:[%s2 + $0xec0] sm:$0x7f] %vm1931, %v1763
  %2405 = vst.msk [vmem:[%s2 + $0xec8] sm:$0x7f] %vm1931, %v1764
  %2406 = vst.msk [vmem:[%s2 + $0xed0] sm:$0x7f] %vm1931, %v1765
  %2407 = vst.msk [vmem:[%s2 + $0xed8] sm:$0x7f] %vm1931, %v1766
  %2408 = vst.msk [vmem:[%s2 + $0xee0] sm:$0x7f] %vm1931, %v1767
  %2409 = vst.msk [vmem:[%s2 + $0xee8] sm:$0x7f] %vm1931, %v1768
  %2410 = vst.msk [vmem:[%s2 + $0xef0] sm:$0x7f] %vm1931, %v1769
  %2411 = vst.msk [vmem:[%s2 + $0xef8] sm:$0x7f] %vm1931, %v1770
  %2412 = vst.msk [vmem:[%s2 + $0xf00] sm:$0x7f] %vm1931, %v1771
  %2413 = vst.msk [vmem:[%s2 + $0xf08] sm:$0x7f] %vm1931, %v1772
  %2414 = vst.msk [vmem:[%s2 + $0xf10] sm:$0x7f] %vm1931, %v1773
  %2415 = vst.msk [vmem:[%s2 + $0xf18] sm:$0x7f] %vm1931, %v1774
  %2416 = vst.msk [vmem:[%s2 + $0xf20] sm:$0x7f] %vm1931, %v1775
  %2417 = vst.msk [vmem:[%s2 + $0xf28] sm:$0x7f] %vm1931, %v1776
  %2418 = vst.msk [vmem:[%s2 + $0xf30] sm:$0x7f] %vm1931, %v1777
  %2419 = vst.msk [vmem:[%s2 + $0xf38] sm:$0x7f] %vm1931, %v1778
  %2420 = vst.msk [vmem:[%s2 + $0xf40] sm:$0x7f] %vm1931, %v1779
  %2421 = vst.msk [vmem:[%s2 + $0xf48] sm:$0x7f] %vm1931, %v1780
  %2422 = vst.msk [vmem:[%s2 + $0xf50] sm:$0x7f] %vm1931, %v1781
  %2423 = vst.msk [vmem:[%s2 + $0xf58] sm:$0x7f] %vm1931, %v1782
  %2424 = vst.msk [vmem:[%s2 + $0xf60] sm:$0x7f] %vm1931, %v1783
  %2425 = vst.msk [vmem:[%s2 + $0xf68] sm:$0x7f] %vm1931, %v1784
  %2426 = vst.msk [vmem:[%s2 + $0xf70] sm:$0x7f] %vm1931, %v1785
  %2427 = vst.msk [vmem:[%s2 + $0xf78] sm:$0x7f] %vm1931, %v1786
  %2428 = vst.msk [vmem:[%s2 + $0xf80] sm:$0x7f] %vm1931, %v1787
  %2429 = vst.msk [vmem:[%s2 + $0xf88] sm:$0x7f] %vm1931, %v1788
  %2430 = vst.msk [vmem:[%s2 + $0xf90] sm:$0x7f] %vm1931, %v1789
  %2431 = vst.msk [vmem:[%s2 + $0xf98] sm:$0x7f] %vm1931, %v1790
  %2432 = vst.msk [vmem:[%s2 + $0xfa0] sm:$0x7f] %vm1931, %v1791
  %2433 = vst.msk [vmem:[%s2 + $0xfa8] sm:$0x7f] %vm1931, %v1792
  %2434 = vst.msk [vmem:[%s2 + $0xfb0] sm:$0x7f] %vm1931, %v1793
  %2435 = vst.msk [vmem:[%s2 + $0xfb8] sm:$0x7f] %vm1931, %v1794
  %2436 = vst.msk [vmem:[%s2 + $0xfc0] sm:$0x7f] %vm1931, %v1795
  %2437 = vst.msk [vmem:[%s2 + $0xfc8] sm:$0x7f] %vm1931, %v1796
  %2438 = vst.msk [vmem:[%s2 + $0xfd0] sm:$0x7f] %vm1931, %v1797
  %2439 = vst.msk [vmem:[%s2 + $0xfd8] sm:$0x7f] %vm1931, %v1798
  %2440 = vst.msk [vmem:[%s2 + $0xfe0] sm:$0x7f] %vm1931, %v1799
  %2441 = vst.msk [vmem:[%s2 + $0xfe8] sm:$0x7f] %vm1931, %v1800
  %2442 = vst.msk [vmem:[%s2 + $0xff0] sm:$0x7f] %vm1931, %v1801
  %2443 = vst.msk [vmem:[%s2 + $0xff8] sm:$0x7f] %vm1931, %v1802
  %2444 = vst.msk [vmem:[%s2 + $0x1000] sm:$0x7f] %vm1931, %v1803
  %2445 = vst.msk [vmem:[%s2 + $0x1008] sm:$0x7f] %vm1931, %v1804
  %2446 = vst.msk [vmem:[%s2 + $0x1010] sm:$0x7f] %vm1931, %v1805
  %2447 = vst.msk [vmem:[%s2 + $0x1018] sm:$0x7f] %vm1931, %v1806
  %2448 = vst.msk [vmem:[%s2 + $0x1020] sm:$0x7f] %vm1931, %v1807
  %2449 = vst.msk [vmem:[%s2 + $0x1028] sm:$0x7f] %vm1931, %v1808
  %2450 = vst.msk [vmem:[%s2 + $0x1030] sm:$0x7f] %vm1931, %v1809
  %2451 = vst.msk [vmem:[%s2 + $0x1038] sm:$0x7f] %vm1931, %v1810
  %2452 = vst.msk [vmem:[%s2 + $0x1040] sm:$0x7f] %vm1931, %v1811
  %2453 = vst.msk [vmem:[%s2 + $0x1048] sm:$0x7f] %vm1931, %v1812
  %2454 = vst.msk [vmem:[%s2 + $0x1050] sm:$0x7f] %vm1931, %v1813
  %2455 = vst.msk [vmem:[%s2 + $0x1058] sm:$0x7f] %vm1931, %v1814
  %2456 = vst.msk [vmem:[%s2 + $0x1060] sm:$0x7f] %vm1931, %v1815
  %2457 = vst.msk [vmem:[%s2 + $0x1068] sm:$0x7f] %vm1931, %v1816
  %2458 = vst.msk [vmem:[%s2 + $0x1070] sm:$0x7f] %vm1931, %v1817
  %2459 = vst.msk [vmem:[%s2 + $0x1078] sm:$0x7f] %vm1931, %v1818
  %2460 = vst.msk [vmem:[%s2 + $0x1080] sm:$0x7f] %vm1931, %v1819
  %2461 = vst.msk [vmem:[%s2 + $0x1088] sm:$0x7f] %vm1931, %v1820
  %2462 = vst.msk [vmem:[%s2 + $0x1090] sm:$0x7f] %vm1931, %v1821
  %2463 = vst.msk [vmem:[%s2 + $0x1098] sm:$0x7f] %vm1931, %v1822
  %2464 = vst.msk [vmem:[%s2 + $0x10a0] sm:$0x7f] %vm1931, %v1823
  %2465 = vst.msk [vmem:[%s2 + $0x10a8] sm:$0x7f] %vm1931, %v1824
  %2466 = vst.msk [vmem:[%s2 + $0x10b0] sm:$0x7f] %vm1931, %v1825
  %2467 = vst.msk [vmem:[%s2 + $0x10b8] sm:$0x7f] %vm1931, %v1826
  %2468 = vst.msk [vmem:[%s2 + $0x10c0] sm:$0x7f] %vm1931, %v1827
  %2469 = vst.msk [vmem:[%s2 + $0x10c8] sm:$0x7f] %vm1931, %v1828
  %2470 = vst.msk [vmem:[%s2 + $0x10d0] sm:$0x7f] %vm1931, %v1829
  %2471 = vst.msk [vmem:[%s2 + $0x10d8] sm:$0x7f] %vm1931, %v1830
  %2472 = vst.msk [vmem:[%s2 + $0x10e0] sm:$0x7f] %vm1931, %v1831
  %2473 = vst.msk [vmem:[%s2 + $0x10e8] sm:$0x7f] %vm1931, %v1832
  %2474 = vst.msk [vmem:[%s2 + $0x10f0] sm:$0x7f] %vm1931, %v1833
  %2475 = vst.msk [vmem:[%s2 + $0x10f8] sm:$0x7f] %vm1931, %v1834
  %2476 = vst.msk [vmem:[%s2 + $0x1100] sm:$0x7f] %vm1931, %v1835
  %2477 = vst.msk [vmem:[%s2 + $0x1108] sm:$0x7f] %vm1931, %v1836
  %2478 = vst.msk [vmem:[%s2 + $0x1110] sm:$0x7f] %vm1931, %v1837
  %2479 = vst.msk [vmem:[%s2 + $0x1118] sm:$0x7f] %vm1931, %v1838
  %2480 = vst.msk [vmem:[%s2 + $0x1120] sm:$0x7f] %vm1931, %v1839
  %2481 = vst.msk [vmem:[%s2 + $0x1128] sm:$0x7f] %vm1931, %v1840
  %2482 = vst.msk [vmem:[%s2 + $0x1130] sm:$0x7f] %vm1931, %v1841
  %2483 = vst.msk [vmem:[%s2 + $0x1138] sm:$0x7f] %vm1931, %v1842
  %2484 = vst.msk [vmem:[%s2 + $0x1140] sm:$0x7f] %vm1931, %v1843
  %2485 = vst.msk [vmem:[%s2 + $0x1148] sm:$0x7f] %vm1931, %v1844
  %2486 = vst.msk [vmem:[%s2 + $0x1150] sm:$0x7f] %vm1931, %v1845
  %2487 = vst.msk [vmem:[%s2 + $0x1158] sm:$0x7f] %vm1931, %v1846
  %2488 = vst.msk [vmem:[%s2 + $0x1160] sm:$0x7f] %vm1931, %v1847
  %2489 = vst.msk [vmem:[%s2 + $0x1168] sm:$0x7f] %vm1931, %v1848
  %2490 = vst.msk [vmem:[%s2 + $0x1170] sm:$0x7f] %vm1931, %v1849
  %2491 = vst.msk [vmem:[%s2 + $0x1178] sm:$0x7f] %vm1931, %v1850
  %2492 = vst.msk [vmem:[%s2 + $0x1180] sm:$0x7f] %vm1931, %v1851
  %2493 = vst.msk [vmem:[%s2 + $0x1188] sm:$0x7f] %vm1931, %v1852
  %2494 = vst.msk [vmem:[%s2 + $0x1190] sm:$0x7f] %vm1931, %v1853
  %2495 = vst.msk [vmem:[%s2 + $0x1198] sm:$0x7f] %vm1931, %v1854
  %2496 = vst.msk [vmem:[%s2 + $0x11a0] sm:$0x7f] %vm1931, %v1855
  %2497 = vst.msk [vmem:[%s2 + $0x11a8] sm:$0x7f] %vm1931, %v1856
  %2498 = vst.msk [vmem:[%s2 + $0x11b0] sm:$0x7f] %vm1931, %v1857
  %2499 = vst.msk [vmem:[%s2 + $0x11b8] sm:$0x7f] %vm1931, %v1858
  %2500 = vst.msk [vmem:[%s2 + $0x11c0] sm:$0x7f] %vm1931, %v1859
  %2501 = vst.msk [vmem:[%s2 + $0x11c8] sm:$0x7f] %vm1931, %v1860
  %2502 = vst.msk [vmem:[%s2 + $0x11d0] sm:$0x7f] %vm1931, %v1861
  %2503 = vst.msk [vmem:[%s2 + $0x11d8] sm:$0x7f] %vm1931, %v1862
  %2504 = vst.msk [vmem:[%s2 + $0x11e0] sm:$0x7f] %vm1931, %v1863
  %2505 = vst.msk [vmem:[%s2 + $0x11e8] sm:$0x7f] %vm1931, %v1864
  %2506 = vst.msk [vmem:[%s2 + $0x11f0] sm:$0x7f] %vm1931, %v1865
  %2507 = vst.msk [vmem:[%s2 + $0x11f8] sm:$0x7f] %vm1931, %v1866
  %2508 = vst.msk [vmem:[%s2 + $0x1200] sm:$0x7f] %vm1931, %v1867
  %2509 = vst.msk [vmem:[%s2 + $0x1208] sm:$0x7f] %vm1931, %v1868
  %2510 = vst.msk [vmem:[%s2 + $0x1210] sm:$0x7f] %vm1931, %v1869
  %2511 = vst.msk [vmem:[%s2 + $0x1218] sm:$0x7f] %vm1931, %v1870
  %2512 = vst.msk [vmem:[%s2 + $0x1220] sm:$0x7f] %vm1931, %v1871
  %2513 = vst.msk [vmem:[%s2 + $0x1228] sm:$0x7f] %vm1931, %v1872
  %2514 = vst.msk [vmem:[%s2 + $0x1230] sm:$0x7f] %vm1931, %v1873
  %2515 = vst.msk [vmem:[%s2 + $0x1238] sm:$0x7f] %vm1931, %v1874
  %2516 = vst.msk [vmem:[%s2 + $0x1240] sm:$0x7f] %vm1931, %v1875
  %2517 = vst.msk [vmem:[%s2 + $0x1248] sm:$0x7f] %vm1931, %v1876
  %2518 = vst.msk [vmem:[%s2 + $0x1250] sm:$0x7f] %vm1931, %v1877
  %2519 = vst.msk [vmem:[%s2 + $0x1258] sm:$0x7f] %vm1931, %v1878
  %2520 = vst.msk [vmem:[%s2 + $0x1260] sm:$0x7f] %vm1931, %v1879
  %2521 = vst.msk [vmem:[%s2 + $0x1268] sm:$0x7f] %vm1931, %v1880
  %2522 = vst.msk [vmem:[%s2 + $0x1270] sm:$0x7f] %vm1931, %v1881
  %2523 = vst.msk [vmem:[%s2 + $0x1278] sm:$0x7f] %vm1931, %v1882
  %2524 = vst.msk [vmem:[%s2 + $0x1280] sm:$0x7f] %vm1931, %v1883
  %2525 = vst.msk [vmem:[%s2 + $0x1288] sm:$0x7f] %vm1931, %v1884
  %2526 = vst.msk [vmem:[%s2 + $0x1290] sm:$0x7f] %vm1931, %v1885
  %2527 = vst.msk [vmem:[%s2 + $0x1298] sm:$0x7f] %vm1931, %v1886
  %2528 = vst.msk [vmem:[%s2 + $0x12a0] sm:$0x7f] %vm1931, %v1887
  %2529 = vst.msk [vmem:[%s2 + $0x12a8] sm:$0x7f] %vm1931, %v1888
  %2530 = vst.msk [vmem:[%s2 + $0x12b0] sm:$0x7f] %vm1931, %v1889
  %2531 = vst.msk [vmem:[%s2 + $0x12b8] sm:$0x7f] %vm1931, %v1890
  %2532 = vst.msk [vmem:[%s2 + $0x12c0] sm:$0x7f] %vm1931, %v1891
  %2533 = vst.msk [vmem:[%s2 + $0x12c8] sm:$0x7f] %vm1931, %v1892
  %2534 = vst.msk [vmem:[%s2 + $0x12d0] sm:$0x7f] %vm1931, %v1893
  %2535 = vst.msk [vmem:[%s2 + $0x12d8] sm:$0x7f] %vm1931, %v1894
  %2536 = vst.msk [vmem:[%s2 + $0x12e0] sm:$0x7f] %vm1931, %v1895
  %2537 = vst.msk [vmem:[%s2 + $0x12e8] sm:$0x7f] %vm1931, %v1896
  %2538 = vst.msk [vmem:[%s2 + $0x12f0] sm:$0x7f] %vm1931, %v1897
  %2539 = vst.msk [vmem:[%s2 + $0x12f8] sm:$0x7f] %vm1931, %v1898
  %2540 = vst.msk [vmem:[%s2 + $0x1300] sm:$0x7f] %vm1931, %v1899
  %2541 = vst.msk [vmem:[%s2 + $0x1308] sm:$0x7f] %vm1931, %v1900
  %2542 = vst.msk [vmem:[%s2 + $0x1310] sm:$0x7f] %vm1931, %v1901
  %2543 = vst.msk [vmem:[%s2 + $0x1318] sm:$0x7f] %vm1931, %v1902
  %2544 = vst.msk [vmem:[%s2 + $0x1320] sm:$0x7f] %vm1931, %v1903
  %2545 = vst.msk [vmem:[%s2 + $0x1328] sm:$0x7f] %vm1931, %v1904
  %2546 = vst.msk [vmem:[%s2 + $0x1330] sm:$0x7f] %vm1931, %v1905
  %2547 = vst.msk [vmem:[%s2 + $0x1338] sm:$0x7f] %vm1931, %v1906
  %2548 = vst.msk [vmem:[%s2 + $0x1340] sm:$0x7f] %vm1931, %v1907
  %2549 = vst.msk [vmem:[%s2 + $0x1348] sm:$0x7f] %vm1931, %v1908
  %2550 = vst.msk [vmem:[%s2 + $0x1350] sm:$0x7f] %vm1931, %v1909
  %2551 = vst.msk [vmem:[%s2 + $0x1358] sm:$0x7f] %vm1931, %v1910
  %2552 = vst.msk [vmem:[%s2 + $0x1360] sm:$0x7f] %vm1931, %v1911
  %2553 = vst.msk [vmem:[%s2 + $0x1368] sm:$0x7f] %vm1931, %v1912
  %2554 = vst.msk [vmem:[%s2 + $0x1370] sm:$0x7f] %vm1931, %v1913
  %2555 = vst.msk [vmem:[%s2 + $0x1378] sm:$0x7f] %vm1931, %v1914
  %2556 = vst.msk [vmem:[%s2 + $0x1380] sm:$0x7f] %vm1931, %v1915
  %2557 = vst.msk [vmem:[%s2 + $0x1388] sm:$0x7f] %vm1931, %v1916
  %2558 = vst.msk [vmem:[%s2 + $0x1390] sm:$0x7f] %vm1931, %v1917
  %2559 = vst.msk [vmem:[%s2 + $0x1398] sm:$0x7f] %vm1931, %v1918
  %2560 = vst.msk [vmem:[%s2 + $0x13a0] sm:$0x7f] %vm1931, %v1919
  %2561 = vst.msk [vmem:[%s2 + $0x13a8] sm:$0x7f] %vm1931, %v1920
  %2562 = vst.msk [vmem:[%s2 + $0x13b0] sm:$0x7f] %vm1931, %v1921
  %2563 = vst.msk [vmem:[%s2 + $0x13b8] sm:$0x7f] %vm1931, %v1922
  %2564 = vst.msk [vmem:[%s2 + $0x13c0] sm:$0x7f] %vm1931, %v1923
  %2565 = vst.msk [vmem:[%s2 + $0x13c8] sm:$0x7f] %vm1931, %v1924
  %2566 = vst.msk [vmem:[%s2 + $0x13d0] sm:$0x7f] %vm1931, %v1925
  %2567 = vst.msk [vmem:[%s2 + $0x13d8] sm:$0x7f] %vm1931, %v1926
  %2568 = vst.msk [vmem:[%s2 + $0x13e0] sm:$0x7f] %vm1931, %v1927
  %2569 = vst.msk [vmem:[%s2 + $0x13e8] sm:$0x7f] %vm1931, %v1928
  %2570 = vst.msk [vmem:[%s2 + $0x13f0] sm:$0x7f] %vm1931, %v1929
  %2571 = vst.msk [vmem:[%s2 + $0x13f8] sm:$0x7f] %vm1931, %v1930
  // Predicated region
  $region10: #{pallas_add.1} parent=0 // pred_check
    _
  $region11: #{pallas_add.1} parent=0 // pred_check_branch
    %2573 = sbr.rel (0) target = $region13
  $region12: #{pallas_add.1} parent=0 // pred_region
    _
  $region13: #{pallas_add.1} parent=0 // pred_fallthru
    _
  // Predicated region
  $region14: #{pallas_add.1} parent=0 // pred_check
    _
  $region15: #{pallas_add.1} parent=0 // pred_check_branch
    %2575 = sbr.rel (0) target = $region17
  $region16: #{pallas_add.1} parent=0 // pred_region
    _
  $region17: #{pallas_add.1} parent=0 // pred_fallthru
    _

</llo_original>
